<compile_context>
chip_gen: v5e
topology: v5e:2x2
jax: 0.10.0
libtpu: 0.0.40
codegen_flags: <defaults>
</compile_context>

<pallas_src>
import jax
import jax.numpy as jnp
from jax.experimental import pallas as pl
from jax.experimental.pallas import tpu as pltpu


# ---------------------------------------------------------------------------
# Pallas kernels: fused (W @ patches [+ bias | + instance-norm + leaky-relu])
# Layout per batch element:  W (Cout, K) bf16, patches (K, P) bf16,
# output (Cout, P) f32 with P = Ho*Wo lane-dense.
# ---------------------------------------------------------------------------
def _make_kernel(apply_norm: bool, eps: float = 1e-5, slope: float = 0.01):
    if apply_norm:
        def kernel(w_ref, p_ref, o_ref):
            # bf16 x bf16 -> f32 accumulation on the MXU.
            y = jnp.dot(w_ref[...], p_ref[0],
                        preferred_element_type=jnp.float32)          # (Cout, P)
            # InstanceNorm2d(affine=False): per-channel stats over the spatial
            # (lane) dim.  Bias is omitted: it cancels against the mean.
            mean = jnp.mean(y, axis=1, keepdims=True)                 # (Cout, 1)
            cen = y - mean                                            # reused
            var = jnp.mean(cen * cen, axis=1, keepdims=True)
            y = cen * jax.lax.rsqrt(var + eps)                        # EUP rsqrt
            # LeakyReLU (PyTorch default negative_slope=0.01).
            y = jnp.where(y >= 0, y, slope * y)
            o_ref[0] = y.astype(o_ref.dtype)
        return kernel

    def kernel(w_ref, p_ref, b_ref, o_ref):
        y = jnp.dot(w_ref[...], p_ref[0],
                    preferred_element_type=jnp.float32)               # (Cout, P)
        y = y + b_ref[...]                                            # (Cout, 1)
        o_ref[0] = y.astype(o_ref.dtype)
    return kernel


# ---------------------------------------------------------------------------
# Glue: im2col patch extraction in NCHW (pad=1, kernel=4, stride=2).
# K ordering is (Cin, kh, kw) so it matches w.reshape(Cout, Cin*kh*kw).
# ---------------------------------------------------------------------------
def _extract_patches_nchw(x, k=4, s=2, p=1):
    n, c, h, w = x.shape
    xp = jnp.pad(x, ((0, 0), (0, 0), (p, p), (p, p)))
    ho = (h + 2 * p - k) // s + 1
    wo = (w + 2 * p - k) // s + 1
    taps = []
    for kh in range(k):
        for kw in range(k):
            taps.append(xp[:, :, kh:kh + s * ho:s, kw:kw + s * wo:s])
    pt = jnp.stack(taps, axis=2)                     # (N, C, k*k, Ho, Wo)
    return pt.reshape(n, c * k * k, ho * wo), ho, wo


# ---------------------------------------------------------------------------
# One conv layer (+ optional instance-norm + leaky-relu) via pallas_call.
# ---------------------------------------------------------------------------
def conv_block(x_nchw, w_oihw, b, apply_norm):
    n = x_nchw.shape[0]
    cout = w_oihw.shape[0]
    # Cast activations to bf16 before building patches: halves the im2col
    # HBM traffic feeding the kernel.
    patches, ho, wo = _extract_patches_nchw(x_nchw.astype(jnp.bfloat16))
    _, k_, p_ = patches.shape
    w_mat = w_oihw.reshape(cout, k_).astype(jnp.bfloat16)     # (Cout, K)

    in_specs = [
        pl.BlockSpec((cout, k_), lambda i: (0, 0)),           # weights: const map
        pl.BlockSpec((1, k_, p_), lambda i: (i, 0, 0)),       # patches per batch
    ]
    args = [w_mat, patches]
    if not apply_norm:
        # Bias only for the final conv2; it is a no-op before InstanceNorm.
        in_specs.append(pl.BlockSpec((cout, 1), lambda i: (0, 0)))
        args.append(b.reshape(cout, 1).astype(jnp.float32))

    cost = pl.CostEstimate(
        flops=2 * n * cout * k_ * p_,
        transcendentals=(n * cout if apply_norm else 0),
        bytes_accessed=(patches.size * 2 + w_mat.size * 2
                        + (0 if apply_norm else cout * 4)
                        + n * cout * p_ * 4),
    )

    out = pl.pallas_call(
        _make_kernel(apply_norm),
        out_shape=jax.ShapeDtypeStruct((n, cout, p_), jnp.float32),
        grid=(n,),
        in_specs=in_specs,
        out_specs=pl.BlockSpec((1, cout, p_), lambda i: (i, 0, 0)),
        # "parallel" over batch lets v7x megacore shard the two batch elements
        # across its TensorCores; it is a no-op on v5e/v6e.
        compiler_params=pltpu.CompilerParams(
            dimension_semantics=("parallel",)),
        cost_estimate=cost,
    )(*args)
    return out.reshape(n, cout, ho, wo)


# ---------------------------------------------------------------------------
# Full PatchGanDiscriminator forward (NCHW in / NCHW out)
# ---------------------------------------------------------------------------
def make_params(key, n_input_channels=3, n_filters=8):
    """Deterministic synthetic conv weights in PyTorch (Cout, Cin, 4, 4) layout."""
    layer_dims = [(n_input_channels, n_filters)]
    c = n_filters
    for _ in range(3):
        layer_dims.append((c, 2 * c))
        c *= 2
    layer_dims.append((c, c))          # extra conv in `main`
    layer_dims.append((c, 1))          # conv2
    params = []
    for (cin, cout) in layer_dims:
        key, kw, kb = jax.random.split(key, 3)
        std = 1.0 / jnp.sqrt(cin * 16.0)
        w = jax.random.normal(kw, (cout, cin, 4, 4), jnp.float32) * std
        bias = jax.random.normal(kb, (cout,), jnp.float32) * std
        params.append((w, bias))
    return params


@jax.jit
def discriminator_forward(x_nchw, params):
    x = x_nchw
    for i, (w, b) in enumerate(params):
        last = i == len(params) - 1
        x = conv_block(x, w, b, apply_norm=not last)
    return x                                           # already NCHW


# ---------------------------------------------------------------------------
# Reference (lax.conv) with the SAME bf16-input / f32-accumulate contract as
# the kernel, for a tight correctness check.  Note the reference keeps the
# bias on every layer (as PyTorch does), which validates that dropping it
# before InstanceNorm in the kernel is an exact no-op.
# ---------------------------------------------------------------------------
@jax.jit
def reference_forward(x_nchw, params):
    def conv(x, w, b):
        y = jax.lax.conv_general_dilated(
            x.astype(jnp.bfloat16), w.astype(jnp.bfloat16),
            window_strides=(2, 2), padding=((1, 1), (1, 1)),
            dimension_numbers=("NCHW", "OIHW", "NCHW"),
            preferred_element_type=jnp.float32)
        return y + b[None, :, None, None]

    def inorm(x):
        mean = jnp.mean(x, axis=(2, 3), keepdims=True)
        var = jnp.mean(jnp.square(x - mean), axis=(2, 3), keepdims=True)
        return (x - mean) * jax.lax.rsqrt(var + 1e-5)

    def lrelu(x):
        return jnp.where(x >= 0, x, 0.01 * x)

    for i, (w, b) in enumerate(params):
        last = i == len(params) - 1
        x_nchw = conv(x_nchw, w, b)
        if not last:
            x_nchw = lrelu(inorm(x_nchw))
    return x_nchw


if __name__ == "__main__":
    key = jax.random.PRNGKey(0)
    kx, kp = jax.random.split(key)

    # Small synthetic config: n_input_channels=3, n_filters=8, 64x64 input
    # (6 stride-2 convs: 64 -> 32 -> 16 -> 8 -> 4 -> 2 -> 1).
    x = jax.random.normal(kx, (2, 3, 64, 64), jnp.float32)
    params = make_params(kp, n_input_channels=3, n_filters=8)

    out = jax.block_until_ready(discriminator_forward(x, params))
    assert out.shape == (2, 1, 1, 1), out.shape

    ref = jax.block_until_ready(reference_forward(x, params))
    max_err = float(jnp.max(jnp.abs(out - ref)))
    assert jnp.allclose(out, ref, atol=5e-3, rtol=5e-3), max_err

    print("KERNEL_OK")
</pallas_src>

<mosaic_0001>
module attributes {stable_mosaic.version = 11 : i64} {
  func.func @kernel(%arg0: i32, %arg1: memref<8x48xbf16, #tpu.memory_space<vmem>>, %arg2: memref<1x48x1024xbf16, #tpu.memory_space<vmem>>, %arg3: memref<1x8x1024xf32, #tpu.memory_space<vmem>>) attributes {dimension_semantics = [#tpu.dimension_semantics<parallel>], iteration_bounds = array<i64: 2>, scalar_prefetch = 0 : i64, scratch_operands = 0 : i64, tpu.core_type = #tpu.core_type<tc>, window_params = [{pipeline_mode = #tpu.pipeline_mode<synchronous>, transform_indices = @transform_0, window_bounds = array<i64: 8, 48>}, {transform_indices = @transform_1, window_bounds = array<i64: 1, 48, 1024>}, {transform_indices = @transform_2, window_bounds = array<i64: 1, 8, 1024>}]} {
    %c0 = arith.constant 0 : index
    %c0_0 = arith.constant 0 : index
    %0 = vector.load %arg1[%c0, %c0_0] : memref<8x48xbf16, #tpu.memory_space<vmem>>, vector<8x48xbf16>
    %c0_1 = arith.constant 0 : index
    %c0_2 = arith.constant 0 : index
    %c0_3 = arith.constant 0 : index
    %1 = vector.load %arg2[%c0_1, %c0_2, %c0_3] : memref<1x48x1024xbf16, #tpu.memory_space<vmem>>, vector<1x48x1024xbf16>
    %2 = vector.shape_cast %1 : vector<1x48x1024xbf16> to vector<48x1024xbf16>
    %cst = arith.constant dense<0.000000e+00> : vector<8x1024xf32>
    %3 = tpu.matmul %0, %2, %cst {dimension_numbers = #tpu.dot_dimension_numbers<[1], [0], [0], [1], [0, 0, 1, 1], [], []>} : vector<8x48xbf16>, vector<48x1024xbf16>, vector<8x1024xf32> -> vector<8x1024xf32>
    %cst_4 = arith.constant dense<0.000000e+00> : vector<8xf32>
    %4 = vector.multi_reduction <add>, %3, %cst_4 [1] : vector<8x1024xf32> to vector<8xf32>
    %5 = vector.shape_cast %4 : vector<8xf32> to vector<8x1xf32>
    %cst_5 = arith.constant 1.024000e+03 : f32
    %6 = vector.broadcast %cst_5 : f32 to vector<8x1xf32>
    %7 = arith.divf %5, %6 : vector<8x1xf32>
    %8 = vector.broadcast %7 : vector<8x1xf32> to vector<8x1024xf32>
    %9 = arith.subf %3, %8 : vector<8x1024xf32>
    %10 = arith.mulf %9, %9 : vector<8x1024xf32>
    %cst_6 = arith.constant dense<0.000000e+00> : vector<8xf32>
    %11 = vector.multi_reduction <add>, %10, %cst_6 [1] : vector<8x1024xf32> to vector<8xf32>
    %12 = vector.shape_cast %11 : vector<8xf32> to vector<8x1xf32>
    %cst_7 = arith.constant 1.024000e+03 : f32
    %13 = vector.broadcast %cst_7 : f32 to vector<8x1xf32>
    %14 = arith.divf %12, %13 : vector<8x1xf32>
    %cst_8 = arith.constant 9.99999974E-6 : f32
    %15 = vector.broadcast %cst_8 : f32 to vector<8x1xf32>
    %16 = arith.addf %14, %15 : vector<8x1xf32>
    %17 = math.rsqrt %16 : vector<8x1xf32>
    %18 = vector.broadcast %17 : vector<8x1xf32> to vector<8x1024xf32>
    %19 = arith.mulf %9, %18 : vector<8x1024xf32>
    %cst_9 = arith.constant 0.000000e+00 : f32
    %20 = vector.broadcast %cst_9 : f32 to vector<8x1024xf32>
    %21 = arith.cmpf oge, %19, %20 : vector<8x1024xf32>
    %cst_10 = arith.constant 0.00999999977 : f32
    %22 = vector.broadcast %cst_10 : f32 to vector<8x1024xf32>
    %23 = arith.mulf %22, %19 : vector<8x1024xf32>
    %24 = arith.select %21, %19, %23 : vector<8x1024xi1>, vector<8x1024xf32>
    %c0_11 = arith.constant 0 : index
    %c0_12 = arith.constant 0 : index
    %c0_13 = arith.constant 0 : index
    %25 = vector.load %arg3[%c0_11, %c0_12, %c0_13] : memref<1x8x1024xf32, #tpu.memory_space<vmem>>, vector<1x8x1024xf32>
    %26 = vector.shape_cast %25 : vector<1x8x1024xf32> to vector<8x1024xf32>
    %27 = vector.shape_cast %24 : vector<8x1024xf32> to vector<1x8x1024xf32>
    tpu.vector_store %arg3[%c0_11, %c0_12, %c0_13], %27 {strides = array<i32>} : memref<1x8x1024xf32, #tpu.memory_space<vmem>>, vector<1x8x1024xf32>,
    return
  }
  func.func @transform_0(%arg0: i32) -> (i32, i32) {
    %c0_i32 = arith.constant 0 : i32
    %c0_i32_0 = arith.constant 0 : i32
    %c0_i32_1 = arith.constant 0 : i32
    return %c0_i32, %c0_i32_0 : i32, i32
  }
  func.func @transform_1(%arg0: i32) -> (i32, i32, i32) {
    %c0_i32 = arith.constant 0 : i32
    %c0_i32_0 = arith.constant 0 : i32
    %c0_i32_1 = arith.constant 0 : i32
    return %arg0, %c0_i32, %c0_i32_0 : i32, i32, i32
  }
  func.func @transform_2(%arg0: i32) -> (i32, i32, i32) {
    %c0_i32 = arith.constant 0 : i32
    %c0_i32_0 = arith.constant 0 : i32
    %c0_i32_1 = arith.constant 0 : i32
    return %arg0, %c0_i32, %c0_i32_0 : i32, i32, i32
  }
}

module attributes {stable_mosaic.version = 11 : i64} {
  func.func @kernel(%arg0: i32, %arg1: memref<16x128xbf16, #tpu.memory_space<vmem>>, %arg2: memref<1x128x256xbf16, #tpu.memory_space<vmem>>, %arg3: memref<1x16x256xf32, #tpu.memory_space<vmem>>) attributes {dimension_semantics = [#tpu.dimension_semantics<parallel>], iteration_bounds = array<i64: 2>, scalar_prefetch = 0 : i64, scratch_operands = 0 : i64, tpu.core_type = #tpu.core_type<tc>, window_params = [{pipeline_mode = #tpu.pipeline_mode<synchronous>, transform_indices = @transform_0, window_bounds = array<i64: 16, 128>}, {transform_indices = @transform_1, window_bounds = array<i64: 1, 128, 256>}, {transform_indices = @transform_2, window_bounds = array<i64: 1, 16, 256>}]} {
    %c0 = arith.constant 0 : index
    %c0_0 = arith.constant 0 : index
    %0 = vector.load %arg1[%c0, %c0_0] : memref<16x128xbf16, #tpu.memory_space<vmem>>, vector<16x128xbf16>
    %c0_1 = arith.constant 0 : index
    %c0_2 = arith.constant 0 : index
    %c0_3 = arith.constant 0 : index
    %1 = vector.load %arg2[%c0_1, %c0_2, %c0_3] : memref<1x128x256xbf16, #tpu.memory_space<vmem>>, vector<1x128x256xbf16>
    %2 = vector.shape_cast %1 : vector<1x128x256xbf16> to vector<128x256xbf16>
    %cst = arith.constant dense<0.000000e+00> : vector<16x256xf32>
    %3 = tpu.matmul %0, %2, %cst {dimension_numbers = #tpu.dot_dimension_numbers<[1], [0], [0], [1], [0, 0, 1, 1], [], []>} : vector<16x128xbf16>, vector<128x256xbf16>, vector<16x256xf32> -> vector<16x256xf32>
    %cst_4 = arith.constant dense<0.000000e+00> : vector<16xf32>
    %4 = vector.multi_reduction <add>, %3, %cst_4 [1] : vector<16x256xf32> to vector<16xf32>
    %5 = vector.shape_cast %4 : vector<16xf32> to vector<16x1xf32>
    %cst_5 = arith.constant 2.560000e+02 : f32
    %6 = vector.broadcast %cst_5 : f32 to vector<16x1xf32>
    %7 = arith.divf %5, %6 : vector<16x1xf32>
    %8 = vector.broadcast %7 : vector<16x1xf32> to vector<16x256xf32>
    %9 = arith.subf %3, %8 : vector<16x256xf32>
    %10 = arith.mulf %9, %9 : vector<16x256xf32>
    %cst_6 = arith.constant dense<0.000000e+00> : vector<16xf32>
    %11 = vector.multi_reduction <add>, %10, %cst_6 [1] : vector<16x256xf32> to vector<16xf32>
    %12 = vector.shape_cast %11 : vector<16xf32> to vector<16x1xf32>
    %cst_7 = arith.constant 2.560000e+02 : f32
    %13 = vector.broadcast %cst_7 : f32 to vector<16x1xf32>
    %14 = arith.divf %12, %13 : vector<16x1xf32>
    %cst_8 = arith.constant 9.99999974E-6 : f32
    %15 = vector.broadcast %cst_8 : f32 to vector<16x1xf32>
    %16 = arith.addf %14, %15 : vector<16x1xf32>
    %17 = math.rsqrt %16 : vector<16x1xf32>
    %18 = vector.broadcast %17 : vector<16x1xf32> to vector<16x256xf32>
    %19 = arith.mulf %9, %18 : vector<16x256xf32>
    %cst_9 = arith.constant 0.000000e+00 : f32
    %20 = vector.broadcast %cst_9 : f32 to vector<16x256xf32>
    %21 = arith.cmpf oge, %19, %20 : vector<16x256xf32>
    %cst_10 = arith.constant 0.00999999977 : f32
    %22 = vector.broadcast %cst_10 : f32 to vector<16x256xf32>
    %23 = arith.mulf %22, %19 : vector<16x256xf32>
    %24 = arith.select %21, %19, %23 : vector<16x256xi1>, vector<16x256xf32>
    %c0_11 = arith.constant 0 : index
    %c0_12 = arith.constant 0 : index
    %c0_13 = arith.constant 0 : index
    %25 = vector.load %arg3[%c0_11, %c0_12, %c0_13] : memref<1x16x256xf32, #tpu.memory_space<vmem>>, vector<1x16x256xf32>
    %26 = vector.shape_cast %25 : vector<1x16x256xf32> to vector<16x256xf32>
    %27 = vector.shape_cast %24 : vector<16x256xf32> to vector<1x16x256xf32>
    tpu.vector_store %arg3[%c0_11, %c0_12, %c0_13], %27 {strides = array<i32>} : memref<1x16x256xf32, #tpu.memory_space<vmem>>, vector<1x16x256xf32>,
    return
  }
  func.func @transform_0(%arg0: i32) -> (i32, i32) {
    %c0_i32 = arith.constant 0 : i32
    %c0_i32_0 = arith.constant 0 : i32
    %c0_i32_1 = arith.constant 0 : i32
    return %c0_i32, %c0_i32_0 : i32, i32
  }
  func.func @transform_1(%arg0: i32) -> (i32, i32, i32) {
    %c0_i32 = arith.constant 0 : i32
    %c0_i32_0 = arith.constant 0 : i32
    %c0_i32_1 = arith.constant 0 : i32
    return %arg0, %c0_i32, %c0_i32_0 : i32, i32, i32
  }
  func.func @transform_2(%arg0: i32) -> (i32, i32, i32) {
    %c0_i32 = arith.constant 0 : i32
    %c0_i32_0 = arith.constant 0 : i32
    %c0_i32_1 = arith.constant 0 : i32
    return %arg0, %c0_i32, %c0_i32_0 : i32, i32, i32
  }
}

module attributes {stable_mosaic.version = 11 : i64} {
  func.func @kernel(%arg0: i32, %arg1: memref<32x256xbf16, #tpu.memory_space<vmem>>, %arg2: memref<1x256x64xbf16, #tpu.memory_space<vmem>>, %arg3: memref<1x32x64xf32, #tpu.memory_space<vmem>>) attributes {dimension_semantics = [#tpu.dimension_semantics<parallel>], iteration_bounds = array<i64: 2>, scalar_prefetch = 0 : i64, scratch_operands = 0 : i64, tpu.core_type = #tpu.core_type<tc>, window_params = [{pipeline_mode = #tpu.pipeline_mode<synchronous>, transform_indices = @transform_0, window_bounds = array<i64: 32, 256>}, {transform_indices = @transform_1, window_bounds = array<i64: 1, 256, 64>}, {transform_indices = @transform_2, window_bounds = array<i64: 1, 32, 64>}]} {
    %c0 = arith.constant 0 : index
    %c0_0 = arith.constant 0 : index
    %0 = vector.load %arg1[%c0, %c0_0] : memref<32x256xbf16, #tpu.memory_space<vmem>>, vector<32x256xbf16>
    %c0_1 = arith.constant 0 : index
    %c0_2 = arith.constant 0 : index
    %c0_3 = arith.constant 0 : index
    %1 = vector.load %arg2[%c0_1, %c0_2, %c0_3] : memref<1x256x64xbf16, #tpu.memory_space<vmem>>, vector<1x256x64xbf16>
    %2 = vector.shape_cast %1 : vector<1x256x64xbf16> to vector<256x64xbf16>
    %cst = arith.constant dense<0.000000e+00> : vector<32x64xf32>
    %3 = tpu.matmul %0, %2, %cst {dimension_numbers = #tpu.dot_dimension_numbers<[1], [0], [0], [1], [0, 0, 1, 1], [], []>} : vector<32x256xbf16>, vector<256x64xbf16>, vector<32x64xf32> -> vector<32x64xf32>
    %cst_4 = arith.constant dense<0.000000e+00> : vector<32xf32>
    %4 = vector.multi_reduction <add>, %3, %cst_4 [1] : vector<32x64xf32> to vector<32xf32>
    %5 = vector.shape_cast %4 : vector<32xf32> to vector<32x1xf32>
    %cst_5 = arith.constant 6.400000e+01 : f32
    %6 = vector.broadcast %cst_5 : f32 to vector<32x1xf32>
    %7 = arith.divf %5, %6 : vector<32x1xf32>
    %8 = vector.broadcast %7 : vector<32x1xf32> to vector<32x64xf32>
    %9 = arith.subf %3, %8 : vector<32x64xf32>
    %10 = arith.mulf %9, %9 : vector<32x64xf32>
    %cst_6 = arith.constant dense<0.000000e+00> : vector<32xf32>
    %11 = vector.multi_reduction <add>, %10, %cst_6 [1] : vector<32x64xf32> to vector<32xf32>
    %12 = vector.shape_cast %11 : vector<32xf32> to vector<32x1xf32>
    %cst_7 = arith.constant 6.400000e+01 : f32
    %13 = vector.broadcast %cst_7 : f32 to vector<32x1xf32>
    %14 = arith.divf %12, %13 : vector<32x1xf32>
    %cst_8 = arith.constant 9.99999974E-6 : f32
    %15 = vector.broadcast %cst_8 : f32 to vector<32x1xf32>
    %16 = arith.addf %14, %15 : vector<32x1xf32>
    %17 = math.rsqrt %16 : vector<32x1xf32>
    %18 = vector.broadcast %17 : vector<32x1xf32> to vector<32x64xf32>
    %19 = arith.mulf %9, %18 : vector<32x64xf32>
    %cst_9 = arith.constant 0.000000e+00 : f32
    %20 = vector.broadcast %cst_9 : f32 to vector<32x64xf32>
    %21 = arith.cmpf oge, %19, %20 : vector<32x64xf32>
    %cst_10 = arith.constant 0.00999999977 : f32
    %22 = vector.broadcast %cst_10 : f32 to vector<32x64xf32>
    %23 = arith.mulf %22, %19 : vector<32x64xf32>
    %24 = arith.select %21, %19, %23 : vector<32x64xi1>, vector<32x64xf32>
    %c0_11 = arith.constant 0 : index
    %c0_12 = arith.constant 0 : index
    %c0_13 = arith.constant 0 : index
    %25 = vector.load %arg3[%c0_11, %c0_12, %c0_13] : memref<1x32x64xf32, #tpu.memory_space<vmem>>, vector<1x32x64xf32>
    %26 = vector.shape_cast %25 : vector<1x32x64xf32> to vector<32x64xf32>
    %27 = vector.shape_cast %24 : vector<32x64xf32> to vector<1x32x64xf32>
    tpu.vector_store %arg3[%c0_11, %c0_12, %c0_13], %27 {strides = array<i32>} : memref<1x32x64xf32, #tpu.memory_space<vmem>>, vector<1x32x64xf32>,
    return
  }
  func.func @transform_0(%arg0: i32) -> (i32, i32) {
    %c0_i32 = arith.constant 0 : i32
    %c0_i32_0 = arith.constant 0 : i32
    %c0_i32_1 = arith.constant 0 : i32
    return %c0_i32, %c0_i32_0 : i32, i32
  }
  func.func @transform_1(%arg0: i32) -> (i32, i32, i32) {
    %c0_i32 = arith.constant 0 : i32
    %c0_i32_0 = arith.constant 0 : i32
    %c0_i32_1 = arith.constant 0 : i32
    return %arg0, %c0_i32, %c0_i32_0 : i32, i32, i32
  }
  func.func @transform_2(%arg0: i32) -> (i32, i32, i32) {
    %c0_i32 = arith.constant 0 : i32
    %c0_i32_0 = arith.constant 0 : i32
    %c0_i32_1 = arith.constant 0 : i32
    return %arg0, %c0_i32, %c0_i32_0 : i32, i32, i32
  }
}

module attributes {stable_mosaic.version = 11 : i64} {
  func.func @kernel(%arg0: i32, %arg1: memref<64x512xbf16, #tpu.memory_space<vmem>>, %arg2: memref<1x512x16xbf16, #tpu.memory_space<vmem>>, %arg3: memref<1x64x16xf32, #tpu.memory_space<vmem>>) attributes {dimension_semantics = [#tpu.dimension_semantics<parallel>], iteration_bounds = array<i64: 2>, scalar_prefetch = 0 : i64, scratch_operands = 0 : i64, tpu.core_type = #tpu.core_type<tc>, window_params = [{pipeline_mode = #tpu.pipeline_mode<synchronous>, transform_indices = @transform_0, window_bounds = array<i64: 64, 512>}, {transform_indices = @transform_1, window_bounds = array<i64: 1, 512, 16>}, {transform_indices = @transform_2, window_bounds = array<i64: 1, 64, 16>}]} {
    %c0 = arith.constant 0 : index
    %c0_0 = arith.constant 0 : index
    %0 = vector.load %arg1[%c0, %c0_0] : memref<64x512xbf16, #tpu.memory_space<vmem>>, vector<64x512xbf16>
    %c0_1 = arith.constant 0 : index
    %c0_2 = arith.constant 0 : index
    %c0_3 = arith.constant 0 : index
    %1 = vector.load %arg2[%c0_1, %c0_2, %c0_3] : memref<1x512x16xbf16, #tpu.memory_space<vmem>>, vector<1x512x16xbf16>
    %2 = vector.shape_cast %1 : vector<1x512x16xbf16> to vector<512x16xbf16>
    %cst = arith.constant dense<0.000000e+00> : vector<64x16xf32>
    %3 = tpu.matmul %0, %2, %cst {dimension_numbers = #tpu.dot_dimension_numbers<[1], [0], [0], [1], [0, 0, 1, 1], [], []>} : vector<64x512xbf16>, vector<512x16xbf16>, vector<64x16xf32> -> vector<64x16xf32>
    %cst_4 = arith.constant dense<0.000000e+00> : vector<64xf32>
    %4 = vector.multi_reduction <add>, %3, %cst_4 [1] : vector<64x16xf32> to vector<64xf32>
    %5 = vector.shape_cast %4 : vector<64xf32> to vector<64x1xf32>
    %cst_5 = arith.constant 1.600000e+01 : f32
    %6 = vector.broadcast %cst_5 : f32 to vector<64x1xf32>
    %7 = arith.divf %5, %6 : vector<64x1xf32>
    %8 = vector.broadcast %7 : vector<64x1xf32> to vector<64x16xf32>
    %9 = arith.subf %3, %8 : vector<64x16xf32>
    %10 = arith.mulf %9, %9 : vector<64x16xf32>
    %cst_6 = arith.constant dense<0.000000e+00> : vector<64xf32>
    %11 = vector.multi_reduction <add>, %10, %cst_6 [1] : vector<64x16xf32> to vector<64xf32>
    %12 = vector.shape_cast %11 : vector<64xf32> to vector<64x1xf32>
    %cst_7 = arith.constant 1.600000e+01 : f32
    %13 = vector.broadcast %cst_7 : f32 to vector<64x1xf32>
    %14 = arith.divf %12, %13 : vector<64x1xf32>
    %cst_8 = arith.constant 9.99999974E-6 : f32
    %15 = vector.broadcast %cst_8 : f32 to vector<64x1xf32>
    %16 = arith.addf %14, %15 : vector<64x1xf32>
    %17 = math.rsqrt %16 : vector<64x1xf32>
    %18 = vector.broadcast %17 : vector<64x1xf32> to vector<64x16xf32>
    %19 = arith.mulf %9, %18 : vector<64x16xf32>
    %cst_9 = arith.constant 0.000000e+00 : f32
    %20 = vector.broadcast %cst_9 : f32 to vector<64x16xf32>
    %21 = arith.cmpf oge, %19, %20 : vector<64x16xf32>
    %cst_10 = arith.constant 0.00999999977 : f32
    %22 = vector.broadcast %cst_10 : f32 to vector<64x16xf32>
    %23 = arith.mulf %22, %19 : vector<64x16xf32>
    %24 = arith.select %21, %19, %23 : vector<64x16xi1>, vector<64x16xf32>
    %c0_11 = arith.constant 0 : index
    %c0_12 = arith.constant 0 : index
    %c0_13 = arith.constant 0 : index
    %25 = vector.load %arg3[%c0_11, %c0_12, %c0_13] : memref<1x64x16xf32, #tpu.memory_space<vmem>>, vector<1x64x16xf32>
    %26 = vector.shape_cast %25 : vector<1x64x16xf32> to vector<64x16xf32>
    %27 = vector.shape_cast %24 : vector<64x16xf32> to vector<1x64x16xf32>
    tpu.vector_store %arg3[%c0_11, %c0_12, %c0_13], %27 {strides = array<i32>} : memref<1x64x16xf32, #tpu.memory_space<vmem>>, vector<1x64x16xf32>,
    return
  }
  func.func @transform_0(%arg0: i32) -> (i32, i32) {
    %c0_i32 = arith.constant 0 : i32
    %c0_i32_0 = arith.constant 0 : i32
    %c0_i32_1 = arith.constant 0 : i32
    return %c0_i32, %c0_i32_0 : i32, i32
  }
  func.func @transform_1(%arg0: i32) -> (i32, i32, i32) {
    %c0_i32 = arith.constant 0 : i32
    %c0_i32_0 = arith.constant 0 : i32
    %c0_i32_1 = arith.constant 0 : i32
    return %arg0, %c0_i32, %c0_i32_0 : i32, i32, i32
  }
  func.func @transform_2(%arg0: i32) -> (i32, i32, i32) {
    %c0_i32 = arith.constant 0 : i32
    %c0_i32_0 = arith.constant 0 : i32
    %c0_i32_1 = arith.constant 0 : i32
    return %arg0, %c0_i32, %c0_i32_0 : i32, i32, i32
  }
}

module attributes {stable_mosaic.version = 11 : i64} {
  func.func @kernel(%arg0: i32, %arg1: memref<64x1024xbf16, #tpu.memory_space<vmem>>, %arg2: memref<1x1024x4xbf16, #tpu.memory_space<vmem>>, %arg3: memref<1x64x4xf32, #tpu.memory_space<vmem>>) attributes {dimension_semantics = [#tpu.dimension_semantics<parallel>], iteration_bounds = array<i64: 2>, scalar_prefetch = 0 : i64, scratch_operands = 0 : i64, tpu.core_type = #tpu.core_type<tc>, window_params = [{pipeline_mode = #tpu.pipeline_mode<synchronous>, transform_indices = @transform_0, window_bounds = array<i64: 64, 1024>}, {transform_indices = @transform_1, window_bounds = array<i64: 1, 1024, 4>}, {transform_indices = @transform_2, window_bounds = array<i64: 1, 64, 4>}]} {
    %c0 = arith.constant 0 : index
    %c0_0 = arith.constant 0 : index
    %0 = vector.load %arg1[%c0, %c0_0] : memref<64x1024xbf16, #tpu.memory_space<vmem>>, vector<64x1024xbf16>
    %c0_1 = arith.constant 0 : index
    %c0_2 = arith.constant 0 : index
    %c0_3 = arith.constant 0 : index
    %1 = vector.load %arg2[%c0_1, %c0_2, %c0_3] : memref<1x1024x4xbf16, #tpu.memory_space<vmem>>, vector<1x1024x4xbf16>
    %2 = vector.shape_cast %1 : vector<1x1024x4xbf16> to vector<1024x4xbf16>
    %cst = arith.constant dense<0.000000e+00> : vector<64x4xf32>
    %3 = tpu.matmul %0, %2, %cst {dimension_numbers = #tpu.dot_dimension_numbers<[1], [0], [0], [1], [0, 0, 1, 1], [], []>} : vector<64x1024xbf16>, vector<1024x4xbf16>, vector<64x4xf32> -> vector<64x4xf32>
    %cst_4 = arith.constant dense<0.000000e+00> : vector<64xf32>
    %4 = vector.multi_reduction <add>, %3, %cst_4 [1] : vector<64x4xf32> to vector<64xf32>
    %5 = vector.shape_cast %4 : vector<64xf32> to vector<64x1xf32>
    %cst_5 = arith.constant 4.000000e+00 : f32
    %6 = vector.broadcast %cst_5 : f32 to vector<64x1xf32>
    %7 = arith.divf %5, %6 : vector<64x1xf32>
    %8 = vector.broadcast %7 : vector<64x1xf32> to vector<64x4xf32>
    %9 = arith.subf %3, %8 : vector<64x4xf32>
    %10 = arith.mulf %9, %9 : vector<64x4xf32>
    %cst_6 = arith.constant dense<0.000000e+00> : vector<64xf32>
    %11 = vector.multi_reduction <add>, %10, %cst_6 [1] : vector<64x4xf32> to vector<64xf32>
    %12 = vector.shape_cast %11 : vector<64xf32> to vector<64x1xf32>
    %cst_7 = arith.constant 4.000000e+00 : f32
    %13 = vector.broadcast %cst_7 : f32 to vector<64x1xf32>
    %14 = arith.divf %12, %13 : vector<64x1xf32>
    %cst_8 = arith.constant 9.99999974E-6 : f32
    %15 = vector.broadcast %cst_8 : f32 to vector<64x1xf32>
    %16 = arith.addf %14, %15 : vector<64x1xf32>
    %17 = math.rsqrt %16 : vector<64x1xf32>
    %18 = vector.broadcast %17 : vector<64x1xf32> to vector<64x4xf32>
    %19 = arith.mulf %9, %18 : vector<64x4xf32>
    %cst_9 = arith.constant 0.000000e+00 : f32
    %20 = vector.broadcast %cst_9 : f32 to vector<64x4xf32>
    %21 = arith.cmpf oge, %19, %20 : vector<64x4xf32>
    %cst_10 = arith.constant 0.00999999977 : f32
    %22 = vector.broadcast %cst_10 : f32 to vector<64x4xf32>
    %23 = arith.mulf %22, %19 : vector<64x4xf32>
    %24 = arith.select %21, %19, %23 : vector<64x4xi1>, vector<64x4xf32>
    %c0_11 = arith.constant 0 : index
    %c0_12 = arith.constant 0 : index
    %c0_13 = arith.constant 0 : index
    %25 = vector.load %arg3[%c0_11, %c0_12, %c0_13] : memref<1x64x4xf32, #tpu.memory_space<vmem>>, vector<1x64x4xf32>
    %26 = vector.shape_cast %25 : vector<1x64x4xf32> to vector<64x4xf32>
    %27 = vector.shape_cast %24 : vector<64x4xf32> to vector<1x64x4xf32>
    tpu.vector_store %arg3[%c0_11, %c0_12, %c0_13], %27 {strides = array<i32>} : memref<1x64x4xf32, #tpu.memory_space<vmem>>, vector<1x64x4xf32>,
    return
  }
  func.func @transform_0(%arg0: i32) -> (i32, i32) {
    %c0_i32 = arith.constant 0 : i32
    %c0_i32_0 = arith.constant 0 : i32
    %c0_i32_1 = arith.constant 0 : i32
    return %c0_i32, %c0_i32_0 : i32, i32
  }
  func.func @transform_1(%arg0: i32) -> (i32, i32, i32) {
    %c0_i32 = arith.constant 0 : i32
    %c0_i32_0 = arith.constant 0 : i32
    %c0_i32_1 = arith.constant 0 : i32
    return %arg0, %c0_i32, %c0_i32_0 : i32, i32, i32
  }
  func.func @transform_2(%arg0: i32) -> (i32, i32, i32) {
    %c0_i32 = arith.constant 0 : i32
    %c0_i32_0 = arith.constant 0 : i32
    %c0_i32_1 = arith.constant 0 : i32
    return %arg0, %c0_i32, %c0_i32_0 : i32, i32, i32
  }
}

module attributes {stable_mosaic.version = 11 : i64} {
  func.func @kernel(%arg0: i32, %arg1: memref<1x1024xbf16, #tpu.memory_space<vmem>>, %arg2: memref<1x1024x1xbf16, #tpu.memory_space<vmem>>, %arg3: memref<1x1xf32, #tpu.memory_space<vmem>>, %arg4: memref<1x1x1xf32, #tpu.memory_space<vmem>>) attributes {dimension_semantics = [#tpu.dimension_semantics<parallel>], iteration_bounds = array<i64: 2>, scalar_prefetch = 0 : i64, scratch_operands = 0 : i64, tpu.core_type = #tpu.core_type<tc>, window_params = [{pipeline_mode = #tpu.pipeline_mode<synchronous>, transform_indices = @transform_0, window_bounds = array<i64: 1, 1024>}, {transform_indices = @transform_1, window_bounds = array<i64: 1, 1024, 1>}, {pipeline_mode = #tpu.pipeline_mode<synchronous>, transform_indices = @transform_2, window_bounds = array<i64: 1, 1>}, {transform_indices = @transform_3, window_bounds = array<i64: 1, 1, 1>}]} {
    %c0 = arith.constant 0 : index
    %c0_0 = arith.constant 0 : index
    %0 = vector.load %arg1[%c0, %c0_0] : memref<1x1024xbf16, #tpu.memory_space<vmem>>, vector<1x1024xbf16>
    %c0_1 = arith.constant 0 : index
    %c0_2 = arith.constant 0 : index
    %c0_3 = arith.constant 0 : index
    %1 = vector.load %arg2[%c0_1, %c0_2, %c0_3] : memref<1x1024x1xbf16, #tpu.memory_space<vmem>>, vector<1x1024x1xbf16>
    %2 = vector.shape_cast %1 : vector<1x1024x1xbf16> to vector<1024x1xbf16>
    %cst = arith.constant dense<0.000000e+00> : vector<1x1xf32>
    %3 = tpu.matmul %0, %2, %cst {dimension_numbers = #tpu.dot_dimension_numbers<[1], [0], [0], [1], [0, 0, 1, 1], [], []>} : vector<1x1024xbf16>, vector<1024x1xbf16>, vector<1x1xf32> -> vector<1x1xf32>
    %c0_4 = arith.constant 0 : index
    %c0_5 = arith.constant 0 : index
    %4 = vector.load %arg3[%c0_4, %c0_5] : memref<1x1xf32, #tpu.memory_space<vmem>>, vector<1x1xf32>
    %5 = arith.addf %3, %4 : vector<1x1xf32>
    %c0_6 = arith.constant 0 : index
    %c0_7 = arith.constant 0 : index
    %c0_8 = arith.constant 0 : index
    %6 = vector.load %arg4[%c0_6, %c0_7, %c0_8] : memref<1x1x1xf32, #tpu.memory_space<vmem>>, vector<1x1x1xf32>
    %7 = vector.shape_cast %6 : vector<1x1x1xf32> to vector<1x1xf32>
    %8 = vector.shape_cast %5 : vector<1x1xf32> to vector<1x1x1xf32>
    tpu.vector_store %arg4[%c0_6, %c0_7, %c0_8], %8 {strides = array<i32>} : memref<1x1x1xf32, #tpu.memory_space<vmem>>, vector<1x1x1xf32>,
    return
  }
  func.func @transform_0(%arg0: i32) -> (i32, i32) {
    %c0_i32 = arith.constant 0 : i32
    %c0_i32_0 = arith.constant 0 : i32
    %c0_i32_1 = arith.constant 0 : i32
    return %c0_i32, %c0_i32_0 : i32, i32
  }
  func.func @transform_1(%arg0: i32) -> (i32, i32, i32) {
    %c0_i32 = arith.constant 0 : i32
    %c0_i32_0 = arith.constant 0 : i32
    %c0_i32_1 = arith.constant 0 : i32
    return %arg0, %c0_i32, %c0_i32_0 : i32, i32, i32
  }
  func.func @transform_2(%arg0: i32) -> (i32, i32) {
    %c0_i32 = arith.constant 0 : i32
    %c0_i32_0 = arith.constant 0 : i32
    %c0_i32_1 = arith.constant 0 : i32
    return %c0_i32, %c0_i32_0 : i32, i32
  }
  func.func @transform_3(%arg0: i32) -> (i32, i32, i32) {
    %c0_i32 = arith.constant 0 : i32
    %c0_i32_0 = arith.constant 0 : i32
    %c0_i32_1 = arith.constant 0 : i32
    return %arg0, %c0_i32, %c0_i32_0 : i32, i32, i32
  }
}

</mosaic_0001>

<llo_original>
// kernel: discriminator_forward.6
$region0: #{discriminator_forward.6}
  #allocation0 [shape = 'u32[]', space=smem, size = 0x4, offset = 0x4, fixed_abs, tag = 'smem constant byte address 0x4 - core index']
  #allocation1 [shape = 'u32[72,128]{1,0:T(1,128)}', space=vmem, size = 0x9000, scoped, tag = 'internal scratch']
  %s0 = inlined_call_operand.vmem [shape: bf16[8,48], index: 0, kind: input, shape index: {}]
  %s1 = inlined_call_operand.vmem [shape: bf16[2,48,1024], index: 1, kind: input, shape index: {}]
  %s2 = inlined_call_operand.vmem [shape: f32[2,8,1024], index: 2, kind: output, shape index: {}]
  %s3 = sld [smem:[#allocation0]]
  $region41: #{discriminator_forward.6} parent=0
    _
  %s5 = ssub.s32 1, %s3
  %s6 = scalar_select 0, %s5, %s3
  loop: start=0, step=1, limit=4
  $region2: #{discriminator_forward.6} parent=0 // loop_pre_header
    _
  $region3: #{discriminator_forward.6} parent=0 // loop_header
    %s8 = sphi 0, %s12
    %p9 = scmp.ge.s32.totalorder %s8, 4
    %s16 = sphi 0, %s16
    %s18 = sphi 0, %s16
    %s19 = sphi 0, %s18
    %s33 = sphi 0, %s19
    %s39 = sphi 0, %s41
    %s42 = sphi 0, %s39
    %s43 = sphi 0, %s42
    %s59 = sphi 0, %s43
    %s65 = sphi 0, %s67
    %s68 = sphi 0, %s65
    %s69 = sphi 0, %s68
    %s85 = sphi 0, %s69
  $region4: #{discriminator_forward.6} parent=0 // loop_header_branch
    %11 = sbr.rel (%p9) target = $region8
  $region5: #{discriminator_forward.6} parent=0 // loop_body
    %s13 = ssub.s32 %s8, 1
    %s14 = ssub.s32 %s8, 2
    %s15 = sadd.s32 %s8, 1
    %s17 = sadd.s32 %s16, 1
    %p20 = scmp.eq.s32.totalorder %s8, 1
    %p21 = scmp.ne.s32.totalorder %s16, %s18
    %p22 = scmp.eq.s32.totalorder %s8, 0
    %p23 = por %p21, %p22
    %p24 = scmp.ne.s32.totalorder %s16, %s18
    %p25 = scmp.eq.s32.totalorder %s13, 1
    %p26 = por %p24, %p25
    %p27 = scmp.ne.s32.totalorder %s18, %s19
    %p28 = scmp.eq.s32.totalorder %s13, 0
    %p29 = por %p27, %p28
    %p30 = scmp.ne.s32.totalorder %s18, %s19
    %p31 = scmp.eq.s32.totalorder %s14, 1
    %p32 = por %p30, %p31
    %p34 = scmp.ne.s32.totalorder %s19, %s33
    %p35 = scmp.eq.s32.totalorder %s14, 0
    %p36 = por %p34, %p35
    %s37 = ssub.s32 %s8, %s15
    %p38 = scmp.eq.s32.totalorder %s37, 0
    %s40 = sadd.s32 %s39, 1
    %s41 = scalar_select %p38, %s39, %s40
    %p44 = pneg %p38
    %p45 = scmp.eq.s32.totalorder %s8, 1
    %p46 = por %p44, %p45
    %p47 = scmp.ne.s32.totalorder %s39, %s42
    %p48 = scmp.eq.s32.totalorder %s8, 0
    %p49 = por %p47, %p48
    %p50 = scmp.ne.s32.totalorder %s39, %s42
    %p51 = scmp.eq.s32.totalorder %s13, 1
    %p52 = por %p50, %p51
    %p53 = scmp.ne.s32.totalorder %s42, %s43
    %p54 = scmp.eq.s32.totalorder %s13, 0
    %p55 = por %p53, %p54
    %p56 = scmp.ne.s32.totalorder %s42, %s43
    %p57 = scmp.eq.s32.totalorder %s14, 1
    %p58 = por %p56, %p57
    %p60 = scmp.ne.s32.totalorder %s43, %s59
    %p61 = scmp.eq.s32.totalorder %s14, 0
    %p62 = por %p60, %p61
    %s63 = ssub.s32 %s8, %s15
    %p64 = scmp.eq.s32.totalorder %s63, 0
    %s66 = sadd.s32 %s65, 1
    %s67 = scalar_select %p64, %s65, %s66
    %p70 = pneg %p64
    %p71 = scmp.eq.s32.totalorder %s8, 1
    %p72 = por %p70, %p71
    %p73 = scmp.ne.s32.totalorder %s65, %s68
    %p74 = scmp.eq.s32.totalorder %s8, 0
    %p75 = por %p73, %p74
    %p76 = scmp.ne.s32.totalorder %s65, %s68
    %p77 = scmp.eq.s32.totalorder %s13, 1
    %p78 = por %p76, %p77
    %p79 = scmp.ne.s32.totalorder %s68, %s69
    %p80 = scmp.eq.s32.totalorder %s13, 0
    %p81 = por %p79, %p80
    %p82 = scmp.ne.s32.totalorder %s68, %s69
    %p83 = scmp.eq.s32.totalorder %s14, 1
    %p84 = por %p82, %p83
    %p86 = scmp.ne.s32.totalorder %s69, %s85
    %p87 = scmp.eq.s32.totalorder %s14, 0
    %p88 = por %p86, %p87
    %p89 = scmp.le.s32.totalorder 1, %s8
    %p90 = scmp.lt.s32.totalorder %s8, 3
    %p91 = pnand %p89, %p90
    %p92 = pneg %p91
    // Predicated region
    $region9: #{discriminator_forward.6} parent=5 // pred_check
      _
    $region10: #{discriminator_forward.6} parent=5 // pred_check_branch
      %94 = sbr.rel (%p91) target = $region12
    $region11: #{discriminator_forward.6} parent=5 // pred_region
      %s95 = ssub.s32 %s8, 1
      // Predicated region
      $region13: #{discriminator_forward.6} parent=11 // pred_check
        %p96 = pneg %p29
      $region14: #{discriminator_forward.6} parent=11 // pred_check_branch
        %98 = sbr.rel (%p96) target = $region16
      $region15: #{discriminator_forward.6} parent=11 // pred_region
        _
      $region16: #{discriminator_forward.6} parent=11 // pred_fallthru
        _
    $region12: #{discriminator_forward.6} parent=5 // pred_fallthru
      _
    %p99 = scmp.lt.s32.totalorder %s8, 2
    // Predicated region
    $region17: #{discriminator_forward.6} parent=5 // pred_check
      %p100 = pneg %p99
    $region18: #{discriminator_forward.6} parent=5 // pred_check_branch
      %102 = sbr.rel (%p100) target = $region20
    $region19: #{discriminator_forward.6} parent=5 // pred_region
      // Predicated region
      $region21: #{discriminator_forward.6} parent=19 // pred_check
        %p103 = pneg %p49
      $region22: #{discriminator_forward.6} parent=19 // pred_check_branch
        %105 = sbr.rel (%p103) target = $region24
      $region23: #{discriminator_forward.6} parent=19 // pred_region
        %p106 = scmp.lt.s32.totalorder %s8, 1
        %s107 = scalar_select %p106, %s8, 1
        %s108 = smul.addr %s107, 48
        %s109 = smul.addr %s108, 4
        %s110 = scalar_lea.vmem %s1, %s109
      $region24: #{discriminator_forward.6} parent=19 // pred_fallthru
        _
    $region20: #{discriminator_forward.6} parent=5 // pred_fallthru
      _
    %p111 = scmp.le.s32.totalorder 1, %s8
    %p112 = scmp.lt.s32.totalorder %s8, 3
    %p113 = pnand %p111, %p112
    %p114 = pneg %p113
    // Predicated region
    $region25: #{discriminator_forward.6} parent=5 // pred_check
      _
    $region26: #{discriminator_forward.6} parent=5 // pred_check_branch
      %116 = sbr.rel (%p113) target = $region28
    $region27: #{discriminator_forward.6} parent=5 // pred_region
      %s117 = ssub.s32 %s8, 1
      %p118 = pneg %p29
      %p119 = pneg %p26
      %p120 = scmp.lt.s32.totalorder %s13, 1
      %s121 = scalar_select %p120, %s13, 1
      %s122 = smul.addr %s121, 48
      %s123 = smul.addr %s122, 4
      %s124 = scalar_lea.vmem %s1, %s123
      %p125 = pneg %p55
      %p126 = pneg %p52
      %p127 = pneg %p81
      %p128 = pneg %p78
      %p129 = scmp.lt.s32.totalorder %s13, 1
      %s130 = scalar_select %p129, %s13, 1
      %s131 = smul.addr %s130, 8
      %s132 = smul.addr %s131, 8
      %s133 = scalar_lea.vmem %s2, %s132
      %p134 = scmp.lt.s32.totalorder %s13, 1
      %s135 = scalar_select %p134, %s13, 1
      %s136 = smul.addr %s135, 48
      %s137 = smul.addr %s136, 4
      %s138 = scalar_lea.vmem %s1, %s137
      %p139 = scmp.lt.s32.totalorder %s13, 1
      %s140 = scalar_select %p139, %s13, 1
      %s141 = smul.addr %s140, 8
      %s142 = smul.addr %s141, 8
      %s143 = scalar_lea.vmem %s2, %s142
      %v145 = vld [vmem:[%s0] sm:$0xf]
      %v146 = vld [vmem:[%s138] sm:$0xff]
      %v147 = vld [vmem:[%s138 + $0x8] sm:$0xff]
      %v148 = vld [vmem:[%s138 + $0x10] sm:$0xff]
      %v149 = vld [vmem:[%s138 + $0x18] sm:$0xff]
      %v150 = vld [vmem:[%s138 + $0x20] sm:$0xff]
      %v151 = vld [vmem:[%s138 + $0x28] sm:$0xff]
      %v152 = vld [vmem:[%s138 + $0x30] sm:$0xff]
      %v153 = vld [vmem:[%s138 + $0x38] sm:$0xff]
      %v154 = vld [vmem:[%s138 + $0x40] sm:$0xff]
      %v155 = vld [vmem:[%s138 + $0x48] sm:$0xff]
      %v156 = vld [vmem:[%s138 + $0x50] sm:$0xff]
      %v157 = vld [vmem:[%s138 + $0x58] sm:$0xff]
      %v158 = vld [vmem:[%s138 + $0x60] sm:$0xff]
      %v159 = vld [vmem:[%s138 + $0x68] sm:$0xff]
      %v160 = vld [vmem:[%s138 + $0x70] sm:$0xff]
      %v161 = vld [vmem:[%s138 + $0x78] sm:$0xff]
      %v162 = vld [vmem:[%s138 + $0x80] sm:$0xff]
      %v163 = vld [vmem:[%s138 + $0x88] sm:$0xff]
      %v164 = vld [vmem:[%s138 + $0x90] sm:$0xff]
      %v165 = vld [vmem:[%s138 + $0x98] sm:$0xff]
      %v166 = vld [vmem:[%s138 + $0xa0] sm:$0xff]
      %v167 = vld [vmem:[%s138 + $0xa8] sm:$0xff]
      %v168 = vld [vmem:[%s138 + $0xb0] sm:$0xff]
      %v169 = vld [vmem:[%s138 + $0xb8] sm:$0xff]
      %v194 = vunpack.c.l.b16 %v146
      %v195 = vunpack.c.h.b16 %v146
      %v196 = vunpack.c.l.b16 %v147
      %v197 = vunpack.c.h.b16 %v147
      %v198 = vunpack.c.l.b16 %v148
      %v199 = vunpack.c.h.b16 %v148
      %v200 = vunpack.c.l.b16 %v149
      %v201 = vunpack.c.h.b16 %v149
      %v202 = vunpack.c.l.b16 %v150
      %v203 = vunpack.c.h.b16 %v150
      %v204 = vunpack.c.l.b16 %v151
      %v205 = vunpack.c.h.b16 %v151
      %v206 = vunpack.c.l.b16 %v152
      %v207 = vunpack.c.h.b16 %v152
      %v208 = vunpack.c.l.b16 %v153
      %v209 = vunpack.c.h.b16 %v153
      %v210 = vunpack.c.l.b16 %v154
      %v211 = vunpack.c.h.b16 %v154
      %v212 = vunpack.c.l.b16 %v155
      %v213 = vunpack.c.h.b16 %v155
      %v214 = vunpack.c.l.b16 %v156
      %v215 = vunpack.c.h.b16 %v156
      %v216 = vunpack.c.l.b16 %v157
      %v217 = vunpack.c.h.b16 %v157
      %v218 = vunpack.c.l.b16 %v158
      %v219 = vunpack.c.h.b16 %v158
      %v220 = vunpack.c.l.b16 %v159
      %v221 = vunpack.c.h.b16 %v159
      %v222 = vunpack.c.l.b16 %v160
      %v223 = vunpack.c.h.b16 %v160
      %v224 = vunpack.c.l.b16 %v161
      %v225 = vunpack.c.h.b16 %v161
      %v226 = vunpack.c.l.b16 %v162
      %v227 = vunpack.c.h.b16 %v162
      %v228 = vunpack.c.l.b16 %v163
      %v229 = vunpack.c.h.b16 %v163
      %v230 = vunpack.c.l.b16 %v164
      %v231 = vunpack.c.h.b16 %v164
      %v232 = vunpack.c.l.b16 %v165
      %v233 = vunpack.c.h.b16 %v165
      %v234 = vunpack.c.l.b16 %v166
      %v235 = vunpack.c.h.b16 %v166
      %v236 = vunpack.c.l.b16 %v167
      %v237 = vunpack.c.h.b16 %v167
      %v238 = vunpack.c.l.b16 %v168
      %v239 = vunpack.c.h.b16 %v168
      %v240 = vunpack.c.l.b16 %v169
      %v241 = vunpack.c.h.b16 %v169
      %v242 = vpack.c.b16 %v202, %v194
      %v243 = vpack.c.b16 %v203, %v195
      %v244 = vpack.c.b16 %v204, %v196
      %v245 = vpack.c.b16 %v205, %v197
      %v246 = vpack.c.b16 %v206, %v198
      %v247 = vpack.c.b16 %v207, %v199
      %v248 = vpack.c.b16 %v208, %v200
      %v249 = vpack.c.b16 %v209, %v201
      %v250 = vpack.c.b16 %v218, %v210
      %v251 = vpack.c.b16 %v219, %v211
      %v252 = vpack.c.b16 %v220, %v212
      %v253 = vpack.c.b16 %v221, %v213
      %v254 = vpack.c.b16 %v222, %v214
      %v255 = vpack.c.b16 %v223, %v215
      %v256 = vpack.c.b16 %v224, %v216
      %v257 = vpack.c.b16 %v225, %v217
      %v258 = vpack.c.b16 %v234, %v226
      %v259 = vpack.c.b16 %v235, %v227
      %v260 = vpack.c.b16 %v236, %v228
      %v261 = vpack.c.b16 %v237, %v229
      %v262 = vpack.c.b16 %v238, %v230
      %v263 = vpack.c.b16 %v239, %v231
      %v264 = vpack.c.b16 %v240, %v232
      %v265 = vpack.c.b16 %v241, %v233
      %vm290 = vcmask 392192
      %v292 = vsel %vm290, %v145, 0
      %294 = vmatpush.bf16.msra.mxu0 0
      %295 = vmatpush.bf16.msra.mxu0 0
      %296 = vmatpush.bf16.msra.mxu0 0
      %297 = vmatpush.bf16.msra.mxu0 0
      %298 = vmatpush.bf16.msra.mxu0 0
      %299 = vmatpush.bf16.msra.mxu0 %v258
      %300 = vmatpush.bf16.msra.mxu0 %v250
      %301 = vmatpush.bf16.msra.mxu0 %v242
      %302 = vmatmul.bf16.gmra.mxu0 %v292
      %v303 = vpop.f32.mrf.mxu0
      %v304 = vadd.f32 0.0, %v303
      %v305 = vpop.f32.mrf.mxu0
      %306 = vdwg.mxu0
      %307 = vmatpush.bf16.msra.mxu0 0
      %308 = vmatpush.bf16.msra.mxu0 0
      %309 = vmatpush.bf16.msra.mxu0 0
      %310 = vmatpush.bf16.msra.mxu0 0
      %311 = vmatpush.bf16.msra.mxu0 0
      %312 = vmatpush.bf16.msra.mxu0 %v259
      %313 = vmatpush.bf16.msra.mxu0 %v251
      %314 = vmatpush.bf16.msra.mxu0 %v243
      %315 = vmatmul.bf16.gmra.mxu0 %v292
      %v316 = vpop.f32.mrf.mxu0
      %v317 = vadd.f32 0.0, %v316
      %v318 = vpop.f32.mrf.mxu0
      %319 = vdwg.mxu0
      %320 = vmatpush.bf16.msra.mxu0 0
      %321 = vmatpush.bf16.msra.mxu0 0
      %322 = vmatpush.bf16.msra.mxu0 0
      %323 = vmatpush.bf16.msra.mxu0 0
      %324 = vmatpush.bf16.msra.mxu0 0
      %325 = vmatpush.bf16.msra.mxu0 %v260
      %326 = vmatpush.bf16.msra.mxu0 %v252
      %327 = vmatpush.bf16.msra.mxu0 %v244
      %328 = vmatmul.bf16.gmra.mxu0 %v292
      %v329 = vpop.f32.mrf.mxu0
      %v330 = vadd.f32 0.0, %v329
      %v331 = vpop.f32.mrf.mxu0
      %332 = vdwg.mxu0
      %333 = vmatpush.bf16.msra.mxu0 0
      %334 = vmatpush.bf16.msra.mxu0 0
      %335 = vmatpush.bf16.msra.mxu0 0
      %336 = vmatpush.bf16.msra.mxu0 0
      %337 = vmatpush.bf16.msra.mxu0 0
      %338 = vmatpush.bf16.msra.mxu0 %v261
      %339 = vmatpush.bf16.msra.mxu0 %v253
      %340 = vmatpush.bf16.msra.mxu0 %v245
      %341 = vmatmul.bf16.gmra.mxu0 %v292
      %v342 = vpop.f32.mrf.mxu0
      %v343 = vadd.f32 0.0, %v342
      %v344 = vpop.f32.mrf.mxu0
      %345 = vdwg.mxu0
      %346 = vmatpush.bf16.msra.mxu0 0
      %347 = vmatpush.bf16.msra.mxu0 0
      %348 = vmatpush.bf16.msra.mxu0 0
      %349 = vmatpush.bf16.msra.mxu0 0
      %350 = vmatpush.bf16.msra.mxu0 0
      %351 = vmatpush.bf16.msra.mxu0 %v262
      %352 = vmatpush.bf16.msra.mxu0 %v254
      %353 = vmatpush.bf16.msra.mxu0 %v246
      %354 = vmatmul.bf16.gmra.mxu0 %v292
      %v355 = vpop.f32.mrf.mxu0
      %v356 = vadd.f32 0.0, %v355
      %v357 = vpop.f32.mrf.mxu0
      %358 = vdwg.mxu0
      %359 = vmatpush.bf16.msra.mxu0 0
      %360 = vmatpush.bf16.msra.mxu0 0
      %361 = vmatpush.bf16.msra.mxu0 0
      %362 = vmatpush.bf16.msra.mxu0 0
      %363 = vmatpush.bf16.msra.mxu0 0
      %364 = vmatpush.bf16.msra.mxu0 %v263
      %365 = vmatpush.bf16.msra.mxu0 %v255
      %366 = vmatpush.bf16.msra.mxu0 %v247
      %367 = vmatmul.bf16.gmra.mxu0 %v292
      %v368 = vpop.f32.mrf.mxu0
      %v369 = vadd.f32 0.0, %v368
      %v370 = vpop.f32.mrf.mxu0
      %371 = vdwg.mxu0
      %372 = vmatpush.bf16.msra.mxu0 0
      %373 = vmatpush.bf16.msra.mxu0 0
      %374 = vmatpush.bf16.msra.mxu0 0
      %375 = vmatpush.bf16.msra.mxu0 0
      %376 = vmatpush.bf16.msra.mxu0 0
      %377 = vmatpush.bf16.msra.mxu0 %v264
      %378 = vmatpush.bf16.msra.mxu0 %v256
      %379 = vmatpush.bf16.msra.mxu0 %v248
      %380 = vmatmul.bf16.gmra.mxu0 %v292
      %v381 = vpop.f32.mrf.mxu0
      %v382 = vadd.f32 0.0, %v381
      %v383 = vpop.f32.mrf.mxu0
      %384 = vdwg.mxu0
      %385 = vmatpush.bf16.msra.mxu0 0
      %386 = vmatpush.bf16.msra.mxu0 0
      %387 = vmatpush.bf16.msra.mxu0 0
      %388 = vmatpush.bf16.msra.mxu0 0
      %389 = vmatpush.bf16.msra.mxu0 0
      %390 = vmatpush.bf16.msra.mxu0 %v265
      %391 = vmatpush.bf16.msra.mxu0 %v257
      %392 = vmatpush.bf16.msra.mxu0 %v249
      %393 = vmatmul.bf16.gmra.mxu0 %v292
      %v394 = vpop.f32.mrf.mxu0
      %v395 = vadd.f32 0.0, %v394
      %v396 = vpop.f32.mrf.mxu0
      %397 = vdwg.mxu0
      %v398 = vadd.f32 %v304, %v317
      %v399 = vadd.f32 %v398, %v330
      %v400 = vadd.f32 %v399, %v343
      %v401 = vadd.f32 %v400, %v356
      %v402 = vadd.f32 %v401, %v369
      %v403 = vadd.f32 %v402, %v382
      %v404 = vadd.f32 %v403, %v395
      %405 = vadd.xlane.f32.xlu0 %v404
      %v406 = vpop.xlane.xlu0 %405
      %v407 = vrcp.pop 1024.0
      %v408 = vmul.f32 1024.0, %v407
      %v409 = vsub.f32 1.0, %v408
      %v410 = vmul.f32 %v407, %v409
      %v411 = vadd.f32 %v407, %v410
      %vm412 = vweird.f32 %v407
      %v413 = vsel %vm412, %v407, %v411
      %v414 = vmul.f32 %v406, %v413
      %v415 = vsub.f32 %v304, %v414
      %v416 = vsub.f32 %v317, %v414
      %v417 = vsub.f32 %v330, %v414
      %v418 = vsub.f32 %v343, %v414
      %v419 = vsub.f32 %v356, %v414
      %v420 = vsub.f32 %v369, %v414
      %v421 = vsub.f32 %v382, %v414
      %v422 = vsub.f32 %v395, %v414
      %v423 = vmul.f32 %v415, %v415
      %v424 = vmul.f32 %v416, %v416
      %v425 = vmul.f32 %v417, %v417
      %v426 = vmul.f32 %v418, %v418
      %v427 = vmul.f32 %v419, %v419
      %v428 = vmul.f32 %v420, %v420
      %v429 = vmul.f32 %v421, %v421
      %v430 = vmul.f32 %v422, %v422
      %v431 = vadd.f32 %v423, %v424
      %v432 = vadd.f32 %v431, %v425
      %v433 = vadd.f32 %v432, %v426
      %v434 = vadd.f32 %v433, %v427
      %v435 = vadd.f32 %v434, %v428
      %v436 = vadd.f32 %v435, %v429
      %v437 = vadd.f32 %v436, %v430
      %438 = vadd.xlane.f32.xlu0 %v437
      %v439 = vpop.xlane.xlu0 %438
      %v440 = vmul.f32 %v439, %v413
      %v441 = vadd.f32 %v440, 1e-05
      %v442 = vrsqrt.pop %v441
      %v443 = vmul.f32 %v442, %v441
      %v444 = vmul.f32 %v443, %v442
      %v445 = vmul.f32 0.5, %v444
      %v446 = vsub.f32 1.5, %v445
      %v447 = vmul.f32 %v442, %v446
      %vm448 = vweird.f32 %v441
      %vm449 = vweird.f32 %v442
      %vm450 = vmor %vm448, %vm449
      %v451 = vsel %vm450, %v442, %v447
      %v452 = vmul.f32 %v415, %v451
      %v453 = vmul.f32 %v416, %v451
      %v454 = vmul.f32 %v417, %v451
      %v455 = vmul.f32 %v418, %v451
      %v456 = vmul.f32 %v419, %v451
      %v457 = vmul.f32 %v420, %v451
      %v458 = vmul.f32 %v421, %v451
      %v459 = vmul.f32 %v422, %v451
      %vm460 = vcmp.ge.f32.partialorder %v452, 0.0
      %vm461 = vcmp.ge.f32.partialorder %v453, 0.0
      %vm462 = vcmp.ge.f32.partialorder %v454, 0.0
      %vm463 = vcmp.ge.f32.partialorder %v455, 0.0
      %vm464 = vcmp.ge.f32.partialorder %v456, 0.0
      %vm465 = vcmp.ge.f32.partialorder %v457, 0.0
      %vm466 = vcmp.ge.f32.partialorder %v458, 0.0
      %vm467 = vcmp.ge.f32.partialorder %v459, 0.0
      %v468 = vmul.f32 %v452, 0.01
      %v469 = vmul.f32 %v453, 0.01
      %v470 = vmul.f32 %v454, 0.01
      %v471 = vmul.f32 %v455, 0.01
      %v472 = vmul.f32 %v456, 0.01
      %v473 = vmul.f32 %v457, 0.01
      %v474 = vmul.f32 %v458, 0.01
      %v475 = vmul.f32 %v459, 0.01
      %v476 = vsel %vm460, %v452, %v468
      %v477 = vsel %vm461, %v453, %v469
      %v478 = vsel %vm462, %v454, %v470
      %v479 = vsel %vm463, %v455, %v471
      %v480 = vsel %vm464, %v456, %v472
      %v481 = vsel %vm465, %v457, %v473
      %v482 = vsel %vm466, %v458, %v474
      %v483 = vsel %vm467, %v459, %v475
      %484 = vst [vmem:[%s143] sm:$0xff] %v476
      %485 = vst [vmem:[%s143 + $0x8] sm:$0xff] %v477
      %486 = vst [vmem:[%s143 + $0x10] sm:$0xff] %v478
      %487 = vst [vmem:[%s143 + $0x18] sm:$0xff] %v479
      %488 = vst [vmem:[%s143 + $0x20] sm:$0xff] %v480
      %489 = vst [vmem:[%s143 + $0x28] sm:$0xff] %v481
      %490 = vst [vmem:[%s143 + $0x30] sm:$0xff] %v482
      %491 = vst [vmem:[%s143 + $0x38] sm:$0xff] %v483
      %p492 = scmp.lt.s32.totalorder %s13, 1
      %s493 = scalar_select %p492, %s13, 1
      %s494 = smul.addr %s493, 8
      %s495 = smul.addr %s494, 8
      %s496 = scalar_lea.vmem %s2, %s495
      // Predicated region
      $region29: #{discriminator_forward.6} parent=27 // pred_check
        %p497 = pneg %p78
      $region30: #{discriminator_forward.6} parent=27 // pred_check_branch
        %499 = sbr.rel (%p497) target = $region32
      $region31: #{discriminator_forward.6} parent=27 // pred_region
        _
      $region32: #{discriminator_forward.6} parent=27 // pred_fallthru
        _
    $region28: #{discriminator_forward.6} parent=5 // pred_fallthru
      _
    %p500 = scmp.le.s32.totalorder 2, %s8
    // Predicated region
    $region33: #{discriminator_forward.6} parent=5 // pred_check
      %p501 = pneg %p500
    $region34: #{discriminator_forward.6} parent=5 // pred_check_branch
      %503 = sbr.rel (%p501) target = $region36
    $region35: #{discriminator_forward.6} parent=5 // pred_region
      %s504 = ssub.s32 %s8, 2
      // Predicated region
      $region37: #{discriminator_forward.6} parent=35 // pred_check
        %p505 = pneg %p84
      $region38: #{discriminator_forward.6} parent=35 // pred_check_branch
        %507 = sbr.rel (%p505) target = $region40
      $region39: #{discriminator_forward.6} parent=35 // pred_region
        %p508 = scmp.lt.s32.totalorder %s14, 1
        %s509 = scalar_select %p508, %s14, 1
        %s510 = smul.addr %s509, 8
        %s511 = smul.addr %s510, 8
        %s512 = scalar_lea.vmem %s2, %s511
      $region40: #{discriminator_forward.6} parent=35 // pred_fallthru
        _
    $region36: #{discriminator_forward.6} parent=5 // pred_fallthru
      _
  $region6: #{discriminator_forward.6} parent=0 // loop_footer
    %s12 = sadd.s32 1, %s8
  $region7: #{discriminator_forward.6} parent=0 // loop_footer_branch
    %7 = sbr.rel target = $region3
  $region8: #{discriminator_forward.6} parent=0 // loop_exit
    _

// kernel: discriminator_forward.7
$region0: #{discriminator_forward.7}
  #allocation0 [shape = 'u32[]', space=smem, size = 0x4, offset = 0x4, fixed_abs, tag = 'smem constant byte address 0x4 - core index']
  #allocation1 [shape = 'u32[72,128]{1,0:T(1,128)}', space=vmem, size = 0x9000, scoped, tag = 'internal scratch']
  %s0 = inlined_call_operand.vmem [shape: bf16[16,128], index: 0, kind: input, shape index: {}]
  %s1 = inlined_call_operand.vmem [shape: bf16[2,128,256], index: 1, kind: input, shape index: {}]
  %s2 = inlined_call_operand.vmem [shape: f32[2,16,256], index: 2, kind: output, shape index: {}]
  %s3 = sld [smem:[#allocation0]]
  $region41: #{discriminator_forward.7} parent=0
    _
  %s5 = ssub.s32 1, %s3
  %s6 = scalar_select 0, %s5, %s3
  loop: start=0, step=1, limit=4
  $region2: #{discriminator_forward.7} parent=0 // loop_pre_header
    _
  $region3: #{discriminator_forward.7} parent=0 // loop_header
    %s8 = sphi 0, %s12
    %p9 = scmp.ge.s32.totalorder %s8, 4
    %s16 = sphi 0, %s16
    %s18 = sphi 0, %s16
    %s19 = sphi 0, %s18
    %s33 = sphi 0, %s19
    %s39 = sphi 0, %s41
    %s42 = sphi 0, %s39
    %s43 = sphi 0, %s42
    %s59 = sphi 0, %s43
    %s65 = sphi 0, %s67
    %s68 = sphi 0, %s65
    %s69 = sphi 0, %s68
    %s85 = sphi 0, %s69
  $region4: #{discriminator_forward.7} parent=0 // loop_header_branch
    %11 = sbr.rel (%p9) target = $region8
  $region5: #{discriminator_forward.7} parent=0 // loop_body
    %s13 = ssub.s32 %s8, 1
    %s14 = ssub.s32 %s8, 2
    %s15 = sadd.s32 %s8, 1
    %s17 = sadd.s32 %s16, 1
    %p20 = scmp.eq.s32.totalorder %s8, 1
    %p21 = scmp.ne.s32.totalorder %s16, %s18
    %p22 = scmp.eq.s32.totalorder %s8, 0
    %p23 = por %p21, %p22
    %p24 = scmp.ne.s32.totalorder %s16, %s18
    %p25 = scmp.eq.s32.totalorder %s13, 1
    %p26 = por %p24, %p25
    %p27 = scmp.ne.s32.totalorder %s18, %s19
    %p28 = scmp.eq.s32.totalorder %s13, 0
    %p29 = por %p27, %p28
    %p30 = scmp.ne.s32.totalorder %s18, %s19
    %p31 = scmp.eq.s32.totalorder %s14, 1
    %p32 = por %p30, %p31
    %p34 = scmp.ne.s32.totalorder %s19, %s33
    %p35 = scmp.eq.s32.totalorder %s14, 0
    %p36 = por %p34, %p35
    %s37 = ssub.s32 %s8, %s15
    %p38 = scmp.eq.s32.totalorder %s37, 0
    %s40 = sadd.s32 %s39, 1
    %s41 = scalar_select %p38, %s39, %s40
    %p44 = pneg %p38
    %p45 = scmp.eq.s32.totalorder %s8, 1
    %p46 = por %p44, %p45
    %p47 = scmp.ne.s32.totalorder %s39, %s42
    %p48 = scmp.eq.s32.totalorder %s8, 0
    %p49 = por %p47, %p48
    %p50 = scmp.ne.s32.totalorder %s39, %s42
    %p51 = scmp.eq.s32.totalorder %s13, 1
    %p52 = por %p50, %p51
    %p53 = scmp.ne.s32.totalorder %s42, %s43
    %p54 = scmp.eq.s32.totalorder %s13, 0
    %p55 = por %p53, %p54
    %p56 = scmp.ne.s32.totalorder %s42, %s43
    %p57 = scmp.eq.s32.totalorder %s14, 1
    %p58 = por %p56, %p57
    %p60 = scmp.ne.s32.totalorder %s43, %s59
    %p61 = scmp.eq.s32.totalorder %s14, 0
    %p62 = por %p60, %p61
    %s63 = ssub.s32 %s8, %s15
    %p64 = scmp.eq.s32.totalorder %s63, 0
    %s66 = sadd.s32 %s65, 1
    %s67 = scalar_select %p64, %s65, %s66
    %p70 = pneg %p64
    %p71 = scmp.eq.s32.totalorder %s8, 1
    %p72 = por %p70, %p71
    %p73 = scmp.ne.s32.totalorder %s65, %s68
    %p74 = scmp.eq.s32.totalorder %s8, 0
    %p75 = por %p73, %p74
    %p76 = scmp.ne.s32.totalorder %s65, %s68
    %p77 = scmp.eq.s32.totalorder %s13, 1
    %p78 = por %p76, %p77
    %p79 = scmp.ne.s32.totalorder %s68, %s69
    %p80 = scmp.eq.s32.totalorder %s13, 0
    %p81 = por %p79, %p80
    %p82 = scmp.ne.s32.totalorder %s68, %s69
    %p83 = scmp.eq.s32.totalorder %s14, 1
    %p84 = por %p82, %p83
    %p86 = scmp.ne.s32.totalorder %s69, %s85
    %p87 = scmp.eq.s32.totalorder %s14, 0
    %p88 = por %p86, %p87
    %p89 = scmp.le.s32.totalorder 1, %s8
    %p90 = scmp.lt.s32.totalorder %s8, 3
    %p91 = pnand %p89, %p90
    %p92 = pneg %p91
    // Predicated region
    $region9: #{discriminator_forward.7} parent=5 // pred_check
      _
    $region10: #{discriminator_forward.7} parent=5 // pred_check_branch
      %94 = sbr.rel (%p91) target = $region12
    $region11: #{discriminator_forward.7} parent=5 // pred_region
      %s95 = ssub.s32 %s8, 1
      // Predicated region
      $region13: #{discriminator_forward.7} parent=11 // pred_check
        %p96 = pneg %p29
      $region14: #{discriminator_forward.7} parent=11 // pred_check_branch
        %98 = sbr.rel (%p96) target = $region16
      $region15: #{discriminator_forward.7} parent=11 // pred_region
        _
      $region16: #{discriminator_forward.7} parent=11 // pred_fallthru
        _
    $region12: #{discriminator_forward.7} parent=5 // pred_fallthru
      _
    %p99 = scmp.lt.s32.totalorder %s8, 2
    // Predicated region
    $region17: #{discriminator_forward.7} parent=5 // pred_check
      %p100 = pneg %p99
    $region18: #{discriminator_forward.7} parent=5 // pred_check_branch
      %102 = sbr.rel (%p100) target = $region20
    $region19: #{discriminator_forward.7} parent=5 // pred_region
      // Predicated region
      $region21: #{discriminator_forward.7} parent=19 // pred_check
        %p103 = pneg %p49
      $region22: #{discriminator_forward.7} parent=19 // pred_check_branch
        %105 = sbr.rel (%p103) target = $region24
      $region23: #{discriminator_forward.7} parent=19 // pred_region
        %p106 = scmp.lt.s32.totalorder %s8, 1
        %s107 = scalar_select %p106, %s8, 1
        %s108 = smul.addr %s107, 32
        %s109 = smul.addr %s108, 4
        %s110 = scalar_lea.vmem %s1, %s109
      $region24: #{discriminator_forward.7} parent=19 // pred_fallthru
        _
    $region20: #{discriminator_forward.7} parent=5 // pred_fallthru
      _
    %p111 = scmp.le.s32.totalorder 1, %s8
    %p112 = scmp.lt.s32.totalorder %s8, 3
    %p113 = pnand %p111, %p112
    %p114 = pneg %p113
    // Predicated region
    $region25: #{discriminator_forward.7} parent=5 // pred_check
      _
    $region26: #{discriminator_forward.7} parent=5 // pred_check_branch
      %116 = sbr.rel (%p113) target = $region28
    $region27: #{discriminator_forward.7} parent=5 // pred_region
      %s117 = ssub.s32 %s8, 1
      %p118 = pneg %p29
      %p119 = pneg %p26
      %p120 = scmp.lt.s32.totalorder %s13, 1
      %s121 = scalar_select %p120, %s13, 1
      %s122 = smul.addr %s121, 32
      %s123 = smul.addr %s122, 4
      %s124 = scalar_lea.vmem %s1, %s123
      %p125 = pneg %p55
      %p126 = pneg %p52
      %p127 = pneg %p81
      %p128 = pneg %p78
      %p129 = scmp.lt.s32.totalorder %s13, 1
      %s130 = scalar_select %p129, %s13, 1
      %s131 = smul.addr %s130, 4
      %s132 = smul.addr %s131, 8
      %s133 = scalar_lea.vmem %s2, %s132
      %p134 = scmp.lt.s32.totalorder %s13, 1
      %s135 = scalar_select %p134, %s13, 1
      %s136 = smul.addr %s135, 32
      %s137 = smul.addr %s136, 4
      %s138 = scalar_lea.vmem %s1, %s137
      %p139 = scmp.lt.s32.totalorder %s13, 1
      %s140 = scalar_select %p139, %s13, 1
      %s141 = smul.addr %s140, 4
      %s142 = smul.addr %s141, 8
      %s143 = scalar_lea.vmem %s2, %s142
      %v144 = vld [vmem:[%s0] sm:$0xf]
      %v145 = vld [vmem:[%s0 + $0x4] sm:$0xf]
      %v146 = vld [vmem:[%s138] sm:$0xff]
      %v147 = vld [vmem:[%s138 + $0x8] sm:$0xff]
      %v148 = vld [vmem:[%s138 + $0x10] sm:$0xff]
      %v149 = vld [vmem:[%s138 + $0x18] sm:$0xff]
      %v150 = vld [vmem:[%s138 + $0x20] sm:$0xff]
      %v151 = vld [vmem:[%s138 + $0x28] sm:$0xff]
      %v152 = vld [vmem:[%s138 + $0x30] sm:$0xff]
      %v153 = vld [vmem:[%s138 + $0x38] sm:$0xff]
      %v154 = vld [vmem:[%s138 + $0x40] sm:$0xff]
      %v155 = vld [vmem:[%s138 + $0x48] sm:$0xff]
      %v156 = vld [vmem:[%s138 + $0x50] sm:$0xff]
      %v157 = vld [vmem:[%s138 + $0x58] sm:$0xff]
      %v158 = vld [vmem:[%s138 + $0x60] sm:$0xff]
      %v159 = vld [vmem:[%s138 + $0x68] sm:$0xff]
      %v160 = vld [vmem:[%s138 + $0x70] sm:$0xff]
      %v161 = vld [vmem:[%s138 + $0x78] sm:$0xff]
      %v164 = vunpack.c.l.b16 %v144
      %v165 = vunpack.c.l.b16 %v145
      %v166 = vpack.c.b16 %v165, %v164
      %v184 = vunpack.c.l.b16 %v146
      %v185 = vunpack.c.h.b16 %v146
      %v186 = vunpack.c.l.b16 %v147
      %v187 = vunpack.c.h.b16 %v147
      %v188 = vunpack.c.l.b16 %v148
      %v189 = vunpack.c.h.b16 %v148
      %v190 = vunpack.c.l.b16 %v149
      %v191 = vunpack.c.h.b16 %v149
      %v192 = vunpack.c.l.b16 %v150
      %v193 = vunpack.c.h.b16 %v150
      %v194 = vunpack.c.l.b16 %v151
      %v195 = vunpack.c.h.b16 %v151
      %v196 = vunpack.c.l.b16 %v152
      %v197 = vunpack.c.h.b16 %v152
      %v198 = vunpack.c.l.b16 %v153
      %v199 = vunpack.c.h.b16 %v153
      %v200 = vunpack.c.l.b16 %v154
      %v201 = vunpack.c.h.b16 %v154
      %v202 = vunpack.c.l.b16 %v155
      %v203 = vunpack.c.h.b16 %v155
      %v204 = vunpack.c.l.b16 %v156
      %v205 = vunpack.c.h.b16 %v156
      %v206 = vunpack.c.l.b16 %v157
      %v207 = vunpack.c.h.b16 %v157
      %v208 = vunpack.c.l.b16 %v158
      %v209 = vunpack.c.h.b16 %v158
      %v210 = vunpack.c.l.b16 %v159
      %v211 = vunpack.c.h.b16 %v159
      %v212 = vunpack.c.l.b16 %v160
      %v213 = vunpack.c.h.b16 %v160
      %v214 = vunpack.c.l.b16 %v161
      %v215 = vunpack.c.h.b16 %v161
      %v216 = vpack.c.b16 %v186, %v184
      %v217 = vpack.c.b16 %v187, %v185
      %v218 = vpack.c.b16 %v190, %v188
      %v219 = vpack.c.b16 %v191, %v189
      %v220 = vpack.c.b16 %v194, %v192
      %v221 = vpack.c.b16 %v195, %v193
      %v222 = vpack.c.b16 %v198, %v196
      %v223 = vpack.c.b16 %v199, %v197
      %v224 = vpack.c.b16 %v202, %v200
      %v225 = vpack.c.b16 %v203, %v201
      %v226 = vpack.c.b16 %v206, %v204
      %v227 = vpack.c.b16 %v207, %v205
      %v228 = vpack.c.b16 %v210, %v208
      %v229 = vpack.c.b16 %v211, %v209
      %v230 = vpack.c.b16 %v214, %v212
      %v231 = vpack.c.b16 %v215, %v213
      %248 = vmatpush.bf16.msra.mxu0 %v230
      %249 = vmatpush.bf16.msra.mxu0 %v228
      %250 = vmatpush.bf16.msra.mxu0 %v226
      %251 = vmatpush.bf16.msra.mxu0 %v224
      %252 = vmatpush.bf16.msra.mxu0 %v222
      %253 = vmatpush.bf16.msra.mxu0 %v220
      %254 = vmatpush.bf16.msra.mxu0 %v218
      %255 = vmatpush.bf16.msra.mxu0 %v216
      %256 = vmatmul.bf16.gmra.mxu0 %v166
      %v257 = vpop.f32.mrf.mxu0
      %v258 = vadd.f32 0.0, %v257
      %v259 = vpop.f32.mrf.mxu0
      %v260 = vadd.f32 0.0, %v259
      %261 = vdwg.mxu0
      %262 = vmatpush.bf16.msra.mxu0 %v231
      %263 = vmatpush.bf16.msra.mxu0 %v229
      %264 = vmatpush.bf16.msra.mxu0 %v227
      %265 = vmatpush.bf16.msra.mxu0 %v225
      %266 = vmatpush.bf16.msra.mxu0 %v223
      %267 = vmatpush.bf16.msra.mxu0 %v221
      %268 = vmatpush.bf16.msra.mxu0 %v219
      %269 = vmatpush.bf16.msra.mxu0 %v217
      %270 = vmatmul.bf16.gmra.mxu0 %v166
      %v271 = vpop.f32.mrf.mxu0
      %v272 = vadd.f32 0.0, %v271
      %v273 = vpop.f32.mrf.mxu0
      %v274 = vadd.f32 0.0, %v273
      %275 = vdwg.mxu0
      %v276 = vadd.f32 %v258, %v272
      %277 = vadd.xlane.f32.xlu0 %v276
      %v278 = vpop.xlane.xlu0 %277
      %v279 = vadd.f32 %v260, %v274
      %280 = vadd.xlane.f32.xlu0 %v279
      %v281 = vpop.xlane.xlu0 %280
      %v282 = vrcp.pop 256.0
      %v283 = vmul.f32 256.0, %v282
      %v284 = vsub.f32 1.0, %v283
      %v285 = vmul.f32 %v282, %v284
      %v286 = vadd.f32 %v282, %v285
      %vm287 = vweird.f32 %v282
      %v288 = vsel %vm287, %v282, %v286
      %v289 = vmul.f32 %v278, %v288
      %v290 = vmul.f32 %v281, %v288
      %v291 = vsub.f32 %v258, %v289
      %v292 = vsub.f32 %v272, %v289
      %v293 = vsub.f32 %v260, %v290
      %v294 = vsub.f32 %v274, %v290
      %v295 = vmul.f32 %v291, %v291
      %v296 = vmul.f32 %v292, %v292
      %v297 = vmul.f32 %v293, %v293
      %v298 = vmul.f32 %v294, %v294
      %v299 = vadd.f32 %v295, %v296
      %300 = vadd.xlane.f32.xlu0 %v299
      %v301 = vpop.xlane.xlu0 %300
      %v302 = vadd.f32 %v297, %v298
      %303 = vadd.xlane.f32.xlu0 %v302
      %v304 = vpop.xlane.xlu0 %303
      %v305 = vmul.f32 %v301, %v288
      %v306 = vmul.f32 %v304, %v288
      %v307 = vadd.f32 %v305, 1e-05
      %v308 = vadd.f32 %v306, 1e-05
      %v309 = vrsqrt.pop %v307
      %v310 = vmul.f32 %v309, %v307
      %v311 = vmul.f32 %v310, %v309
      %v312 = vmul.f32 0.5, %v311
      %v313 = vsub.f32 1.5, %v312
      %v314 = vmul.f32 %v309, %v313
      %vm315 = vweird.f32 %v307
      %vm316 = vweird.f32 %v309
      %vm317 = vmor %vm315, %vm316
      %v318 = vsel %vm317, %v309, %v314
      %v319 = vrsqrt.pop %v308
      %v320 = vmul.f32 %v319, %v308
      %v321 = vmul.f32 %v320, %v319
      %v322 = vmul.f32 0.5, %v321
      %v323 = vsub.f32 1.5, %v322
      %v324 = vmul.f32 %v319, %v323
      %vm325 = vweird.f32 %v308
      %vm326 = vweird.f32 %v319
      %vm327 = vmor %vm325, %vm326
      %v328 = vsel %vm327, %v319, %v324
      %v329 = vmul.f32 %v291, %v318
      %v330 = vmul.f32 %v292, %v318
      %v331 = vmul.f32 %v293, %v328
      %v332 = vmul.f32 %v294, %v328
      %vm333 = vcmp.ge.f32.partialorder %v329, 0.0
      %vm334 = vcmp.ge.f32.partialorder %v330, 0.0
      %vm335 = vcmp.ge.f32.partialorder %v331, 0.0
      %vm336 = vcmp.ge.f32.partialorder %v332, 0.0
      %v337 = vmul.f32 %v329, 0.01
      %v338 = vmul.f32 %v330, 0.01
      %v339 = vmul.f32 %v331, 0.01
      %v340 = vmul.f32 %v332, 0.01
      %v341 = vsel %vm333, %v329, %v337
      %v342 = vsel %vm334, %v330, %v338
      %v343 = vsel %vm335, %v331, %v339
      %v344 = vsel %vm336, %v332, %v340
      %345 = vst [vmem:[%s143] sm:$0xff] %v341
      %346 = vst [vmem:[%s143 + $0x8] sm:$0xff] %v342
      %347 = vst [vmem:[%s143 + $0x10] sm:$0xff] %v343
      %348 = vst [vmem:[%s143 + $0x18] sm:$0xff] %v344
      %p349 = scmp.lt.s32.totalorder %s13, 1
      %s350 = scalar_select %p349, %s13, 1
      %s351 = smul.addr %s350, 4
      %s352 = smul.addr %s351, 8
      %s353 = scalar_lea.vmem %s2, %s352
      // Predicated region
      $region29: #{discriminator_forward.7} parent=27 // pred_check
        %p354 = pneg %p78
      $region30: #{discriminator_forward.7} parent=27 // pred_check_branch
        %356 = sbr.rel (%p354) target = $region32
      $region31: #{discriminator_forward.7} parent=27 // pred_region
        _
      $region32: #{discriminator_forward.7} parent=27 // pred_fallthru
        _
    $region28: #{discriminator_forward.7} parent=5 // pred_fallthru
      _
    %p357 = scmp.le.s32.totalorder 2, %s8
    // Predicated region
    $region33: #{discriminator_forward.7} parent=5 // pred_check
      %p358 = pneg %p357
    $region34: #{discriminator_forward.7} parent=5 // pred_check_branch
      %360 = sbr.rel (%p358) target = $region36
    $region35: #{discriminator_forward.7} parent=5 // pred_region
      %s361 = ssub.s32 %s8, 2
      // Predicated region
      $region37: #{discriminator_forward.7} parent=35 // pred_check
        %p362 = pneg %p84
      $region38: #{discriminator_forward.7} parent=35 // pred_check_branch
        %364 = sbr.rel (%p362) target = $region40
      $region39: #{discriminator_forward.7} parent=35 // pred_region
        %p365 = scmp.lt.s32.totalorder %s14, 1
        %s366 = scalar_select %p365, %s14, 1
        %s367 = smul.addr %s366, 4
        %s368 = smul.addr %s367, 8
        %s369 = scalar_lea.vmem %s2, %s368
      $region40: #{discriminator_forward.7} parent=35 // pred_fallthru
        _
    $region36: #{discriminator_forward.7} parent=5 // pred_fallthru
      _
  $region6: #{discriminator_forward.7} parent=0 // loop_footer
    %s12 = sadd.s32 1, %s8
  $region7: #{discriminator_forward.7} parent=0 // loop_footer_branch
    %7 = sbr.rel target = $region3
  $region8: #{discriminator_forward.7} parent=0 // loop_exit
    _

// kernel: discriminator_forward.8
$region0: #{discriminator_forward.8}
  #allocation0 [shape = 'u32[]', space=smem, size = 0x4, offset = 0x4, fixed_abs, tag = 'smem constant byte address 0x4 - core index']
  #allocation1 [shape = 'u32[72,128]{1,0:T(1,128)}', space=vmem, size = 0x9000, scoped, tag = 'internal scratch']
  %s0 = inlined_call_operand.vmem [shape: bf16[32,256], index: 0, kind: input, shape index: {}]
  %s1 = inlined_call_operand.vmem [shape: bf16[2,256,64], index: 1, kind: input, shape index: {}]
  %s2 = inlined_call_operand.vmem [shape: f32[2,32,64], index: 2, kind: output, shape index: {}]
  %s3 = sld [smem:[#allocation0]]
  $region41: #{discriminator_forward.8} parent=0
    _
  %s5 = ssub.s32 1, %s3
  %s6 = scalar_select 0, %s5, %s3
  loop: start=0, step=1, limit=4
  $region2: #{discriminator_forward.8} parent=0 // loop_pre_header
    _
  $region3: #{discriminator_forward.8} parent=0 // loop_header
    %s8 = sphi 0, %s12
    %p9 = scmp.ge.s32.totalorder %s8, 4
    %s16 = sphi 0, %s16
    %s18 = sphi 0, %s16
    %s19 = sphi 0, %s18
    %s33 = sphi 0, %s19
    %s39 = sphi 0, %s41
    %s42 = sphi 0, %s39
    %s43 = sphi 0, %s42
    %s59 = sphi 0, %s43
    %s65 = sphi 0, %s67
    %s68 = sphi 0, %s65
    %s69 = sphi 0, %s68
    %s85 = sphi 0, %s69
  $region4: #{discriminator_forward.8} parent=0 // loop_header_branch
    %11 = sbr.rel (%p9) target = $region8
  $region5: #{discriminator_forward.8} parent=0 // loop_body
    %s13 = ssub.s32 %s8, 1
    %s14 = ssub.s32 %s8, 2
    %s15 = sadd.s32 %s8, 1
    %s17 = sadd.s32 %s16, 1
    %p20 = scmp.eq.s32.totalorder %s8, 1
    %p21 = scmp.ne.s32.totalorder %s16, %s18
    %p22 = scmp.eq.s32.totalorder %s8, 0
    %p23 = por %p21, %p22
    %p24 = scmp.ne.s32.totalorder %s16, %s18
    %p25 = scmp.eq.s32.totalorder %s13, 1
    %p26 = por %p24, %p25
    %p27 = scmp.ne.s32.totalorder %s18, %s19
    %p28 = scmp.eq.s32.totalorder %s13, 0
    %p29 = por %p27, %p28
    %p30 = scmp.ne.s32.totalorder %s18, %s19
    %p31 = scmp.eq.s32.totalorder %s14, 1
    %p32 = por %p30, %p31
    %p34 = scmp.ne.s32.totalorder %s19, %s33
    %p35 = scmp.eq.s32.totalorder %s14, 0
    %p36 = por %p34, %p35
    %s37 = ssub.s32 %s8, %s15
    %p38 = scmp.eq.s32.totalorder %s37, 0
    %s40 = sadd.s32 %s39, 1
    %s41 = scalar_select %p38, %s39, %s40
    %p44 = pneg %p38
    %p45 = scmp.eq.s32.totalorder %s8, 1
    %p46 = por %p44, %p45
    %p47 = scmp.ne.s32.totalorder %s39, %s42
    %p48 = scmp.eq.s32.totalorder %s8, 0
    %p49 = por %p47, %p48
    %p50 = scmp.ne.s32.totalorder %s39, %s42
    %p51 = scmp.eq.s32.totalorder %s13, 1
    %p52 = por %p50, %p51
    %p53 = scmp.ne.s32.totalorder %s42, %s43
    %p54 = scmp.eq.s32.totalorder %s13, 0
    %p55 = por %p53, %p54
    %p56 = scmp.ne.s32.totalorder %s42, %s43
    %p57 = scmp.eq.s32.totalorder %s14, 1
    %p58 = por %p56, %p57
    %p60 = scmp.ne.s32.totalorder %s43, %s59
    %p61 = scmp.eq.s32.totalorder %s14, 0
    %p62 = por %p60, %p61
    %s63 = ssub.s32 %s8, %s15
    %p64 = scmp.eq.s32.totalorder %s63, 0
    %s66 = sadd.s32 %s65, 1
    %s67 = scalar_select %p64, %s65, %s66
    %p70 = pneg %p64
    %p71 = scmp.eq.s32.totalorder %s8, 1
    %p72 = por %p70, %p71
    %p73 = scmp.ne.s32.totalorder %s65, %s68
    %p74 = scmp.eq.s32.totalorder %s8, 0
    %p75 = por %p73, %p74
    %p76 = scmp.ne.s32.totalorder %s65, %s68
    %p77 = scmp.eq.s32.totalorder %s13, 1
    %p78 = por %p76, %p77
    %p79 = scmp.ne.s32.totalorder %s68, %s69
    %p80 = scmp.eq.s32.totalorder %s13, 0
    %p81 = por %p79, %p80
    %p82 = scmp.ne.s32.totalorder %s68, %s69
    %p83 = scmp.eq.s32.totalorder %s14, 1
    %p84 = por %p82, %p83
    %p86 = scmp.ne.s32.totalorder %s69, %s85
    %p87 = scmp.eq.s32.totalorder %s14, 0
    %p88 = por %p86, %p87
    %p89 = scmp.le.s32.totalorder 1, %s8
    %p90 = scmp.lt.s32.totalorder %s8, 3
    %p91 = pnand %p89, %p90
    %p92 = pneg %p91
    // Predicated region
    $region9: #{discriminator_forward.8} parent=5 // pred_check
      _
    $region10: #{discriminator_forward.8} parent=5 // pred_check_branch
      %94 = sbr.rel (%p91) target = $region12
    $region11: #{discriminator_forward.8} parent=5 // pred_region
      %s95 = ssub.s32 %s8, 1
      // Predicated region
      $region13: #{discriminator_forward.8} parent=11 // pred_check
        %p96 = pneg %p29
      $region14: #{discriminator_forward.8} parent=11 // pred_check_branch
        %98 = sbr.rel (%p96) target = $region16
      $region15: #{discriminator_forward.8} parent=11 // pred_region
        _
      $region16: #{discriminator_forward.8} parent=11 // pred_fallthru
        _
    $region12: #{discriminator_forward.8} parent=5 // pred_fallthru
      _
    %p99 = scmp.lt.s32.totalorder %s8, 2
    // Predicated region
    $region17: #{discriminator_forward.8} parent=5 // pred_check
      %p100 = pneg %p99
    $region18: #{discriminator_forward.8} parent=5 // pred_check_branch
      %102 = sbr.rel (%p100) target = $region20
    $region19: #{discriminator_forward.8} parent=5 // pred_region
      // Predicated region
      $region21: #{discriminator_forward.8} parent=19 // pred_check
        %p103 = pneg %p49
      $region22: #{discriminator_forward.8} parent=19 // pred_check_branch
        %105 = sbr.rel (%p103) target = $region24
      $region23: #{discriminator_forward.8} parent=19 // pred_region
        %p106 = scmp.lt.s32.totalorder %s8, 1
        %s107 = scalar_select %p106, %s8, 1
        %s108 = smul.addr %s107, 32
        %s109 = smul.addr %s108, 4
        %s110 = scalar_lea.vmem %s1, %s109
      $region24: #{discriminator_forward.8} parent=19 // pred_fallthru
        _
    $region20: #{discriminator_forward.8} parent=5 // pred_fallthru
      _
    %p111 = scmp.le.s32.totalorder 1, %s8
    %p112 = scmp.lt.s32.totalorder %s8, 3
    %p113 = pnand %p111, %p112
    %p114 = pneg %p113
    // Predicated region
    $region25: #{discriminator_forward.8} parent=5 // pred_check
      _
    $region26: #{discriminator_forward.8} parent=5 // pred_check_branch
      %116 = sbr.rel (%p113) target = $region28
    $region27: #{discriminator_forward.8} parent=5 // pred_region
      %s117 = ssub.s32 %s8, 1
      %p118 = pneg %p29
      %p119 = pneg %p26
      %p120 = scmp.lt.s32.totalorder %s13, 1
      %s121 = scalar_select %p120, %s13, 1
      %s122 = smul.addr %s121, 32
      %s123 = smul.addr %s122, 4
      %s124 = scalar_lea.vmem %s1, %s123
      %p125 = pneg %p55
      %p126 = pneg %p52
      %p127 = pneg %p81
      %p128 = pneg %p78
      %p129 = scmp.lt.s32.totalorder %s13, 1
      %s130 = scalar_select %p129, %s13, 1
      %s131 = smul.addr %s130, 4
      %s132 = smul.addr %s131, 8
      %s133 = scalar_lea.vmem %s2, %s132
      %p134 = scmp.lt.s32.totalorder %s13, 1
      %s135 = scalar_select %p134, %s13, 1
      %s136 = smul.addr %s135, 32
      %s137 = smul.addr %s136, 4
      %s138 = scalar_lea.vmem %s1, %s137
      %p139 = scmp.lt.s32.totalorder %s13, 1
      %s140 = scalar_select %p139, %s13, 1
      %s141 = smul.addr %s140, 4
      %s142 = smul.addr %s141, 8
      %s143 = scalar_lea.vmem %s2, %s142
      %v144 = vld [vmem:[%s0] sm:$0xff]
      %v145 = vld [vmem:[%s0 + $0x8] sm:$0xff]
      %v146 = vld [vmem:[%s0 + $0x10] sm:$0xff]
      %v147 = vld [vmem:[%s0 + $0x18] sm:$0xff]
      %v148 = vld [vmem:[%s138] sm:$0xf]
      %v149 = vld [vmem:[%s138 + $0x4] sm:$0xf]
      %v150 = vld [vmem:[%s138 + $0x8] sm:$0xf]
      %v151 = vld [vmem:[%s138 + $0xc] sm:$0xf]
      %v152 = vld [vmem:[%s138 + $0x10] sm:$0xf]
      %v153 = vld [vmem:[%s138 + $0x14] sm:$0xf]
      %v154 = vld [vmem:[%s138 + $0x18] sm:$0xf]
      %v155 = vld [vmem:[%s138 + $0x1c] sm:$0xf]
      %v156 = vld [vmem:[%s138 + $0x20] sm:$0xf]
      %v157 = vld [vmem:[%s138 + $0x24] sm:$0xf]
      %v158 = vld [vmem:[%s138 + $0x28] sm:$0xf]
      %v159 = vld [vmem:[%s138 + $0x2c] sm:$0xf]
      %v160 = vld [vmem:[%s138 + $0x30] sm:$0xf]
      %v161 = vld [vmem:[%s138 + $0x34] sm:$0xf]
      %v162 = vld [vmem:[%s138 + $0x38] sm:$0xf]
      %v163 = vld [vmem:[%s138 + $0x3c] sm:$0xf]
      %v164 = vld [vmem:[%s138 + $0x40] sm:$0xf]
      %v165 = vld [vmem:[%s138 + $0x44] sm:$0xf]
      %v166 = vld [vmem:[%s138 + $0x48] sm:$0xf]
      %v167 = vld [vmem:[%s138 + $0x4c] sm:$0xf]
      %v168 = vld [vmem:[%s138 + $0x50] sm:$0xf]
      %v169 = vld [vmem:[%s138 + $0x54] sm:$0xf]
      %v170 = vld [vmem:[%s138 + $0x58] sm:$0xf]
      %v171 = vld [vmem:[%s138 + $0x5c] sm:$0xf]
      %v172 = vld [vmem:[%s138 + $0x60] sm:$0xf]
      %v173 = vld [vmem:[%s138 + $0x64] sm:$0xf]
      %v174 = vld [vmem:[%s138 + $0x68] sm:$0xf]
      %v175 = vld [vmem:[%s138 + $0x6c] sm:$0xf]
      %v176 = vld [vmem:[%s138 + $0x70] sm:$0xf]
      %v177 = vld [vmem:[%s138 + $0x74] sm:$0xf]
      %v178 = vld [vmem:[%s138 + $0x78] sm:$0xf]
      %v179 = vld [vmem:[%s138 + $0x7c] sm:$0xf]
      %v184 = vunpack.c.l.b16 %v144
      %v185 = vunpack.c.h.b16 %v144
      %v186 = vunpack.c.l.b16 %v145
      %v187 = vunpack.c.h.b16 %v145
      %v188 = vunpack.c.l.b16 %v146
      %v189 = vunpack.c.h.b16 %v146
      %v190 = vunpack.c.l.b16 %v147
      %v191 = vunpack.c.h.b16 %v147
      %v192 = vpack.c.b16 %v186, %v184
      %v193 = vpack.c.b16 %v187, %v185
      %v194 = vpack.c.b16 %v190, %v188
      %v195 = vpack.c.b16 %v191, %v189
      %v232 = vunpack.c.l.b16 %v148
      %v233 = vunpack.c.l.b16 %v149
      %v234 = vunpack.c.l.b16 %v150
      %v235 = vunpack.c.l.b16 %v151
      %v236 = vunpack.c.l.b16 %v152
      %v237 = vunpack.c.l.b16 %v153
      %v238 = vunpack.c.l.b16 %v154
      %v239 = vunpack.c.l.b16 %v155
      %v240 = vunpack.c.l.b16 %v156
      %v241 = vunpack.c.l.b16 %v157
      %v242 = vunpack.c.l.b16 %v158
      %v243 = vunpack.c.l.b16 %v159
      %v244 = vunpack.c.l.b16 %v160
      %v245 = vunpack.c.l.b16 %v161
      %v246 = vunpack.c.l.b16 %v162
      %v247 = vunpack.c.l.b16 %v163
      %v248 = vunpack.c.l.b16 %v164
      %v249 = vunpack.c.l.b16 %v165
      %v250 = vunpack.c.l.b16 %v166
      %v251 = vunpack.c.l.b16 %v167
      %v252 = vunpack.c.l.b16 %v168
      %v253 = vunpack.c.l.b16 %v169
      %v254 = vunpack.c.l.b16 %v170
      %v255 = vunpack.c.l.b16 %v171
      %v256 = vunpack.c.l.b16 %v172
      %v257 = vunpack.c.l.b16 %v173
      %v258 = vunpack.c.l.b16 %v174
      %v259 = vunpack.c.l.b16 %v175
      %v260 = vunpack.c.l.b16 %v176
      %v261 = vunpack.c.l.b16 %v177
      %v262 = vunpack.c.l.b16 %v178
      %v263 = vunpack.c.l.b16 %v179
      %v264 = vpack.c.b16 %v233, %v232
      %v265 = vpack.c.b16 %v235, %v234
      %v266 = vpack.c.b16 %v237, %v236
      %v267 = vpack.c.b16 %v239, %v238
      %v268 = vpack.c.b16 %v241, %v240
      %v269 = vpack.c.b16 %v243, %v242
      %v270 = vpack.c.b16 %v245, %v244
      %v271 = vpack.c.b16 %v247, %v246
      %v272 = vpack.c.b16 %v249, %v248
      %v273 = vpack.c.b16 %v251, %v250
      %v274 = vpack.c.b16 %v253, %v252
      %v275 = vpack.c.b16 %v255, %v254
      %v276 = vpack.c.b16 %v257, %v256
      %v277 = vpack.c.b16 %v259, %v258
      %v278 = vpack.c.b16 %v261, %v260
      %v279 = vpack.c.b16 %v263, %v262
      %296 = vmatpush.bf16.msra.mxu0 %v271
      %297 = vmatpush.bf16.msra.mxu0 %v270
      %298 = vmatpush.bf16.msra.mxu0 %v269
      %299 = vmatpush.bf16.msra.mxu0 %v268
      %300 = vmatpush.bf16.msra.mxu0 %v267
      %301 = vmatpush.bf16.msra.mxu0 %v266
      %302 = vmatpush.bf16.msra.mxu0 %v265
      %303 = vmatpush.bf16.msra.mxu0 %v264
      %304 = vmatmul.bf16.gmra.mxu0 %v192
      %v305 = vpop.f32.mrf.mxu0
      %v306 = vadd.f32 0.0, %v305
      %v307 = vpop.f32.mrf.mxu0
      %v308 = vadd.f32 0.0, %v307
      %309 = vmatmul.bf16.gmra.mxu0 %v194
      %v310 = vpop.f32.mrf.mxu0
      %v311 = vadd.f32 0.0, %v310
      %v312 = vpop.f32.mrf.mxu0
      %v313 = vadd.f32 0.0, %v312
      %314 = vdwg.mxu0
      %315 = vmatpush.bf16.msra.mxu0 %v279
      %316 = vmatpush.bf16.msra.mxu0 %v278
      %317 = vmatpush.bf16.msra.mxu0 %v277
      %318 = vmatpush.bf16.msra.mxu0 %v276
      %319 = vmatpush.bf16.msra.mxu0 %v275
      %320 = vmatpush.bf16.msra.mxu0 %v274
      %321 = vmatpush.bf16.msra.mxu0 %v273
      %322 = vmatpush.bf16.msra.mxu0 %v272
      %323 = vmatmul.bf16.gmra.mxu0 %v193
      %v324 = vpop.f32.mrf.mxu0
      %v325 = vadd.f32 %v306, %v324
      %v326 = vpop.f32.mrf.mxu0
      %v327 = vadd.f32 %v308, %v326
      %328 = vmatmul.bf16.gmra.mxu0 %v195
      %v329 = vpop.f32.mrf.mxu0
      %v330 = vadd.f32 %v311, %v329
      %v331 = vpop.f32.mrf.mxu0
      %v332 = vadd.f32 %v313, %v331
      %333 = vdwg.mxu0
      %vm334 = vcmask 523264
      %v335 = vsel %vm334, %v325, 0.0
      %336 = vadd.xlane.f32.xlu0 %v335
      %v337 = vpop.xlane.xlu0 %336
      %v338 = vsel %vm334, %v327, 0.0
      %339 = vadd.xlane.f32.xlu0 %v338
      %v340 = vpop.xlane.xlu0 %339
      %v341 = vsel %vm334, %v330, 0.0
      %342 = vadd.xlane.f32.xlu0 %v341
      %v343 = vpop.xlane.xlu0 %342
      %v344 = vsel %vm334, %v332, 0.0
      %345 = vadd.xlane.f32.xlu0 %v344
      %v346 = vpop.xlane.xlu0 %345
      %v347 = vrcp.pop 64.0
      %v348 = vmul.f32 64.0, %v347
      %v349 = vsub.f32 1.0, %v348
      %v350 = vmul.f32 %v347, %v349
      %v351 = vadd.f32 %v347, %v350
      %vm352 = vweird.f32 %v347
      %v353 = vsel %vm352, %v347, %v351
      %v354 = vmul.f32 %v337, %v353
      %v355 = vmul.f32 %v340, %v353
      %v356 = vmul.f32 %v343, %v353
      %v357 = vmul.f32 %v346, %v353
      %v358 = vsub.f32 %v325, %v354
      %v359 = vsub.f32 %v327, %v355
      %v360 = vsub.f32 %v330, %v356
      %v361 = vsub.f32 %v332, %v357
      %v362 = vmul.f32 %v358, %v358
      %v363 = vmul.f32 %v359, %v359
      %v364 = vmul.f32 %v360, %v360
      %v365 = vmul.f32 %v361, %v361
      %v366 = vsel %vm334, %v362, 0.0
      %367 = vadd.xlane.f32.xlu0 %v366
      %v368 = vpop.xlane.xlu0 %367
      %v369 = vsel %vm334, %v363, 0.0
      %370 = vadd.xlane.f32.xlu0 %v369
      %v371 = vpop.xlane.xlu0 %370
      %v372 = vsel %vm334, %v364, 0.0
      %373 = vadd.xlane.f32.xlu0 %v372
      %v374 = vpop.xlane.xlu0 %373
      %v375 = vsel %vm334, %v365, 0.0
      %376 = vadd.xlane.f32.xlu0 %v375
      %v377 = vpop.xlane.xlu0 %376
      %v378 = vmul.f32 %v368, %v353
      %v379 = vmul.f32 %v371, %v353
      %v380 = vmul.f32 %v374, %v353
      %v381 = vmul.f32 %v377, %v353
      %v382 = vadd.f32 %v378, 1e-05
      %v383 = vadd.f32 %v379, 1e-05
      %v384 = vadd.f32 %v380, 1e-05
      %v385 = vadd.f32 %v381, 1e-05
      %v386 = vrsqrt.pop %v382
      %v387 = vmul.f32 %v386, %v382
      %v388 = vmul.f32 %v387, %v386
      %v389 = vmul.f32 0.5, %v388
      %v390 = vsub.f32 1.5, %v389
      %v391 = vmul.f32 %v386, %v390
      %vm392 = vweird.f32 %v382
      %vm393 = vweird.f32 %v386
      %vm394 = vmor %vm392, %vm393
      %v395 = vsel %vm394, %v386, %v391
      %v396 = vrsqrt.pop %v383
      %v397 = vmul.f32 %v396, %v383
      %v398 = vmul.f32 %v397, %v396
      %v399 = vmul.f32 0.5, %v398
      %v400 = vsub.f32 1.5, %v399
      %v401 = vmul.f32 %v396, %v400
      %vm402 = vweird.f32 %v383
      %vm403 = vweird.f32 %v396
      %vm404 = vmor %vm402, %vm403
      %v405 = vsel %vm404, %v396, %v401
      %v406 = vrsqrt.pop %v384
      %v407 = vmul.f32 %v406, %v384
      %v408 = vmul.f32 %v407, %v406
      %v409 = vmul.f32 0.5, %v408
      %v410 = vsub.f32 1.5, %v409
      %v411 = vmul.f32 %v406, %v410
      %vm412 = vweird.f32 %v384
      %vm413 = vweird.f32 %v406
      %vm414 = vmor %vm412, %vm413
      %v415 = vsel %vm414, %v406, %v411
      %v416 = vrsqrt.pop %v385
      %v417 = vmul.f32 %v416, %v385
      %v418 = vmul.f32 %v417, %v416
      %v419 = vmul.f32 0.5, %v418
      %v420 = vsub.f32 1.5, %v419
      %v421 = vmul.f32 %v416, %v420
      %vm422 = vweird.f32 %v385
      %vm423 = vweird.f32 %v416
      %vm424 = vmor %vm422, %vm423
      %v425 = vsel %vm424, %v416, %v421
      %v426 = vmul.f32 %v358, %v395
      %v427 = vmul.f32 %v359, %v405
      %v428 = vmul.f32 %v360, %v415
      %v429 = vmul.f32 %v361, %v425
      %vm430 = vcmp.ge.f32.partialorder %v426, 0.0
      %vm431 = vcmp.ge.f32.partialorder %v427, 0.0
      %vm432 = vcmp.ge.f32.partialorder %v428, 0.0
      %vm433 = vcmp.ge.f32.partialorder %v429, 0.0
      %v434 = vmul.f32 %v426, 0.01
      %v435 = vmul.f32 %v427, 0.01
      %v436 = vmul.f32 %v428, 0.01
      %v437 = vmul.f32 %v429, 0.01
      %v438 = vsel %vm430, %v426, %v434
      %v439 = vsel %vm431, %v427, %v435
      %v440 = vsel %vm432, %v428, %v436
      %v441 = vsel %vm433, %v429, %v437
      %442 = vst.msk [vmem:[%s143] sm:$0xff] %vm334, %v438
      %443 = vst.msk [vmem:[%s143 + $0x8] sm:$0xff] %vm334, %v439
      %444 = vst.msk [vmem:[%s143 + $0x10] sm:$0xff] %vm334, %v440
      %445 = vst.msk [vmem:[%s143 + $0x18] sm:$0xff] %vm334, %v441
      %p446 = scmp.lt.s32.totalorder %s13, 1
      %s447 = scalar_select %p446, %s13, 1
      %s448 = smul.addr %s447, 4
      %s449 = smul.addr %s448, 8
      %s450 = scalar_lea.vmem %s2, %s449
      // Predicated region
      $region29: #{discriminator_forward.8} parent=27 // pred_check
        %p451 = pneg %p78
      $region30: #{discriminator_forward.8} parent=27 // pred_check_branch
        %453 = sbr.rel (%p451) target = $region32
      $region31: #{discriminator_forward.8} parent=27 // pred_region
        _
      $region32: #{discriminator_forward.8} parent=27 // pred_fallthru
        _
    $region28: #{discriminator_forward.8} parent=5 // pred_fallthru
      _
    %p454 = scmp.le.s32.totalorder 2, %s8
    // Predicated region
    $region33: #{discriminator_forward.8} parent=5 // pred_check
      %p455 = pneg %p454
    $region34: #{discriminator_forward.8} parent=5 // pred_check_branch
      %457 = sbr.rel (%p455) target = $region36
    $region35: #{discriminator_forward.8} parent=5 // pred_region
      %s458 = ssub.s32 %s8, 2
      // Predicated region
      $region37: #{discriminator_forward.8} parent=35 // pred_check
        %p459 = pneg %p84
      $region38: #{discriminator_forward.8} parent=35 // pred_check_branch
        %461 = sbr.rel (%p459) target = $region40
      $region39: #{discriminator_forward.8} parent=35 // pred_region
        %p462 = scmp.lt.s32.totalorder %s14, 1
        %s463 = scalar_select %p462, %s14, 1
        %s464 = smul.addr %s463, 4
        %s465 = smul.addr %s464, 8
        %s466 = scalar_lea.vmem %s2, %s465
      $region40: #{discriminator_forward.8} parent=35 // pred_fallthru
        _
    $region36: #{discriminator_forward.8} parent=5 // pred_fallthru
      _
  $region6: #{discriminator_forward.8} parent=0 // loop_footer
    %s12 = sadd.s32 1, %s8
  $region7: #{discriminator_forward.8} parent=0 // loop_footer_branch
    %7 = sbr.rel target = $region3
  $region8: #{discriminator_forward.8} parent=0 // loop_exit
    _

// kernel: discriminator_forward.9
$region0: #{discriminator_forward.9}
  #allocation0 [shape = 'u32[]', space=smem, size = 0x4, offset = 0x4, fixed_abs, tag = 'smem constant byte address 0x4 - core index']
  #allocation1 [shape = 'u32[72,128]{1,0:T(1,128)}', space=vmem, size = 0x9000, scoped, tag = 'internal scratch']
  %s0 = inlined_call_operand.vmem [shape: bf16[64,512], index: 0, kind: input, shape index: {}]
  %s1 = inlined_call_operand.vmem [shape: bf16[2,512,16], index: 1, kind: input, shape index: {}]
  %s2 = inlined_call_operand.vmem [shape: f32[2,64,16], index: 2, kind: output, shape index: {}]
  %s3 = sld [smem:[#allocation0]]
  $region41: #{discriminator_forward.9} parent=0
    _
  %s5 = ssub.s32 1, %s3
  %s6 = scalar_select 0, %s5, %s3
  loop: start=0, step=1, limit=4
  $region2: #{discriminator_forward.9} parent=0 // loop_pre_header
    _
  $region3: #{discriminator_forward.9} parent=0 // loop_header
    %s8 = sphi 0, %s12
    %p9 = scmp.ge.s32.totalorder %s8, 4
    %s16 = sphi 0, %s16
    %s18 = sphi 0, %s16
    %s19 = sphi 0, %s18
    %s33 = sphi 0, %s19
    %s39 = sphi 0, %s41
    %s42 = sphi 0, %s39
    %s43 = sphi 0, %s42
    %s59 = sphi 0, %s43
    %s65 = sphi 0, %s67
    %s68 = sphi 0, %s65
    %s69 = sphi 0, %s68
    %s85 = sphi 0, %s69
  $region4: #{discriminator_forward.9} parent=0 // loop_header_branch
    %11 = sbr.rel (%p9) target = $region8
  $region5: #{discriminator_forward.9} parent=0 // loop_body
    %s13 = ssub.s32 %s8, 1
    %s14 = ssub.s32 %s8, 2
    %s15 = sadd.s32 %s8, 1
    %s17 = sadd.s32 %s16, 1
    %p20 = scmp.eq.s32.totalorder %s8, 1
    %p21 = scmp.ne.s32.totalorder %s16, %s18
    %p22 = scmp.eq.s32.totalorder %s8, 0
    %p23 = por %p21, %p22
    %p24 = scmp.ne.s32.totalorder %s16, %s18
    %p25 = scmp.eq.s32.totalorder %s13, 1
    %p26 = por %p24, %p25
    %p27 = scmp.ne.s32.totalorder %s18, %s19
    %p28 = scmp.eq.s32.totalorder %s13, 0
    %p29 = por %p27, %p28
    %p30 = scmp.ne.s32.totalorder %s18, %s19
    %p31 = scmp.eq.s32.totalorder %s14, 1
    %p32 = por %p30, %p31
    %p34 = scmp.ne.s32.totalorder %s19, %s33
    %p35 = scmp.eq.s32.totalorder %s14, 0
    %p36 = por %p34, %p35
    %s37 = ssub.s32 %s8, %s15
    %p38 = scmp.eq.s32.totalorder %s37, 0
    %s40 = sadd.s32 %s39, 1
    %s41 = scalar_select %p38, %s39, %s40
    %p44 = pneg %p38
    %p45 = scmp.eq.s32.totalorder %s8, 1
    %p46 = por %p44, %p45
    %p47 = scmp.ne.s32.totalorder %s39, %s42
    %p48 = scmp.eq.s32.totalorder %s8, 0
    %p49 = por %p47, %p48
    %p50 = scmp.ne.s32.totalorder %s39, %s42
    %p51 = scmp.eq.s32.totalorder %s13, 1
    %p52 = por %p50, %p51
    %p53 = scmp.ne.s32.totalorder %s42, %s43
    %p54 = scmp.eq.s32.totalorder %s13, 0
    %p55 = por %p53, %p54
    %p56 = scmp.ne.s32.totalorder %s42, %s43
    %p57 = scmp.eq.s32.totalorder %s14, 1
    %p58 = por %p56, %p57
    %p60 = scmp.ne.s32.totalorder %s43, %s59
    %p61 = scmp.eq.s32.totalorder %s14, 0
    %p62 = por %p60, %p61
    %s63 = ssub.s32 %s8, %s15
    %p64 = scmp.eq.s32.totalorder %s63, 0
    %s66 = sadd.s32 %s65, 1
    %s67 = scalar_select %p64, %s65, %s66
    %p70 = pneg %p64
    %p71 = scmp.eq.s32.totalorder %s8, 1
    %p72 = por %p70, %p71
    %p73 = scmp.ne.s32.totalorder %s65, %s68
    %p74 = scmp.eq.s32.totalorder %s8, 0
    %p75 = por %p73, %p74
    %p76 = scmp.ne.s32.totalorder %s65, %s68
    %p77 = scmp.eq.s32.totalorder %s13, 1
    %p78 = por %p76, %p77
    %p79 = scmp.ne.s32.totalorder %s68, %s69
    %p80 = scmp.eq.s32.totalorder %s13, 0
    %p81 = por %p79, %p80
    %p82 = scmp.ne.s32.totalorder %s68, %s69
    %p83 = scmp.eq.s32.totalorder %s14, 1
    %p84 = por %p82, %p83
    %p86 = scmp.ne.s32.totalorder %s69, %s85
    %p87 = scmp.eq.s32.totalorder %s14, 0
    %p88 = por %p86, %p87
    %p89 = scmp.le.s32.totalorder 1, %s8
    %p90 = scmp.lt.s32.totalorder %s8, 3
    %p91 = pnand %p89, %p90
    %p92 = pneg %p91
    // Predicated region
    $region9: #{discriminator_forward.9} parent=5 // pred_check
      _
    $region10: #{discriminator_forward.9} parent=5 // pred_check_branch
      %94 = sbr.rel (%p91) target = $region12
    $region11: #{discriminator_forward.9} parent=5 // pred_region
      %s95 = ssub.s32 %s8, 1
      // Predicated region
      $region13: #{discriminator_forward.9} parent=11 // pred_check
        %p96 = pneg %p29
      $region14: #{discriminator_forward.9} parent=11 // pred_check_branch
        %98 = sbr.rel (%p96) target = $region16
      $region15: #{discriminator_forward.9} parent=11 // pred_region
        _
      $region16: #{discriminator_forward.9} parent=11 // pred_fallthru
        _
    $region12: #{discriminator_forward.9} parent=5 // pred_fallthru
      _
    %p99 = scmp.lt.s32.totalorder %s8, 2
    // Predicated region
    $region17: #{discriminator_forward.9} parent=5 // pred_check
      %p100 = pneg %p99
    $region18: #{discriminator_forward.9} parent=5 // pred_check_branch
      %102 = sbr.rel (%p100) target = $region20
    $region19: #{discriminator_forward.9} parent=5 // pred_region
      // Predicated region
      $region21: #{discriminator_forward.9} parent=19 // pred_check
        %p103 = pneg %p49
      $region22: #{discriminator_forward.9} parent=19 // pred_check_branch
        %105 = sbr.rel (%p103) target = $region24
      $region23: #{discriminator_forward.9} parent=19 // pred_region
        %p106 = scmp.lt.s32.totalorder %s8, 1
        %s107 = scalar_select %p106, %s8, 1
        %s108 = smul.addr %s107, 64
        %s109 = smul.addr %s108, 4
        %s110 = scalar_lea.vmem %s1, %s109
      $region24: #{discriminator_forward.9} parent=19 // pred_fallthru
        _
    $region20: #{discriminator_forward.9} parent=5 // pred_fallthru
      _
    %p111 = scmp.le.s32.totalorder 1, %s8
    %p112 = scmp.lt.s32.totalorder %s8, 3
    %p113 = pnand %p111, %p112
    %p114 = pneg %p113
    // Predicated region
    $region25: #{discriminator_forward.9} parent=5 // pred_check
      _
    $region26: #{discriminator_forward.9} parent=5 // pred_check_branch
      %116 = sbr.rel (%p113) target = $region28
    $region27: #{discriminator_forward.9} parent=5 // pred_region
      %s117 = ssub.s32 %s8, 1
      %p118 = pneg %p29
      %p119 = pneg %p26
      %p120 = scmp.lt.s32.totalorder %s13, 1
      %s121 = scalar_select %p120, %s13, 1
      %s122 = smul.addr %s121, 64
      %s123 = smul.addr %s122, 4
      %s124 = scalar_lea.vmem %s1, %s123
      %p125 = pneg %p55
      %p126 = pneg %p52
      %p127 = pneg %p81
      %p128 = pneg %p78
      %p129 = scmp.lt.s32.totalorder %s13, 1
      %s130 = scalar_select %p129, %s13, 1
      %s131 = smul.addr %s130, 8
      %s132 = smul.addr %s131, 8
      %s133 = scalar_lea.vmem %s2, %s132
      %p134 = scmp.lt.s32.totalorder %s13, 1
      %s135 = scalar_select %p134, %s13, 1
      %s136 = smul.addr %s135, 64
      %s137 = smul.addr %s136, 4
      %s138 = scalar_lea.vmem %s1, %s137
      %p139 = scmp.lt.s32.totalorder %s13, 1
      %s140 = scalar_select %p139, %s13, 1
      %s141 = smul.addr %s140, 8
      %s142 = smul.addr %s141, 8
      %s143 = scalar_lea.vmem %s2, %s142
      %v144 = vld [vmem:[%s0] sm:$0xff]
      %v145 = vld [vmem:[%s0 + $0x8] sm:$0xff]
      %v146 = vld [vmem:[%s0 + $0x10] sm:$0xff]
      %v147 = vld [vmem:[%s0 + $0x18] sm:$0xff]
      %v148 = vld [vmem:[%s0 + $0x20] sm:$0xff]
      %v149 = vld [vmem:[%s0 + $0x28] sm:$0xff]
      %v150 = vld [vmem:[%s0 + $0x30] sm:$0xff]
      %v151 = vld [vmem:[%s0 + $0x38] sm:$0xff]
      %v152 = vld [vmem:[%s0 + $0x40] sm:$0xff]
      %v153 = vld [vmem:[%s0 + $0x48] sm:$0xff]
      %v154 = vld [vmem:[%s0 + $0x50] sm:$0xff]
      %v155 = vld [vmem:[%s0 + $0x58] sm:$0xff]
      %v156 = vld [vmem:[%s0 + $0x60] sm:$0xff]
      %v157 = vld [vmem:[%s0 + $0x68] sm:$0xff]
      %v158 = vld [vmem:[%s0 + $0x70] sm:$0xff]
      %v159 = vld [vmem:[%s0 + $0x78] sm:$0xff]
      %v160 = vld [vmem:[%s138] sm:$0xf]
      %v161 = vld [vmem:[%s138 + $0x4] sm:$0xf]
      %v162 = vld [vmem:[%s138 + $0x8] sm:$0xf]
      %v163 = vld [vmem:[%s138 + $0xc] sm:$0xf]
      %v164 = vld [vmem:[%s138 + $0x10] sm:$0xf]
      %v165 = vld [vmem:[%s138 + $0x14] sm:$0xf]
      %v166 = vld [vmem:[%s138 + $0x18] sm:$0xf]
      %v167 = vld [vmem:[%s138 + $0x1c] sm:$0xf]
      %v168 = vld [vmem:[%s138 + $0x20] sm:$0xf]
      %v169 = vld [vmem:[%s138 + $0x24] sm:$0xf]
      %v170 = vld [vmem:[%s138 + $0x28] sm:$0xf]
      %v171 = vld [vmem:[%s138 + $0x2c] sm:$0xf]
      %v172 = vld [vmem:[%s138 + $0x30] sm:$0xf]
      %v173 = vld [vmem:[%s138 + $0x34] sm:$0xf]
      %v174 = vld [vmem:[%s138 + $0x38] sm:$0xf]
      %v175 = vld [vmem:[%s138 + $0x3c] sm:$0xf]
      %v176 = vld [vmem:[%s138 + $0x40] sm:$0xf]
      %v177 = vld [vmem:[%s138 + $0x44] sm:$0xf]
      %v178 = vld [vmem:[%s138 + $0x48] sm:$0xf]
      %v179 = vld [vmem:[%s138 + $0x4c] sm:$0xf]
      %v180 = vld [vmem:[%s138 + $0x50] sm:$0xf]
      %v181 = vld [vmem:[%s138 + $0x54] sm:$0xf]
      %v182 = vld [vmem:[%s138 + $0x58] sm:$0xf]
      %v183 = vld [vmem:[%s138 + $0x5c] sm:$0xf]
      %v184 = vld [vmem:[%s138 + $0x60] sm:$0xf]
      %v185 = vld [vmem:[%s138 + $0x64] sm:$0xf]
      %v186 = vld [vmem:[%s138 + $0x68] sm:$0xf]
      %v187 = vld [vmem:[%s138 + $0x6c] sm:$0xf]
      %v188 = vld [vmem:[%s138 + $0x70] sm:$0xf]
      %v189 = vld [vmem:[%s138 + $0x74] sm:$0xf]
      %v190 = vld [vmem:[%s138 + $0x78] sm:$0xf]
      %v191 = vld [vmem:[%s138 + $0x7c] sm:$0xf]
      %v192 = vld [vmem:[%s138 + $0x80] sm:$0xf]
      %v193 = vld [vmem:[%s138 + $0x84] sm:$0xf]
      %v194 = vld [vmem:[%s138 + $0x88] sm:$0xf]
      %v195 = vld [vmem:[%s138 + $0x8c] sm:$0xf]
      %v196 = vld [vmem:[%s138 + $0x90] sm:$0xf]
      %v197 = vld [vmem:[%s138 + $0x94] sm:$0xf]
      %v198 = vld [vmem:[%s138 + $0x98] sm:$0xf]
      %v199 = vld [vmem:[%s138 + $0x9c] sm:$0xf]
      %v200 = vld [vmem:[%s138 + $0xa0] sm:$0xf]
      %v201 = vld [vmem:[%s138 + $0xa4] sm:$0xf]
      %v202 = vld [vmem:[%s138 + $0xa8] sm:$0xf]
      %v203 = vld [vmem:[%s138 + $0xac] sm:$0xf]
      %v204 = vld [vmem:[%s138 + $0xb0] sm:$0xf]
      %v205 = vld [vmem:[%s138 + $0xb4] sm:$0xf]
      %v206 = vld [vmem:[%s138 + $0xb8] sm:$0xf]
      %v207 = vld [vmem:[%s138 + $0xbc] sm:$0xf]
      %v208 = vld [vmem:[%s138 + $0xc0] sm:$0xf]
      %v209 = vld [vmem:[%s138 + $0xc4] sm:$0xf]
      %v210 = vld [vmem:[%s138 + $0xc8] sm:$0xf]
      %v211 = vld [vmem:[%s138 + $0xcc] sm:$0xf]
      %v212 = vld [vmem:[%s138 + $0xd0] sm:$0xf]
      %v213 = vld [vmem:[%s138 + $0xd4] sm:$0xf]
      %v214 = vld [vmem:[%s138 + $0xd8] sm:$0xf]
      %v215 = vld [vmem:[%s138 + $0xdc] sm:$0xf]
      %v216 = vld [vmem:[%s138 + $0xe0] sm:$0xf]
      %v217 = vld [vmem:[%s138 + $0xe4] sm:$0xf]
      %v218 = vld [vmem:[%s138 + $0xe8] sm:$0xf]
      %v219 = vld [vmem:[%s138 + $0xec] sm:$0xf]
      %v220 = vld [vmem:[%s138 + $0xf0] sm:$0xf]
      %v221 = vld [vmem:[%s138 + $0xf4] sm:$0xf]
      %v222 = vld [vmem:[%s138 + $0xf8] sm:$0xf]
      %v223 = vld [vmem:[%s138 + $0xfc] sm:$0xf]
      %v240 = vunpack.c.l.b16 %v144
      %v241 = vunpack.c.h.b16 %v144
      %v242 = vunpack.c.l.b16 %v145
      %v243 = vunpack.c.h.b16 %v145
      %v244 = vunpack.c.l.b16 %v146
      %v245 = vunpack.c.h.b16 %v146
      %v246 = vunpack.c.l.b16 %v147
      %v247 = vunpack.c.h.b16 %v147
      %v248 = vunpack.c.l.b16 %v148
      %v249 = vunpack.c.h.b16 %v148
      %v250 = vunpack.c.l.b16 %v149
      %v251 = vunpack.c.h.b16 %v149
      %v252 = vunpack.c.l.b16 %v150
      %v253 = vunpack.c.h.b16 %v150
      %v254 = vunpack.c.l.b16 %v151
      %v255 = vunpack.c.h.b16 %v151
      %v256 = vunpack.c.l.b16 %v152
      %v257 = vunpack.c.h.b16 %v152
      %v258 = vunpack.c.l.b16 %v153
      %v259 = vunpack.c.h.b16 %v153
      %v260 = vunpack.c.l.b16 %v154
      %v261 = vunpack.c.h.b16 %v154
      %v262 = vunpack.c.l.b16 %v155
      %v263 = vunpack.c.h.b16 %v155
      %v264 = vunpack.c.l.b16 %v156
      %v265 = vunpack.c.h.b16 %v156
      %v266 = vunpack.c.l.b16 %v157
      %v267 = vunpack.c.h.b16 %v157
      %v268 = vunpack.c.l.b16 %v158
      %v269 = vunpack.c.h.b16 %v158
      %v270 = vunpack.c.l.b16 %v159
      %v271 = vunpack.c.h.b16 %v159
      %v272 = vpack.c.b16 %v244, %v240
      %v273 = vpack.c.b16 %v245, %v241
      %v274 = vpack.c.b16 %v246, %v242
      %v275 = vpack.c.b16 %v247, %v243
      %v276 = vpack.c.b16 %v252, %v248
      %v277 = vpack.c.b16 %v253, %v249
      %v278 = vpack.c.b16 %v254, %v250
      %v279 = vpack.c.b16 %v255, %v251
      %v280 = vpack.c.b16 %v260, %v256
      %v281 = vpack.c.b16 %v261, %v257
      %v282 = vpack.c.b16 %v262, %v258
      %v283 = vpack.c.b16 %v263, %v259
      %v284 = vpack.c.b16 %v268, %v264
      %v285 = vpack.c.b16 %v269, %v265
      %v286 = vpack.c.b16 %v270, %v266
      %v287 = vpack.c.b16 %v271, %v267
      %v368 = vunpack.c.l.b16 %v160
      %v369 = vunpack.c.l.b16 %v161
      %v370 = vunpack.c.l.b16 %v162
      %v371 = vunpack.c.l.b16 %v163
      %v372 = vunpack.c.l.b16 %v164
      %v373 = vunpack.c.l.b16 %v165
      %v374 = vunpack.c.l.b16 %v166
      %v375 = vunpack.c.l.b16 %v167
      %v376 = vunpack.c.l.b16 %v168
      %v377 = vunpack.c.l.b16 %v169
      %v378 = vunpack.c.l.b16 %v170
      %v379 = vunpack.c.l.b16 %v171
      %v380 = vunpack.c.l.b16 %v172
      %v381 = vunpack.c.l.b16 %v173
      %v382 = vunpack.c.l.b16 %v174
      %v383 = vunpack.c.l.b16 %v175
      %v384 = vunpack.c.l.b16 %v176
      %v385 = vunpack.c.l.b16 %v177
      %v386 = vunpack.c.l.b16 %v178
      %v387 = vunpack.c.l.b16 %v179
      %v388 = vunpack.c.l.b16 %v180
      %v389 = vunpack.c.l.b16 %v181
      %v390 = vunpack.c.l.b16 %v182
      %v391 = vunpack.c.l.b16 %v183
      %v392 = vunpack.c.l.b16 %v184
      %v393 = vunpack.c.l.b16 %v185
      %v394 = vunpack.c.l.b16 %v186
      %v395 = vunpack.c.l.b16 %v187
      %v396 = vunpack.c.l.b16 %v188
      %v397 = vunpack.c.l.b16 %v189
      %v398 = vunpack.c.l.b16 %v190
      %v399 = vunpack.c.l.b16 %v191
      %v400 = vunpack.c.l.b16 %v192
      %v401 = vunpack.c.l.b16 %v193
      %v402 = vunpack.c.l.b16 %v194
      %v403 = vunpack.c.l.b16 %v195
      %v404 = vunpack.c.l.b16 %v196
      %v405 = vunpack.c.l.b16 %v197
      %v406 = vunpack.c.l.b16 %v198
      %v407 = vunpack.c.l.b16 %v199
      %v408 = vunpack.c.l.b16 %v200
      %v409 = vunpack.c.l.b16 %v201
      %v410 = vunpack.c.l.b16 %v202
      %v411 = vunpack.c.l.b16 %v203
      %v412 = vunpack.c.l.b16 %v204
      %v413 = vunpack.c.l.b16 %v205
      %v414 = vunpack.c.l.b16 %v206
      %v415 = vunpack.c.l.b16 %v207
      %v416 = vunpack.c.l.b16 %v208
      %v417 = vunpack.c.l.b16 %v209
      %v418 = vunpack.c.l.b16 %v210
      %v419 = vunpack.c.l.b16 %v211
      %v420 = vunpack.c.l.b16 %v212
      %v421 = vunpack.c.l.b16 %v213
      %v422 = vunpack.c.l.b16 %v214
      %v423 = vunpack.c.l.b16 %v215
      %v424 = vunpack.c.l.b16 %v216
      %v425 = vunpack.c.l.b16 %v217
      %v426 = vunpack.c.l.b16 %v218
      %v427 = vunpack.c.l.b16 %v219
      %v428 = vunpack.c.l.b16 %v220
      %v429 = vunpack.c.l.b16 %v221
      %v430 = vunpack.c.l.b16 %v222
      %v431 = vunpack.c.l.b16 %v223
      %v432 = vpack.c.b16 %v369, %v368
      %v433 = vpack.c.b16 %v371, %v370
      %v434 = vpack.c.b16 %v373, %v372
      %v435 = vpack.c.b16 %v375, %v374
      %v436 = vpack.c.b16 %v377, %v376
      %v437 = vpack.c.b16 %v379, %v378
      %v438 = vpack.c.b16 %v381, %v380
      %v439 = vpack.c.b16 %v383, %v382
      %v440 = vpack.c.b16 %v385, %v384
      %v441 = vpack.c.b16 %v387, %v386
      %v442 = vpack.c.b16 %v389, %v388
      %v443 = vpack.c.b16 %v391, %v390
      %v444 = vpack.c.b16 %v393, %v392
      %v445 = vpack.c.b16 %v395, %v394
      %v446 = vpack.c.b16 %v397, %v396
      %v447 = vpack.c.b16 %v399, %v398
      %v448 = vpack.c.b16 %v401, %v400
      %v449 = vpack.c.b16 %v403, %v402
      %v450 = vpack.c.b16 %v405, %v404
      %v451 = vpack.c.b16 %v407, %v406
      %v452 = vpack.c.b16 %v409, %v408
      %v453 = vpack.c.b16 %v411, %v410
      %v454 = vpack.c.b16 %v413, %v412
      %v455 = vpack.c.b16 %v415, %v414
      %v456 = vpack.c.b16 %v417, %v416
      %v457 = vpack.c.b16 %v419, %v418
      %v458 = vpack.c.b16 %v421, %v420
      %v459 = vpack.c.b16 %v423, %v422
      %v460 = vpack.c.b16 %v425, %v424
      %v461 = vpack.c.b16 %v427, %v426
      %v462 = vpack.c.b16 %v429, %v428
      %v463 = vpack.c.b16 %v431, %v430
      %496 = vmatpush.bf16.msra.mxu0 %v439
      %497 = vmatpush.bf16.msra.mxu0 %v438
      %498 = vmatpush.bf16.msra.mxu0 %v437
      %499 = vmatpush.bf16.msra.mxu0 %v436
      %500 = vmatpush.bf16.msra.mxu0 %v435
      %501 = vmatpush.bf16.msra.mxu0 %v434
      %502 = vmatpush.bf16.msra.mxu0 %v433
      %503 = vmatpush.bf16.msra.mxu0 %v432
      %504 = vmatmul.bf16.gmra.mxu0 %v272
      %v505 = vpop.f32.mrf.mxu0
      %v506 = vadd.f32 0.0, %v505
      %v507 = vpop.f32.mrf.mxu0
      %v508 = vadd.f32 0.0, %v507
      %509 = vmatmul.bf16.gmra.mxu0 %v276
      %v510 = vpop.f32.mrf.mxu0
      %v511 = vadd.f32 0.0, %v510
      %v512 = vpop.f32.mrf.mxu0
      %v513 = vadd.f32 0.0, %v512
      %514 = vmatmul.bf16.gmra.mxu0 %v280
      %v515 = vpop.f32.mrf.mxu0
      %v516 = vadd.f32 0.0, %v515
      %v517 = vpop.f32.mrf.mxu0
      %v518 = vadd.f32 0.0, %v517
      %519 = vmatmul.bf16.gmra.mxu0 %v284
      %v520 = vpop.f32.mrf.mxu0
      %v521 = vadd.f32 0.0, %v520
      %v522 = vpop.f32.mrf.mxu0
      %v523 = vadd.f32 0.0, %v522
      %524 = vdwg.mxu0
      %525 = vmatpush.bf16.msra.mxu0 %v447
      %526 = vmatpush.bf16.msra.mxu0 %v446
      %527 = vmatpush.bf16.msra.mxu0 %v445
      %528 = vmatpush.bf16.msra.mxu0 %v444
      %529 = vmatpush.bf16.msra.mxu0 %v443
      %530 = vmatpush.bf16.msra.mxu0 %v442
      %531 = vmatpush.bf16.msra.mxu0 %v441
      %532 = vmatpush.bf16.msra.mxu0 %v440
      %533 = vmatmul.bf16.gmra.mxu0 %v273
      %v534 = vpop.f32.mrf.mxu0
      %v535 = vadd.f32 %v506, %v534
      %v536 = vpop.f32.mrf.mxu0
      %v537 = vadd.f32 %v508, %v536
      %538 = vmatmul.bf16.gmra.mxu0 %v277
      %v539 = vpop.f32.mrf.mxu0
      %v540 = vadd.f32 %v511, %v539
      %v541 = vpop.f32.mrf.mxu0
      %v542 = vadd.f32 %v513, %v541
      %543 = vmatmul.bf16.gmra.mxu0 %v281
      %v544 = vpop.f32.mrf.mxu0
      %v545 = vadd.f32 %v516, %v544
      %v546 = vpop.f32.mrf.mxu0
      %v547 = vadd.f32 %v518, %v546
      %548 = vmatmul.bf16.gmra.mxu0 %v285
      %v549 = vpop.f32.mrf.mxu0
      %v550 = vadd.f32 %v521, %v549
      %v551 = vpop.f32.mrf.mxu0
      %v552 = vadd.f32 %v523, %v551
      %553 = vdwg.mxu0
      %554 = vmatpush.bf16.msra.mxu0 %v455
      %555 = vmatpush.bf16.msra.mxu0 %v454
      %556 = vmatpush.bf16.msra.mxu0 %v453
      %557 = vmatpush.bf16.msra.mxu0 %v452
      %558 = vmatpush.bf16.msra.mxu0 %v451
      %559 = vmatpush.bf16.msra.mxu0 %v450
      %560 = vmatpush.bf16.msra.mxu0 %v449
      %561 = vmatpush.bf16.msra.mxu0 %v448
      %562 = vmatmul.bf16.gmra.mxu0 %v274
      %v563 = vpop.f32.mrf.mxu0
      %v564 = vadd.f32 %v535, %v563
      %v565 = vpop.f32.mrf.mxu0
      %v566 = vadd.f32 %v537, %v565
      %567 = vmatmul.bf16.gmra.mxu0 %v278
      %v568 = vpop.f32.mrf.mxu0
      %v569 = vadd.f32 %v540, %v568
      %v570 = vpop.f32.mrf.mxu0
      %v571 = vadd.f32 %v542, %v570
      %572 = vmatmul.bf16.gmra.mxu0 %v282
      %v573 = vpop.f32.mrf.mxu0
      %v574 = vadd.f32 %v545, %v573
      %v575 = vpop.f32.mrf.mxu0
      %v576 = vadd.f32 %v547, %v575
      %577 = vmatmul.bf16.gmra.mxu0 %v286
      %v578 = vpop.f32.mrf.mxu0
      %v579 = vadd.f32 %v550, %v578
      %v580 = vpop.f32.mrf.mxu0
      %v581 = vadd.f32 %v552, %v580
      %582 = vdwg.mxu0
      %583 = vmatpush.bf16.msra.mxu0 %v463
      %584 = vmatpush.bf16.msra.mxu0 %v462
      %585 = vmatpush.bf16.msra.mxu0 %v461
      %586 = vmatpush.bf16.msra.mxu0 %v460
      %587 = vmatpush.bf16.msra.mxu0 %v459
      %588 = vmatpush.bf16.msra.mxu0 %v458
      %589 = vmatpush.bf16.msra.mxu0 %v457
      %590 = vmatpush.bf16.msra.mxu0 %v456
      %591 = vmatmul.bf16.gmra.mxu0 %v275
      %v592 = vpop.f32.mrf.mxu0
      %v593 = vadd.f32 %v564, %v592
      %v594 = vpop.f32.mrf.mxu0
      %v595 = vadd.f32 %v566, %v594
      %596 = vmatmul.bf16.gmra.mxu0 %v279
      %v597 = vpop.f32.mrf.mxu0
      %v598 = vadd.f32 %v569, %v597
      %v599 = vpop.f32.mrf.mxu0
      %v600 = vadd.f32 %v571, %v599
      %601 = vmatmul.bf16.gmra.mxu0 %v283
      %v602 = vpop.f32.mrf.mxu0
      %v603 = vadd.f32 %v574, %v602
      %v604 = vpop.f32.mrf.mxu0
      %v605 = vadd.f32 %v576, %v604
      %606 = vmatmul.bf16.gmra.mxu0 %v287
      %v607 = vpop.f32.mrf.mxu0
      %v608 = vadd.f32 %v579, %v607
      %v609 = vpop.f32.mrf.mxu0
      %v610 = vadd.f32 %v581, %v609
      %611 = vdwg.mxu0
      %vm612 = vcmask 130048
      %v613 = vsel %vm612, %v593, 0.0
      %614 = vadd.xlane.f32.xlu0 %v613
      %v615 = vpop.xlane.xlu0 %614
      %v616 = vsel %vm612, %v595, 0.0
      %617 = vadd.xlane.f32.xlu0 %v616
      %v618 = vpop.xlane.xlu0 %617
      %v619 = vsel %vm612, %v598, 0.0
      %620 = vadd.xlane.f32.xlu0 %v619
      %v621 = vpop.xlane.xlu0 %620
      %v622 = vsel %vm612, %v600, 0.0
      %623 = vadd.xlane.f32.xlu0 %v622
      %v624 = vpop.xlane.xlu0 %623
      %v625 = vsel %vm612, %v603, 0.0
      %626 = vadd.xlane.f32.xlu0 %v625
      %v627 = vpop.xlane.xlu0 %626
      %v628 = vsel %vm612, %v605, 0.0
      %629 = vadd.xlane.f32.xlu0 %v628
      %v630 = vpop.xlane.xlu0 %629
      %v631 = vsel %vm612, %v608, 0.0
      %632 = vadd.xlane.f32.xlu0 %v631
      %v633 = vpop.xlane.xlu0 %632
      %v634 = vsel %vm612, %v610, 0.0
      %635 = vadd.xlane.f32.xlu0 %v634
      %v636 = vpop.xlane.xlu0 %635
      %v637 = vrcp.pop 16.0
      %v638 = vmul.f32 16.0, %v637
      %v639 = vsub.f32 1.0, %v638
      %v640 = vmul.f32 %v637, %v639
      %v641 = vadd.f32 %v637, %v640
      %vm642 = vweird.f32 %v637
      %v643 = vsel %vm642, %v637, %v641
      %v644 = vmul.f32 %v615, %v643
      %v645 = vmul.f32 %v618, %v643
      %v646 = vmul.f32 %v621, %v643
      %v647 = vmul.f32 %v624, %v643
      %v648 = vmul.f32 %v627, %v643
      %v649 = vmul.f32 %v630, %v643
      %v650 = vmul.f32 %v633, %v643
      %v651 = vmul.f32 %v636, %v643
      %v652 = vsub.f32 %v593, %v644
      %v653 = vsub.f32 %v595, %v645
      %v654 = vsub.f32 %v598, %v646
      %v655 = vsub.f32 %v600, %v647
      %v656 = vsub.f32 %v603, %v648
      %v657 = vsub.f32 %v605, %v649
      %v658 = vsub.f32 %v608, %v650
      %v659 = vsub.f32 %v610, %v651
      %v660 = vmul.f32 %v652, %v652
      %v661 = vmul.f32 %v653, %v653
      %v662 = vmul.f32 %v654, %v654
      %v663 = vmul.f32 %v655, %v655
      %v664 = vmul.f32 %v656, %v656
      %v665 = vmul.f32 %v657, %v657
      %v666 = vmul.f32 %v658, %v658
      %v667 = vmul.f32 %v659, %v659
      %v668 = vsel %vm612, %v660, 0.0
      %669 = vadd.xlane.f32.xlu0 %v668
      %v670 = vpop.xlane.xlu0 %669
      %v671 = vsel %vm612, %v661, 0.0
      %672 = vadd.xlane.f32.xlu0 %v671
      %v673 = vpop.xlane.xlu0 %672
      %v674 = vsel %vm612, %v662, 0.0
      %675 = vadd.xlane.f32.xlu0 %v674
      %v676 = vpop.xlane.xlu0 %675
      %v677 = vsel %vm612, %v663, 0.0
      %678 = vadd.xlane.f32.xlu0 %v677
      %v679 = vpop.xlane.xlu0 %678
      %v680 = vsel %vm612, %v664, 0.0
      %681 = vadd.xlane.f32.xlu0 %v680
      %v682 = vpop.xlane.xlu0 %681
      %v683 = vsel %vm612, %v665, 0.0
      %684 = vadd.xlane.f32.xlu0 %v683
      %v685 = vpop.xlane.xlu0 %684
      %v686 = vsel %vm612, %v666, 0.0
      %687 = vadd.xlane.f32.xlu0 %v686
      %v688 = vpop.xlane.xlu0 %687
      %v689 = vsel %vm612, %v667, 0.0
      %690 = vadd.xlane.f32.xlu0 %v689
      %v691 = vpop.xlane.xlu0 %690
      %v692 = vmul.f32 %v670, %v643
      %v693 = vmul.f32 %v673, %v643
      %v694 = vmul.f32 %v676, %v643
      %v695 = vmul.f32 %v679, %v643
      %v696 = vmul.f32 %v682, %v643
      %v697 = vmul.f32 %v685, %v643
      %v698 = vmul.f32 %v688, %v643
      %v699 = vmul.f32 %v691, %v643
      %v700 = vadd.f32 %v692, 1e-05
      %v701 = vadd.f32 %v693, 1e-05
      %v702 = vadd.f32 %v694, 1e-05
      %v703 = vadd.f32 %v695, 1e-05
      %v704 = vadd.f32 %v696, 1e-05
      %v705 = vadd.f32 %v697, 1e-05
      %v706 = vadd.f32 %v698, 1e-05
      %v707 = vadd.f32 %v699, 1e-05
      %v708 = vrsqrt.pop %v700
      %v709 = vmul.f32 %v708, %v700
      %v710 = vmul.f32 %v709, %v708
      %v711 = vmul.f32 0.5, %v710
      %v712 = vsub.f32 1.5, %v711
      %v713 = vmul.f32 %v708, %v712
      %vm714 = vweird.f32 %v700
      %vm715 = vweird.f32 %v708
      %vm716 = vmor %vm714, %vm715
      %v717 = vsel %vm716, %v708, %v713
      %v718 = vrsqrt.pop %v701
      %v719 = vmul.f32 %v718, %v701
      %v720 = vmul.f32 %v719, %v718
      %v721 = vmul.f32 0.5, %v720
      %v722 = vsub.f32 1.5, %v721
      %v723 = vmul.f32 %v718, %v722
      %vm724 = vweird.f32 %v701
      %vm725 = vweird.f32 %v718
      %vm726 = vmor %vm724, %vm725
      %v727 = vsel %vm726, %v718, %v723
      %v728 = vrsqrt.pop %v702
      %v729 = vmul.f32 %v728, %v702
      %v730 = vmul.f32 %v729, %v728
      %v731 = vmul.f32 0.5, %v730
      %v732 = vsub.f32 1.5, %v731
      %v733 = vmul.f32 %v728, %v732
      %vm734 = vweird.f32 %v702
      %vm735 = vweird.f32 %v728
      %vm736 = vmor %vm734, %vm735
      %v737 = vsel %vm736, %v728, %v733
      %v738 = vrsqrt.pop %v703
      %v739 = vmul.f32 %v738, %v703
      %v740 = vmul.f32 %v739, %v738
      %v741 = vmul.f32 0.5, %v740
      %v742 = vsub.f32 1.5, %v741
      %v743 = vmul.f32 %v738, %v742
      %vm744 = vweird.f32 %v703
      %vm745 = vweird.f32 %v738
      %vm746 = vmor %vm744, %vm745
      %v747 = vsel %vm746, %v738, %v743
      %v748 = vrsqrt.pop %v704
      %v749 = vmul.f32 %v748, %v704
      %v750 = vmul.f32 %v749, %v748
      %v751 = vmul.f32 0.5, %v750
      %v752 = vsub.f32 1.5, %v751
      %v753 = vmul.f32 %v748, %v752
      %vm754 = vweird.f32 %v704
      %vm755 = vweird.f32 %v748
      %vm756 = vmor %vm754, %vm755
      %v757 = vsel %vm756, %v748, %v753
      %v758 = vrsqrt.pop %v705
      %v759 = vmul.f32 %v758, %v705
      %v760 = vmul.f32 %v759, %v758
      %v761 = vmul.f32 0.5, %v760
      %v762 = vsub.f32 1.5, %v761
      %v763 = vmul.f32 %v758, %v762
      %vm764 = vweird.f32 %v705
      %vm765 = vweird.f32 %v758
      %vm766 = vmor %vm764, %vm765
      %v767 = vsel %vm766, %v758, %v763
      %v768 = vrsqrt.pop %v706
      %v769 = vmul.f32 %v768, %v706
      %v770 = vmul.f32 %v769, %v768
      %v771 = vmul.f32 0.5, %v770
      %v772 = vsub.f32 1.5, %v771
      %v773 = vmul.f32 %v768, %v772
      %vm774 = vweird.f32 %v706
      %vm775 = vweird.f32 %v768
      %vm776 = vmor %vm774, %vm775
      %v777 = vsel %vm776, %v768, %v773
      %v778 = vrsqrt.pop %v707
      %v779 = vmul.f32 %v778, %v707
      %v780 = vmul.f32 %v779, %v778
      %v781 = vmul.f32 0.5, %v780
      %v782 = vsub.f32 1.5, %v781
      %v783 = vmul.f32 %v778, %v782
      %vm784 = vweird.f32 %v707
      %vm785 = vweird.f32 %v778
      %vm786 = vmor %vm784, %vm785
      %v787 = vsel %vm786, %v778, %v783
      %v788 = vmul.f32 %v652, %v717
      %v789 = vmul.f32 %v653, %v727
      %v790 = vmul.f32 %v654, %v737
      %v791 = vmul.f32 %v655, %v747
      %v792 = vmul.f32 %v656, %v757
      %v793 = vmul.f32 %v657, %v767
      %v794 = vmul.f32 %v658, %v777
      %v795 = vmul.f32 %v659, %v787
      %vm796 = vcmp.ge.f32.partialorder %v788, 0.0
      %vm797 = vcmp.ge.f32.partialorder %v789, 0.0
      %vm798 = vcmp.ge.f32.partialorder %v790, 0.0
      %vm799 = vcmp.ge.f32.partialorder %v791, 0.0
      %vm800 = vcmp.ge.f32.partialorder %v792, 0.0
      %vm801 = vcmp.ge.f32.partialorder %v793, 0.0
      %vm802 = vcmp.ge.f32.partialorder %v794, 0.0
      %vm803 = vcmp.ge.f32.partialorder %v795, 0.0
      %v804 = vmul.f32 %v788, 0.01
      %v805 = vmul.f32 %v789, 0.01
      %v806 = vmul.f32 %v790, 0.01
      %v807 = vmul.f32 %v791, 0.01
      %v808 = vmul.f32 %v792, 0.01
      %v809 = vmul.f32 %v793, 0.01
      %v810 = vmul.f32 %v794, 0.01
      %v811 = vmul.f32 %v795, 0.01
      %v812 = vsel %vm796, %v788, %v804
      %v813 = vsel %vm797, %v789, %v805
      %v814 = vsel %vm798, %v790, %v806
      %v815 = vsel %vm799, %v791, %v807
      %v816 = vsel %vm800, %v792, %v808
      %v817 = vsel %vm801, %v793, %v809
      %v818 = vsel %vm802, %v794, %v810
      %v819 = vsel %vm803, %v795, %v811
      %820 = vst.msk [vmem:[%s143] sm:$0xff] %vm612, %v812
      %821 = vst.msk [vmem:[%s143 + $0x8] sm:$0xff] %vm612, %v813
      %822 = vst.msk [vmem:[%s143 + $0x10] sm:$0xff] %vm612, %v814
      %823 = vst.msk [vmem:[%s143 + $0x18] sm:$0xff] %vm612, %v815
      %824 = vst.msk [vmem:[%s143 + $0x20] sm:$0xff] %vm612, %v816
      %825 = vst.msk [vmem:[%s143 + $0x28] sm:$0xff] %vm612, %v817
      %826 = vst.msk [vmem:[%s143 + $0x30] sm:$0xff] %vm612, %v818
      %827 = vst.msk [vmem:[%s143 + $0x38] sm:$0xff] %vm612, %v819
      %p828 = scmp.lt.s32.totalorder %s13, 1
      %s829 = scalar_select %p828, %s13, 1
      %s830 = smul.addr %s829, 8
      %s831 = smul.addr %s830, 8
      %s832 = scalar_lea.vmem %s2, %s831
      // Predicated region
      $region29: #{discriminator_forward.9} parent=27 // pred_check
        %p833 = pneg %p78
      $region30: #{discriminator_forward.9} parent=27 // pred_check_branch
        %835 = sbr.rel (%p833) target = $region32
      $region31: #{discriminator_forward.9} parent=27 // pred_region
        _
      $region32: #{discriminator_forward.9} parent=27 // pred_fallthru
        _
    $region28: #{discriminator_forward.9} parent=5 // pred_fallthru
      _
    %p836 = scmp.le.s32.totalorder 2, %s8
    // Predicated region
    $region33: #{discriminator_forward.9} parent=5 // pred_check
      %p837 = pneg %p836
    $region34: #{discriminator_forward.9} parent=5 // pred_check_branch
      %839 = sbr.rel (%p837) target = $region36
    $region35: #{discriminator_forward.9} parent=5 // pred_region
      %s840 = ssub.s32 %s8, 2
      // Predicated region
      $region37: #{discriminator_forward.9} parent=35 // pred_check
        %p841 = pneg %p84
      $region38: #{discriminator_forward.9} parent=35 // pred_check_branch
        %843 = sbr.rel (%p841) target = $region40
      $region39: #{discriminator_forward.9} parent=35 // pred_region
        %p844 = scmp.lt.s32.totalorder %s14, 1
        %s845 = scalar_select %p844, %s14, 1
        %s846 = smul.addr %s845, 8
        %s847 = smul.addr %s846, 8
        %s848 = scalar_lea.vmem %s2, %s847
      $region40: #{discriminator_forward.9} parent=35 // pred_fallthru
        _
    $region36: #{discriminator_forward.9} parent=5 // pred_fallthru
      _
  $region6: #{discriminator_forward.9} parent=0 // loop_footer
    %s12 = sadd.s32 1, %s8
  $region7: #{discriminator_forward.9} parent=0 // loop_footer_branch
    %7 = sbr.rel target = $region3
  $region8: #{discriminator_forward.9} parent=0 // loop_exit
    _

// kernel: discriminator_forward.10
$region0: #{discriminator_forward.10}
  #allocation0 [shape = 'u32[]', space=smem, size = 0x4, offset = 0x4, fixed_abs, tag = 'smem constant byte address 0x4 - core index']
  #allocation1 [shape = 'u32[72,128]{1,0:T(1,128)}', space=vmem, size = 0x9000, scoped, tag = 'internal scratch']
  %s0 = inlined_call_operand.vmem [shape: bf16[64,1024], index: 0, kind: input, shape index: {}]
  %s1 = inlined_call_operand.vmem [shape: bf16[2,1024,4], index: 1, kind: input, shape index: {}]
  %s2 = inlined_call_operand.vmem [shape: f32[2,64,4], index: 2, kind: output, shape index: {}]
  %s3 = sld [smem:[#allocation0]]
  $region41: #{discriminator_forward.10} parent=0
    _
  %s5 = ssub.s32 1, %s3
  %s6 = scalar_select 0, %s5, %s3
  loop: start=0, step=1, limit=4
  $region2: #{discriminator_forward.10} parent=0 // loop_pre_header
    _
  $region3: #{discriminator_forward.10} parent=0 // loop_header
    %s8 = sphi 0, %s12
    %p9 = scmp.ge.s32.totalorder %s8, 4
    %s16 = sphi 0, %s16
    %s18 = sphi 0, %s16
    %s19 = sphi 0, %s18
    %s33 = sphi 0, %s19
    %s39 = sphi 0, %s41
    %s42 = sphi 0, %s39
    %s43 = sphi 0, %s42
    %s59 = sphi 0, %s43
    %s65 = sphi 0, %s67
    %s68 = sphi 0, %s65
    %s69 = sphi 0, %s68
    %s85 = sphi 0, %s69
  $region4: #{discriminator_forward.10} parent=0 // loop_header_branch
    %11 = sbr.rel (%p9) target = $region8
  $region5: #{discriminator_forward.10} parent=0 // loop_body
    %s13 = ssub.s32 %s8, 1
    %s14 = ssub.s32 %s8, 2
    %s15 = sadd.s32 %s8, 1
    %s17 = sadd.s32 %s16, 1
    %p20 = scmp.eq.s32.totalorder %s8, 1
    %p21 = scmp.ne.s32.totalorder %s16, %s18
    %p22 = scmp.eq.s32.totalorder %s8, 0
    %p23 = por %p21, %p22
    %p24 = scmp.ne.s32.totalorder %s16, %s18
    %p25 = scmp.eq.s32.totalorder %s13, 1
    %p26 = por %p24, %p25
    %p27 = scmp.ne.s32.totalorder %s18, %s19
    %p28 = scmp.eq.s32.totalorder %s13, 0
    %p29 = por %p27, %p28
    %p30 = scmp.ne.s32.totalorder %s18, %s19
    %p31 = scmp.eq.s32.totalorder %s14, 1
    %p32 = por %p30, %p31
    %p34 = scmp.ne.s32.totalorder %s19, %s33
    %p35 = scmp.eq.s32.totalorder %s14, 0
    %p36 = por %p34, %p35
    %s37 = ssub.s32 %s8, %s15
    %p38 = scmp.eq.s32.totalorder %s37, 0
    %s40 = sadd.s32 %s39, 1
    %s41 = scalar_select %p38, %s39, %s40
    %p44 = pneg %p38
    %p45 = scmp.eq.s32.totalorder %s8, 1
    %p46 = por %p44, %p45
    %p47 = scmp.ne.s32.totalorder %s39, %s42
    %p48 = scmp.eq.s32.totalorder %s8, 0
    %p49 = por %p47, %p48
    %p50 = scmp.ne.s32.totalorder %s39, %s42
    %p51 = scmp.eq.s32.totalorder %s13, 1
    %p52 = por %p50, %p51
    %p53 = scmp.ne.s32.totalorder %s42, %s43
    %p54 = scmp.eq.s32.totalorder %s13, 0
    %p55 = por %p53, %p54
    %p56 = scmp.ne.s32.totalorder %s42, %s43
    %p57 = scmp.eq.s32.totalorder %s14, 1
    %p58 = por %p56, %p57
    %p60 = scmp.ne.s32.totalorder %s43, %s59
    %p61 = scmp.eq.s32.totalorder %s14, 0
    %p62 = por %p60, %p61
    %s63 = ssub.s32 %s8, %s15
    %p64 = scmp.eq.s32.totalorder %s63, 0
    %s66 = sadd.s32 %s65, 1
    %s67 = scalar_select %p64, %s65, %s66
    %p70 = pneg %p64
    %p71 = scmp.eq.s32.totalorder %s8, 1
    %p72 = por %p70, %p71
    %p73 = scmp.ne.s32.totalorder %s65, %s68
    %p74 = scmp.eq.s32.totalorder %s8, 0
    %p75 = por %p73, %p74
    %p76 = scmp.ne.s32.totalorder %s65, %s68
    %p77 = scmp.eq.s32.totalorder %s13, 1
    %p78 = por %p76, %p77
    %p79 = scmp.ne.s32.totalorder %s68, %s69
    %p80 = scmp.eq.s32.totalorder %s13, 0
    %p81 = por %p79, %p80
    %p82 = scmp.ne.s32.totalorder %s68, %s69
    %p83 = scmp.eq.s32.totalorder %s14, 1
    %p84 = por %p82, %p83
    %p86 = scmp.ne.s32.totalorder %s69, %s85
    %p87 = scmp.eq.s32.totalorder %s14, 0
    %p88 = por %p86, %p87
    %p89 = scmp.le.s32.totalorder 1, %s8
    %p90 = scmp.lt.s32.totalorder %s8, 3
    %p91 = pnand %p89, %p90
    %p92 = pneg %p91
    // Predicated region
    $region9: #{discriminator_forward.10} parent=5 // pred_check
      _
    $region10: #{discriminator_forward.10} parent=5 // pred_check_branch
      %94 = sbr.rel (%p91) target = $region12
    $region11: #{discriminator_forward.10} parent=5 // pred_region
      %s95 = ssub.s32 %s8, 1
      // Predicated region
      $region13: #{discriminator_forward.10} parent=11 // pred_check
        %p96 = pneg %p29
      $region14: #{discriminator_forward.10} parent=11 // pred_check_branch
        %98 = sbr.rel (%p96) target = $region16
      $region15: #{discriminator_forward.10} parent=11 // pred_region
        _
      $region16: #{discriminator_forward.10} parent=11 // pred_fallthru
        _
    $region12: #{discriminator_forward.10} parent=5 // pred_fallthru
      _
    %p99 = scmp.lt.s32.totalorder %s8, 2
    // Predicated region
    $region17: #{discriminator_forward.10} parent=5 // pred_check
      %p100 = pneg %p99
    $region18: #{discriminator_forward.10} parent=5 // pred_check_branch
      %102 = sbr.rel (%p100) target = $region20
    $region19: #{discriminator_forward.10} parent=5 // pred_region
      // Predicated region
      $region21: #{discriminator_forward.10} parent=19 // pred_check
        %p103 = pneg %p49
      $region22: #{discriminator_forward.10} parent=19 // pred_check_branch
        %105 = sbr.rel (%p103) target = $region24
      $region23: #{discriminator_forward.10} parent=19 // pred_region
        %p106 = scmp.lt.s32.totalorder %s8, 1
        %s107 = scalar_select %p106, %s8, 1
        %s108 = smul.addr %s107, 128
        %s109 = smul.addr %s108, 4
        %s110 = scalar_lea.vmem %s1, %s109
      $region24: #{discriminator_forward.10} parent=19 // pred_fallthru
        _
    $region20: #{discriminator_forward.10} parent=5 // pred_fallthru
      _
    %p111 = scmp.le.s32.totalorder 1, %s8
    %p112 = scmp.lt.s32.totalorder %s8, 3
    %p113 = pnand %p111, %p112
    %p114 = pneg %p113
    // Predicated region
    $region25: #{discriminator_forward.10} parent=5 // pred_check
      _
    $region26: #{discriminator_forward.10} parent=5 // pred_check_branch
      %116 = sbr.rel (%p113) target = $region28
    $region27: #{discriminator_forward.10} parent=5 // pred_region
      %s117 = ssub.s32 %s8, 1
      %p118 = pneg %p29
      %p119 = pneg %p26
      %p120 = scmp.lt.s32.totalorder %s13, 1
      %s121 = scalar_select %p120, %s13, 1
      %s122 = smul.addr %s121, 128
      %s123 = smul.addr %s122, 4
      %s124 = scalar_lea.vmem %s1, %s123
      %p125 = pneg %p55
      %p126 = pneg %p52
      %p127 = pneg %p81
      %p128 = pneg %p78
      %p129 = scmp.lt.s32.totalorder %s13, 1
      %s130 = scalar_select %p129, %s13, 1
      %s131 = smul.addr %s130, 8
      %s132 = smul.addr %s131, 8
      %s133 = scalar_lea.vmem %s2, %s132
      %p134 = scmp.lt.s32.totalorder %s13, 1
      %s135 = scalar_select %p134, %s13, 1
      %s136 = smul.addr %s135, 128
      %s137 = smul.addr %s136, 4
      %s138 = scalar_lea.vmem %s1, %s137
      %p139 = scmp.lt.s32.totalorder %s13, 1
      %s140 = scalar_select %p139, %s13, 1
      %s141 = smul.addr %s140, 8
      %s142 = smul.addr %s141, 8
      %s143 = scalar_lea.vmem %s2, %s142
      %v144 = vld [vmem:[%s0] sm:$0xff]
      %v145 = vld [vmem:[%s0 + $0x8] sm:$0xff]
      %v146 = vld [vmem:[%s0 + $0x10] sm:$0xff]
      %v147 = vld [vmem:[%s0 + $0x18] sm:$0xff]
      %v148 = vld [vmem:[%s0 + $0x20] sm:$0xff]
      %v149 = vld [vmem:[%s0 + $0x28] sm:$0xff]
      %v150 = vld [vmem:[%s0 + $0x30] sm:$0xff]
      %v151 = vld [vmem:[%s0 + $0x38] sm:$0xff]
      %v152 = vld [vmem:[%s0 + $0x40] sm:$0xff]
      %v153 = vld [vmem:[%s0 + $0x48] sm:$0xff]
      %v154 = vld [vmem:[%s0 + $0x50] sm:$0xff]
      %v155 = vld [vmem:[%s0 + $0x58] sm:$0xff]
      %v156 = vld [vmem:[%s0 + $0x60] sm:$0xff]
      %v157 = vld [vmem:[%s0 + $0x68] sm:$0xff]
      %v158 = vld [vmem:[%s0 + $0x70] sm:$0xff]
      %v159 = vld [vmem:[%s0 + $0x78] sm:$0xff]
      %v160 = vld [vmem:[%s0 + $0x80] sm:$0xff]
      %v161 = vld [vmem:[%s0 + $0x88] sm:$0xff]
      %v162 = vld [vmem:[%s0 + $0x90] sm:$0xff]
      %v163 = vld [vmem:[%s0 + $0x98] sm:$0xff]
      %v164 = vld [vmem:[%s0 + $0xa0] sm:$0xff]
      %v165 = vld [vmem:[%s0 + $0xa8] sm:$0xff]
      %v166 = vld [vmem:[%s0 + $0xb0] sm:$0xff]
      %v167 = vld [vmem:[%s0 + $0xb8] sm:$0xff]
      %v168 = vld [vmem:[%s0 + $0xc0] sm:$0xff]
      %v169 = vld [vmem:[%s0 + $0xc8] sm:$0xff]
      %v170 = vld [vmem:[%s0 + $0xd0] sm:$0xff]
      %v171 = vld [vmem:[%s0 + $0xd8] sm:$0xff]
      %v172 = vld [vmem:[%s0 + $0xe0] sm:$0xff]
      %v173 = vld [vmem:[%s0 + $0xe8] sm:$0xff]
      %v174 = vld [vmem:[%s0 + $0xf0] sm:$0xff]
      %v175 = vld [vmem:[%s0 + $0xf8] sm:$0xff]
      %v176 = vld [vmem:[%s138] sm:$0xf]
      %v177 = vld [vmem:[%s138 + $0x4] sm:$0xf]
      %v178 = vld [vmem:[%s138 + $0x8] sm:$0xf]
      %v179 = vld [vmem:[%s138 + $0xc] sm:$0xf]
      %v180 = vld [vmem:[%s138 + $0x10] sm:$0xf]
      %v181 = vld [vmem:[%s138 + $0x14] sm:$0xf]
      %v182 = vld [vmem:[%s138 + $0x18] sm:$0xf]
      %v183 = vld [vmem:[%s138 + $0x1c] sm:$0xf]
      %v184 = vld [vmem:[%s138 + $0x20] sm:$0xf]
      %v185 = vld [vmem:[%s138 + $0x24] sm:$0xf]
      %v186 = vld [vmem:[%s138 + $0x28] sm:$0xf]
      %v187 = vld [vmem:[%s138 + $0x2c] sm:$0xf]
      %v188 = vld [vmem:[%s138 + $0x30] sm:$0xf]
      %v189 = vld [vmem:[%s138 + $0x34] sm:$0xf]
      %v190 = vld [vmem:[%s138 + $0x38] sm:$0xf]
      %v191 = vld [vmem:[%s138 + $0x3c] sm:$0xf]
      %v192 = vld [vmem:[%s138 + $0x40] sm:$0xf]
      %v193 = vld [vmem:[%s138 + $0x44] sm:$0xf]
      %v194 = vld [vmem:[%s138 + $0x48] sm:$0xf]
      %v195 = vld [vmem:[%s138 + $0x4c] sm:$0xf]
      %v196 = vld [vmem:[%s138 + $0x50] sm:$0xf]
      %v197 = vld [vmem:[%s138 + $0x54] sm:$0xf]
      %v198 = vld [vmem:[%s138 + $0x58] sm:$0xf]
      %v199 = vld [vmem:[%s138 + $0x5c] sm:$0xf]
      %v200 = vld [vmem:[%s138 + $0x60] sm:$0xf]
      %v201 = vld [vmem:[%s138 + $0x64] sm:$0xf]
      %v202 = vld [vmem:[%s138 + $0x68] sm:$0xf]
      %v203 = vld [vmem:[%s138 + $0x6c] sm:$0xf]
      %v204 = vld [vmem:[%s138 + $0x70] sm:$0xf]
      %v205 = vld [vmem:[%s138 + $0x74] sm:$0xf]
      %v206 = vld [vmem:[%s138 + $0x78] sm:$0xf]
      %v207 = vld [vmem:[%s138 + $0x7c] sm:$0xf]
      %v208 = vld [vmem:[%s138 + $0x80] sm:$0xf]
      %v209 = vld [vmem:[%s138 + $0x84] sm:$0xf]
      %v210 = vld [vmem:[%s138 + $0x88] sm:$0xf]
      %v211 = vld [vmem:[%s138 + $0x8c] sm:$0xf]
      %v212 = vld [vmem:[%s138 + $0x90] sm:$0xf]
      %v213 = vld [vmem:[%s138 + $0x94] sm:$0xf]
      %v214 = vld [vmem:[%s138 + $0x98] sm:$0xf]
      %v215 = vld [vmem:[%s138 + $0x9c] sm:$0xf]
      %v216 = vld [vmem:[%s138 + $0xa0] sm:$0xf]
      %v217 = vld [vmem:[%s138 + $0xa4] sm:$0xf]
      %v218 = vld [vmem:[%s138 + $0xa8] sm:$0xf]
      %v219 = vld [vmem:[%s138 + $0xac] sm:$0xf]
      %v220 = vld [vmem:[%s138 + $0xb0] sm:$0xf]
      %v221 = vld [vmem:[%s138 + $0xb4] sm:$0xf]
      %v222 = vld [vmem:[%s138 + $0xb8] sm:$0xf]
      %v223 = vld [vmem:[%s138 + $0xbc] sm:$0xf]
      %v224 = vld [vmem:[%s138 + $0xc0] sm:$0xf]
      %v225 = vld [vmem:[%s138 + $0xc4] sm:$0xf]
      %v226 = vld [vmem:[%s138 + $0xc8] sm:$0xf]
      %v227 = vld [vmem:[%s138 + $0xcc] sm:$0xf]
      %v228 = vld [vmem:[%s138 + $0xd0] sm:$0xf]
      %v229 = vld [vmem:[%s138 + $0xd4] sm:$0xf]
      %v230 = vld [vmem:[%s138 + $0xd8] sm:$0xf]
      %v231 = vld [vmem:[%s138 + $0xdc] sm:$0xf]
      %v232 = vld [vmem:[%s138 + $0xe0] sm:$0xf]
      %v233 = vld [vmem:[%s138 + $0xe4] sm:$0xf]
      %v234 = vld [vmem:[%s138 + $0xe8] sm:$0xf]
      %v235 = vld [vmem:[%s138 + $0xec] sm:$0xf]
      %v236 = vld [vmem:[%s138 + $0xf0] sm:$0xf]
      %v237 = vld [vmem:[%s138 + $0xf4] sm:$0xf]
      %v238 = vld [vmem:[%s138 + $0xf8] sm:$0xf]
      %v239 = vld [vmem:[%s138 + $0xfc] sm:$0xf]
      %v240 = vld [vmem:[%s138 + $0x100] sm:$0xf]
      %v241 = vld [vmem:[%s138 + $0x104] sm:$0xf]
      %v242 = vld [vmem:[%s138 + $0x108] sm:$0xf]
      %v243 = vld [vmem:[%s138 + $0x10c] sm:$0xf]
      %v244 = vld [vmem:[%s138 + $0x110] sm:$0xf]
      %v245 = vld [vmem:[%s138 + $0x114] sm:$0xf]
      %v246 = vld [vmem:[%s138 + $0x118] sm:$0xf]
      %v247 = vld [vmem:[%s138 + $0x11c] sm:$0xf]
      %v248 = vld [vmem:[%s138 + $0x120] sm:$0xf]
      %v249 = vld [vmem:[%s138 + $0x124] sm:$0xf]
      %v250 = vld [vmem:[%s138 + $0x128] sm:$0xf]
      %v251 = vld [vmem:[%s138 + $0x12c] sm:$0xf]
      %v252 = vld [vmem:[%s138 + $0x130] sm:$0xf]
      %v253 = vld [vmem:[%s138 + $0x134] sm:$0xf]
      %v254 = vld [vmem:[%s138 + $0x138] sm:$0xf]
      %v255 = vld [vmem:[%s138 + $0x13c] sm:$0xf]
      %v256 = vld [vmem:[%s138 + $0x140] sm:$0xf]
      %v257 = vld [vmem:[%s138 + $0x144] sm:$0xf]
      %v258 = vld [vmem:[%s138 + $0x148] sm:$0xf]
      %v259 = vld [vmem:[%s138 + $0x14c] sm:$0xf]
      %v260 = vld [vmem:[%s138 + $0x150] sm:$0xf]
      %v261 = vld [vmem:[%s138 + $0x154] sm:$0xf]
      %v262 = vld [vmem:[%s138 + $0x158] sm:$0xf]
      %v263 = vld [vmem:[%s138 + $0x15c] sm:$0xf]
      %v264 = vld [vmem:[%s138 + $0x160] sm:$0xf]
      %v265 = vld [vmem:[%s138 + $0x164] sm:$0xf]
      %v266 = vld [vmem:[%s138 + $0x168] sm:$0xf]
      %v267 = vld [vmem:[%s138 + $0x16c] sm:$0xf]
      %v268 = vld [vmem:[%s138 + $0x170] sm:$0xf]
      %v269 = vld [vmem:[%s138 + $0x174] sm:$0xf]
      %v270 = vld [vmem:[%s138 + $0x178] sm:$0xf]
      %v271 = vld [vmem:[%s138 + $0x17c] sm:$0xf]
      %v272 = vld [vmem:[%s138 + $0x180] sm:$0xf]
      %v273 = vld [vmem:[%s138 + $0x184] sm:$0xf]
      %v274 = vld [vmem:[%s138 + $0x188] sm:$0xf]
      %v275 = vld [vmem:[%s138 + $0x18c] sm:$0xf]
      %v276 = vld [vmem:[%s138 + $0x190] sm:$0xf]
      %v277 = vld [vmem:[%s138 + $0x194] sm:$0xf]
      %v278 = vld [vmem:[%s138 + $0x198] sm:$0xf]
      %v279 = vld [vmem:[%s138 + $0x19c] sm:$0xf]
      %v280 = vld [vmem:[%s138 + $0x1a0] sm:$0xf]
      %v281 = vld [vmem:[%s138 + $0x1a4] sm:$0xf]
      %v282 = vld [vmem:[%s138 + $0x1a8] sm:$0xf]
      %v283 = vld [vmem:[%s138 + $0x1ac] sm:$0xf]
      %v284 = vld [vmem:[%s138 + $0x1b0] sm:$0xf]
      %v285 = vld [vmem:[%s138 + $0x1b4] sm:$0xf]
      %v286 = vld [vmem:[%s138 + $0x1b8] sm:$0xf]
      %v287 = vld [vmem:[%s138 + $0x1bc] sm:$0xf]
      %v288 = vld [vmem:[%s138 + $0x1c0] sm:$0xf]
      %v289 = vld [vmem:[%s138 + $0x1c4] sm:$0xf]
      %v290 = vld [vmem:[%s138 + $0x1c8] sm:$0xf]
      %v291 = vld [vmem:[%s138 + $0x1cc] sm:$0xf]
      %v292 = vld [vmem:[%s138 + $0x1d0] sm:$0xf]
      %v293 = vld [vmem:[%s138 + $0x1d4] sm:$0xf]
      %v294 = vld [vmem:[%s138 + $0x1d8] sm:$0xf]
      %v295 = vld [vmem:[%s138 + $0x1dc] sm:$0xf]
      %v296 = vld [vmem:[%s138 + $0x1e0] sm:$0xf]
      %v297 = vld [vmem:[%s138 + $0x1e4] sm:$0xf]
      %v298 = vld [vmem:[%s138 + $0x1e8] sm:$0xf]
      %v299 = vld [vmem:[%s138 + $0x1ec] sm:$0xf]
      %v300 = vld [vmem:[%s138 + $0x1f0] sm:$0xf]
      %v301 = vld [vmem:[%s138 + $0x1f4] sm:$0xf]
      %v302 = vld [vmem:[%s138 + $0x1f8] sm:$0xf]
      %v303 = vld [vmem:[%s138 + $0x1fc] sm:$0xf]
      %v336 = vunpack.c.l.b16 %v144
      %v337 = vunpack.c.h.b16 %v144
      %v338 = vunpack.c.l.b16 %v145
      %v339 = vunpack.c.h.b16 %v145
      %v340 = vunpack.c.l.b16 %v146
      %v341 = vunpack.c.h.b16 %v146
      %v342 = vunpack.c.l.b16 %v147
      %v343 = vunpack.c.h.b16 %v147
      %v344 = vunpack.c.l.b16 %v148
      %v345 = vunpack.c.h.b16 %v148
      %v346 = vunpack.c.l.b16 %v149
      %v347 = vunpack.c.h.b16 %v149
      %v348 = vunpack.c.l.b16 %v150
      %v349 = vunpack.c.h.b16 %v150
      %v350 = vunpack.c.l.b16 %v151
      %v351 = vunpack.c.h.b16 %v151
      %v352 = vunpack.c.l.b16 %v152
      %v353 = vunpack.c.h.b16 %v152
      %v354 = vunpack.c.l.b16 %v153
      %v355 = vunpack.c.h.b16 %v153
      %v356 = vunpack.c.l.b16 %v154
      %v357 = vunpack.c.h.b16 %v154
      %v358 = vunpack.c.l.b16 %v155
      %v359 = vunpack.c.h.b16 %v155
      %v360 = vunpack.c.l.b16 %v156
      %v361 = vunpack.c.h.b16 %v156
      %v362 = vunpack.c.l.b16 %v157
      %v363 = vunpack.c.h.b16 %v157
      %v364 = vunpack.c.l.b16 %v158
      %v365 = vunpack.c.h.b16 %v158
      %v366 = vunpack.c.l.b16 %v159
      %v367 = vunpack.c.h.b16 %v159
      %v368 = vunpack.c.l.b16 %v160
      %v369 = vunpack.c.h.b16 %v160
      %v370 = vunpack.c.l.b16 %v161
      %v371 = vunpack.c.h.b16 %v161
      %v372 = vunpack.c.l.b16 %v162
      %v373 = vunpack.c.h.b16 %v162
      %v374 = vunpack.c.l.b16 %v163
      %v375 = vunpack.c.h.b16 %v163
      %v376 = vunpack.c.l.b16 %v164
      %v377 = vunpack.c.h.b16 %v164
      %v378 = vunpack.c.l.b16 %v165
      %v379 = vunpack.c.h.b16 %v165
      %v380 = vunpack.c.l.b16 %v166
      %v381 = vunpack.c.h.b16 %v166
      %v382 = vunpack.c.l.b16 %v167
      %v383 = vunpack.c.h.b16 %v167
      %v384 = vunpack.c.l.b16 %v168
      %v385 = vunpack.c.h.b16 %v168
      %v386 = vunpack.c.l.b16 %v169
      %v387 = vunpack.c.h.b16 %v169
      %v388 = vunpack.c.l.b16 %v170
      %v389 = vunpack.c.h.b16 %v170
      %v390 = vunpack.c.l.b16 %v171
      %v391 = vunpack.c.h.b16 %v171
      %v392 = vunpack.c.l.b16 %v172
      %v393 = vunpack.c.h.b16 %v172
      %v394 = vunpack.c.l.b16 %v173
      %v395 = vunpack.c.h.b16 %v173
      %v396 = vunpack.c.l.b16 %v174
      %v397 = vunpack.c.h.b16 %v174
      %v398 = vunpack.c.l.b16 %v175
      %v399 = vunpack.c.h.b16 %v175
      %v400 = vpack.c.b16 %v344, %v336
      %v401 = vpack.c.b16 %v345, %v337
      %v402 = vpack.c.b16 %v346, %v338
      %v403 = vpack.c.b16 %v347, %v339
      %v404 = vpack.c.b16 %v348, %v340
      %v405 = vpack.c.b16 %v349, %v341
      %v406 = vpack.c.b16 %v350, %v342
      %v407 = vpack.c.b16 %v351, %v343
      %v408 = vpack.c.b16 %v360, %v352
      %v409 = vpack.c.b16 %v361, %v353
      %v410 = vpack.c.b16 %v362, %v354
      %v411 = vpack.c.b16 %v363, %v355
      %v412 = vpack.c.b16 %v364, %v356
      %v413 = vpack.c.b16 %v365, %v357
      %v414 = vpack.c.b16 %v366, %v358
      %v415 = vpack.c.b16 %v367, %v359
      %v416 = vpack.c.b16 %v376, %v368
      %v417 = vpack.c.b16 %v377, %v369
      %v418 = vpack.c.b16 %v378, %v370
      %v419 = vpack.c.b16 %v379, %v371
      %v420 = vpack.c.b16 %v380, %v372
      %v421 = vpack.c.b16 %v381, %v373
      %v422 = vpack.c.b16 %v382, %v374
      %v423 = vpack.c.b16 %v383, %v375
      %v424 = vpack.c.b16 %v392, %v384
      %v425 = vpack.c.b16 %v393, %v385
      %v426 = vpack.c.b16 %v394, %v386
      %v427 = vpack.c.b16 %v395, %v387
      %v428 = vpack.c.b16 %v396, %v388
      %v429 = vpack.c.b16 %v397, %v389
      %v430 = vpack.c.b16 %v398, %v390
      %v431 = vpack.c.b16 %v399, %v391
      %v592 = vunpack.c.l.b16 %v176
      %v593 = vunpack.c.l.b16 %v177
      %v594 = vunpack.c.l.b16 %v178
      %v595 = vunpack.c.l.b16 %v179
      %v596 = vunpack.c.l.b16 %v180
      %v597 = vunpack.c.l.b16 %v181
      %v598 = vunpack.c.l.b16 %v182
      %v599 = vunpack.c.l.b16 %v183
      %v600 = vunpack.c.l.b16 %v184
      %v601 = vunpack.c.l.b16 %v185
      %v602 = vunpack.c.l.b16 %v186
      %v603 = vunpack.c.l.b16 %v187
      %v604 = vunpack.c.l.b16 %v188
      %v605 = vunpack.c.l.b16 %v189
      %v606 = vunpack.c.l.b16 %v190
      %v607 = vunpack.c.l.b16 %v191
      %v608 = vunpack.c.l.b16 %v192
      %v609 = vunpack.c.l.b16 %v193
      %v610 = vunpack.c.l.b16 %v194
      %v611 = vunpack.c.l.b16 %v195
      %v612 = vunpack.c.l.b16 %v196
      %v613 = vunpack.c.l.b16 %v197
      %v614 = vunpack.c.l.b16 %v198
      %v615 = vunpack.c.l.b16 %v199
      %v616 = vunpack.c.l.b16 %v200
      %v617 = vunpack.c.l.b16 %v201
      %v618 = vunpack.c.l.b16 %v202
      %v619 = vunpack.c.l.b16 %v203
      %v620 = vunpack.c.l.b16 %v204
      %v621 = vunpack.c.l.b16 %v205
      %v622 = vunpack.c.l.b16 %v206
      %v623 = vunpack.c.l.b16 %v207
      %v624 = vunpack.c.l.b16 %v208
      %v625 = vunpack.c.l.b16 %v209
      %v626 = vunpack.c.l.b16 %v210
      %v627 = vunpack.c.l.b16 %v211
      %v628 = vunpack.c.l.b16 %v212
      %v629 = vunpack.c.l.b16 %v213
      %v630 = vunpack.c.l.b16 %v214
      %v631 = vunpack.c.l.b16 %v215
      %v632 = vunpack.c.l.b16 %v216
      %v633 = vunpack.c.l.b16 %v217
      %v634 = vunpack.c.l.b16 %v218
      %v635 = vunpack.c.l.b16 %v219
      %v636 = vunpack.c.l.b16 %v220
      %v637 = vunpack.c.l.b16 %v221
      %v638 = vunpack.c.l.b16 %v222
      %v639 = vunpack.c.l.b16 %v223
      %v640 = vunpack.c.l.b16 %v224
      %v641 = vunpack.c.l.b16 %v225
      %v642 = vunpack.c.l.b16 %v226
      %v643 = vunpack.c.l.b16 %v227
      %v644 = vunpack.c.l.b16 %v228
      %v645 = vunpack.c.l.b16 %v229
      %v646 = vunpack.c.l.b16 %v230
      %v647 = vunpack.c.l.b16 %v231
      %v648 = vunpack.c.l.b16 %v232
      %v649 = vunpack.c.l.b16 %v233
      %v650 = vunpack.c.l.b16 %v234
      %v651 = vunpack.c.l.b16 %v235
      %v652 = vunpack.c.l.b16 %v236
      %v653 = vunpack.c.l.b16 %v237
      %v654 = vunpack.c.l.b16 %v238
      %v655 = vunpack.c.l.b16 %v239
      %v656 = vunpack.c.l.b16 %v240
      %v657 = vunpack.c.l.b16 %v241
      %v658 = vunpack.c.l.b16 %v242
      %v659 = vunpack.c.l.b16 %v243
      %v660 = vunpack.c.l.b16 %v244
      %v661 = vunpack.c.l.b16 %v245
      %v662 = vunpack.c.l.b16 %v246
      %v663 = vunpack.c.l.b16 %v247
      %v664 = vunpack.c.l.b16 %v248
      %v665 = vunpack.c.l.b16 %v249
      %v666 = vunpack.c.l.b16 %v250
      %v667 = vunpack.c.l.b16 %v251
      %v668 = vunpack.c.l.b16 %v252
      %v669 = vunpack.c.l.b16 %v253
      %v670 = vunpack.c.l.b16 %v254
      %v671 = vunpack.c.l.b16 %v255
      %v672 = vunpack.c.l.b16 %v256
      %v673 = vunpack.c.l.b16 %v257
      %v674 = vunpack.c.l.b16 %v258
      %v675 = vunpack.c.l.b16 %v259
      %v676 = vunpack.c.l.b16 %v260
      %v677 = vunpack.c.l.b16 %v261
      %v678 = vunpack.c.l.b16 %v262
      %v679 = vunpack.c.l.b16 %v263
      %v680 = vunpack.c.l.b16 %v264
      %v681 = vunpack.c.l.b16 %v265
      %v682 = vunpack.c.l.b16 %v266
      %v683 = vunpack.c.l.b16 %v267
      %v684 = vunpack.c.l.b16 %v268
      %v685 = vunpack.c.l.b16 %v269
      %v686 = vunpack.c.l.b16 %v270
      %v687 = vunpack.c.l.b16 %v271
      %v688 = vunpack.c.l.b16 %v272
      %v689 = vunpack.c.l.b16 %v273
      %v690 = vunpack.c.l.b16 %v274
      %v691 = vunpack.c.l.b16 %v275
      %v692 = vunpack.c.l.b16 %v276
      %v693 = vunpack.c.l.b16 %v277
      %v694 = vunpack.c.l.b16 %v278
      %v695 = vunpack.c.l.b16 %v279
      %v696 = vunpack.c.l.b16 %v280
      %v697 = vunpack.c.l.b16 %v281
      %v698 = vunpack.c.l.b16 %v282
      %v699 = vunpack.c.l.b16 %v283
      %v700 = vunpack.c.l.b16 %v284
      %v701 = vunpack.c.l.b16 %v285
      %v702 = vunpack.c.l.b16 %v286
      %v703 = vunpack.c.l.b16 %v287
      %v704 = vunpack.c.l.b16 %v288
      %v705 = vunpack.c.l.b16 %v289
      %v706 = vunpack.c.l.b16 %v290
      %v707 = vunpack.c.l.b16 %v291
      %v708 = vunpack.c.l.b16 %v292
      %v709 = vunpack.c.l.b16 %v293
      %v710 = vunpack.c.l.b16 %v294
      %v711 = vunpack.c.l.b16 %v295
      %v712 = vunpack.c.l.b16 %v296
      %v713 = vunpack.c.l.b16 %v297
      %v714 = vunpack.c.l.b16 %v298
      %v715 = vunpack.c.l.b16 %v299
      %v716 = vunpack.c.l.b16 %v300
      %v717 = vunpack.c.l.b16 %v301
      %v718 = vunpack.c.l.b16 %v302
      %v719 = vunpack.c.l.b16 %v303
      %v720 = vpack.c.b16 %v593, %v592
      %v721 = vpack.c.b16 %v595, %v594
      %v722 = vpack.c.b16 %v597, %v596
      %v723 = vpack.c.b16 %v599, %v598
      %v724 = vpack.c.b16 %v601, %v600
      %v725 = vpack.c.b16 %v603, %v602
      %v726 = vpack.c.b16 %v605, %v604
      %v727 = vpack.c.b16 %v607, %v606
      %v728 = vpack.c.b16 %v609, %v608
      %v729 = vpack.c.b16 %v611, %v610
      %v730 = vpack.c.b16 %v613, %v612
      %v731 = vpack.c.b16 %v615, %v614
      %v732 = vpack.c.b16 %v617, %v616
      %v733 = vpack.c.b16 %v619, %v618
      %v734 = vpack.c.b16 %v621, %v620
      %v735 = vpack.c.b16 %v623, %v622
      %v736 = vpack.c.b16 %v625, %v624
      %v737 = vpack.c.b16 %v627, %v626
      %v738 = vpack.c.b16 %v629, %v628
      %v739 = vpack.c.b16 %v631, %v630
      %v740 = vpack.c.b16 %v633, %v632
      %v741 = vpack.c.b16 %v635, %v634
      %v742 = vpack.c.b16 %v637, %v636
      %v743 = vpack.c.b16 %v639, %v638
      %v744 = vpack.c.b16 %v641, %v640
      %v745 = vpack.c.b16 %v643, %v642
      %v746 = vpack.c.b16 %v645, %v644
      %v747 = vpack.c.b16 %v647, %v646
      %v748 = vpack.c.b16 %v649, %v648
      %v749 = vpack.c.b16 %v651, %v650
      %v750 = vpack.c.b16 %v653, %v652
      %v751 = vpack.c.b16 %v655, %v654
      %v752 = vpack.c.b16 %v657, %v656
      %v753 = vpack.c.b16 %v659, %v658
      %v754 = vpack.c.b16 %v661, %v660
      %v755 = vpack.c.b16 %v663, %v662
      %v756 = vpack.c.b16 %v665, %v664
      %v757 = vpack.c.b16 %v667, %v666
      %v758 = vpack.c.b16 %v669, %v668
      %v759 = vpack.c.b16 %v671, %v670
      %v760 = vpack.c.b16 %v673, %v672
      %v761 = vpack.c.b16 %v675, %v674
      %v762 = vpack.c.b16 %v677, %v676
      %v763 = vpack.c.b16 %v679, %v678
      %v764 = vpack.c.b16 %v681, %v680
      %v765 = vpack.c.b16 %v683, %v682
      %v766 = vpack.c.b16 %v685, %v684
      %v767 = vpack.c.b16 %v687, %v686
      %v768 = vpack.c.b16 %v689, %v688
      %v769 = vpack.c.b16 %v691, %v690
      %v770 = vpack.c.b16 %v693, %v692
      %v771 = vpack.c.b16 %v695, %v694
      %v772 = vpack.c.b16 %v697, %v696
      %v773 = vpack.c.b16 %v699, %v698
      %v774 = vpack.c.b16 %v701, %v700
      %v775 = vpack.c.b16 %v703, %v702
      %v776 = vpack.c.b16 %v705, %v704
      %v777 = vpack.c.b16 %v707, %v706
      %v778 = vpack.c.b16 %v709, %v708
      %v779 = vpack.c.b16 %v711, %v710
      %v780 = vpack.c.b16 %v713, %v712
      %v781 = vpack.c.b16 %v715, %v714
      %v782 = vpack.c.b16 %v717, %v716
      %v783 = vpack.c.b16 %v719, %v718
      %848 = vmatpush.bf16.msra.mxu0 %v727
      %849 = vmatpush.bf16.msra.mxu0 %v726
      %850 = vmatpush.bf16.msra.mxu0 %v725
      %851 = vmatpush.bf16.msra.mxu0 %v724
      %852 = vmatpush.bf16.msra.mxu0 %v723
      %853 = vmatpush.bf16.msra.mxu0 %v722
      %854 = vmatpush.bf16.msra.mxu0 %v721
      %855 = vmatpush.bf16.msra.mxu0 %v720
      %856 = vmatmul.bf16.gmra.mxu0 %v400
      %v857 = vpop.f32.mrf.mxu0
      %v858 = vadd.f32 0.0, %v857
      %v859 = vpop.f32.mrf.mxu0
      %v860 = vadd.f32 0.0, %v859
      %861 = vmatmul.bf16.gmra.mxu0 %v408
      %v862 = vpop.f32.mrf.mxu0
      %v863 = vadd.f32 0.0, %v862
      %v864 = vpop.f32.mrf.mxu0
      %v865 = vadd.f32 0.0, %v864
      %866 = vmatmul.bf16.gmra.mxu0 %v416
      %v867 = vpop.f32.mrf.mxu0
      %v868 = vadd.f32 0.0, %v867
      %v869 = vpop.f32.mrf.mxu0
      %v870 = vadd.f32 0.0, %v869
      %871 = vmatmul.bf16.gmra.mxu0 %v424
      %v872 = vpop.f32.mrf.mxu0
      %v873 = vadd.f32 0.0, %v872
      %v874 = vpop.f32.mrf.mxu0
      %v875 = vadd.f32 0.0, %v874
      %876 = vdwg.mxu0
      %877 = vmatpush.bf16.msra.mxu0 %v735
      %878 = vmatpush.bf16.msra.mxu0 %v734
      %879 = vmatpush.bf16.msra.mxu0 %v733
      %880 = vmatpush.bf16.msra.mxu0 %v732
      %881 = vmatpush.bf16.msra.mxu0 %v731
      %882 = vmatpush.bf16.msra.mxu0 %v730
      %883 = vmatpush.bf16.msra.mxu0 %v729
      %884 = vmatpush.bf16.msra.mxu0 %v728
      %885 = vmatmul.bf16.gmra.mxu0 %v401
      %v886 = vpop.f32.mrf.mxu0
      %v887 = vadd.f32 %v858, %v886
      %v888 = vpop.f32.mrf.mxu0
      %v889 = vadd.f32 %v860, %v888
      %890 = vmatmul.bf16.gmra.mxu0 %v409
      %v891 = vpop.f32.mrf.mxu0
      %v892 = vadd.f32 %v863, %v891
      %v893 = vpop.f32.mrf.mxu0
      %v894 = vadd.f32 %v865, %v893
      %895 = vmatmul.bf16.gmra.mxu0 %v417
      %v896 = vpop.f32.mrf.mxu0
      %v897 = vadd.f32 %v868, %v896
      %v898 = vpop.f32.mrf.mxu0
      %v899 = vadd.f32 %v870, %v898
      %900 = vmatmul.bf16.gmra.mxu0 %v425
      %v901 = vpop.f32.mrf.mxu0
      %v902 = vadd.f32 %v873, %v901
      %v903 = vpop.f32.mrf.mxu0
      %v904 = vadd.f32 %v875, %v903
      %905 = vdwg.mxu0
      %906 = vmatpush.bf16.msra.mxu0 %v743
      %907 = vmatpush.bf16.msra.mxu0 %v742
      %908 = vmatpush.bf16.msra.mxu0 %v741
      %909 = vmatpush.bf16.msra.mxu0 %v740
      %910 = vmatpush.bf16.msra.mxu0 %v739
      %911 = vmatpush.bf16.msra.mxu0 %v738
      %912 = vmatpush.bf16.msra.mxu0 %v737
      %913 = vmatpush.bf16.msra.mxu0 %v736
      %914 = vmatmul.bf16.gmra.mxu0 %v402
      %v915 = vpop.f32.mrf.mxu0
      %v916 = vadd.f32 %v887, %v915
      %v917 = vpop.f32.mrf.mxu0
      %v918 = vadd.f32 %v889, %v917
      %919 = vmatmul.bf16.gmra.mxu0 %v410
      %v920 = vpop.f32.mrf.mxu0
      %v921 = vadd.f32 %v892, %v920
      %v922 = vpop.f32.mrf.mxu0
      %v923 = vadd.f32 %v894, %v922
      %924 = vmatmul.bf16.gmra.mxu0 %v418
      %v925 = vpop.f32.mrf.mxu0
      %v926 = vadd.f32 %v897, %v925
      %v927 = vpop.f32.mrf.mxu0
      %v928 = vadd.f32 %v899, %v927
      %929 = vmatmul.bf16.gmra.mxu0 %v426
      %v930 = vpop.f32.mrf.mxu0
      %v931 = vadd.f32 %v902, %v930
      %v932 = vpop.f32.mrf.mxu0
      %v933 = vadd.f32 %v904, %v932
      %934 = vdwg.mxu0
      %935 = vmatpush.bf16.msra.mxu0 %v751
      %936 = vmatpush.bf16.msra.mxu0 %v750
      %937 = vmatpush.bf16.msra.mxu0 %v749
      %938 = vmatpush.bf16.msra.mxu0 %v748
      %939 = vmatpush.bf16.msra.mxu0 %v747
      %940 = vmatpush.bf16.msra.mxu0 %v746
      %941 = vmatpush.bf16.msra.mxu0 %v745
      %942 = vmatpush.bf16.msra.mxu0 %v744
      %943 = vmatmul.bf16.gmra.mxu0 %v403
      %v944 = vpop.f32.mrf.mxu0
      %v945 = vadd.f32 %v916, %v944
      %v946 = vpop.f32.mrf.mxu0
      %v947 = vadd.f32 %v918, %v946
      %948 = vmatmul.bf16.gmra.mxu0 %v411
      %v949 = vpop.f32.mrf.mxu0
      %v950 = vadd.f32 %v921, %v949
      %v951 = vpop.f32.mrf.mxu0
      %v952 = vadd.f32 %v923, %v951
      %953 = vmatmul.bf16.gmra.mxu0 %v419
      %v954 = vpop.f32.mrf.mxu0
      %v955 = vadd.f32 %v926, %v954
      %v956 = vpop.f32.mrf.mxu0
      %v957 = vadd.f32 %v928, %v956
      %958 = vmatmul.bf16.gmra.mxu0 %v427
      %v959 = vpop.f32.mrf.mxu0
      %v960 = vadd.f32 %v931, %v959
      %v961 = vpop.f32.mrf.mxu0
      %v962 = vadd.f32 %v933, %v961
      %963 = vdwg.mxu0
      %964 = vmatpush.bf16.msra.mxu0 %v759
      %965 = vmatpush.bf16.msra.mxu0 %v758
      %966 = vmatpush.bf16.msra.mxu0 %v757
      %967 = vmatpush.bf16.msra.mxu0 %v756
      %968 = vmatpush.bf16.msra.mxu0 %v755
      %969 = vmatpush.bf16.msra.mxu0 %v754
      %970 = vmatpush.bf16.msra.mxu0 %v753
      %971 = vmatpush.bf16.msra.mxu0 %v752
      %972 = vmatmul.bf16.gmra.mxu0 %v404
      %v973 = vpop.f32.mrf.mxu0
      %v974 = vadd.f32 %v945, %v973
      %v975 = vpop.f32.mrf.mxu0
      %v976 = vadd.f32 %v947, %v975
      %977 = vmatmul.bf16.gmra.mxu0 %v412
      %v978 = vpop.f32.mrf.mxu0
      %v979 = vadd.f32 %v950, %v978
      %v980 = vpop.f32.mrf.mxu0
      %v981 = vadd.f32 %v952, %v980
      %982 = vmatmul.bf16.gmra.mxu0 %v420
      %v983 = vpop.f32.mrf.mxu0
      %v984 = vadd.f32 %v955, %v983
      %v985 = vpop.f32.mrf.mxu0
      %v986 = vadd.f32 %v957, %v985
      %987 = vmatmul.bf16.gmra.mxu0 %v428
      %v988 = vpop.f32.mrf.mxu0
      %v989 = vadd.f32 %v960, %v988
      %v990 = vpop.f32.mrf.mxu0
      %v991 = vadd.f32 %v962, %v990
      %992 = vdwg.mxu0
      %993 = vmatpush.bf16.msra.mxu0 %v767
      %994 = vmatpush.bf16.msra.mxu0 %v766
      %995 = vmatpush.bf16.msra.mxu0 %v765
      %996 = vmatpush.bf16.msra.mxu0 %v764
      %997 = vmatpush.bf16.msra.mxu0 %v763
      %998 = vmatpush.bf16.msra.mxu0 %v762
      %999 = vmatpush.bf16.msra.mxu0 %v761
      %1000 = vmatpush.bf16.msra.mxu0 %v760
      %1001 = vmatmul.bf16.gmra.mxu0 %v405
      %v1002 = vpop.f32.mrf.mxu0
      %v1003 = vadd.f32 %v974, %v1002
      %v1004 = vpop.f32.mrf.mxu0
      %v1005 = vadd.f32 %v976, %v1004
      %1006 = vmatmul.bf16.gmra.mxu0 %v413
      %v1007 = vpop.f32.mrf.mxu0
      %v1008 = vadd.f32 %v979, %v1007
      %v1009 = vpop.f32.mrf.mxu0
      %v1010 = vadd.f32 %v981, %v1009
      %1011 = vmatmul.bf16.gmra.mxu0 %v421
      %v1012 = vpop.f32.mrf.mxu0
      %v1013 = vadd.f32 %v984, %v1012
      %v1014 = vpop.f32.mrf.mxu0
      %v1015 = vadd.f32 %v986, %v1014
      %1016 = vmatmul.bf16.gmra.mxu0 %v429
      %v1017 = vpop.f32.mrf.mxu0
      %v1018 = vadd.f32 %v989, %v1017
      %v1019 = vpop.f32.mrf.mxu0
      %v1020 = vadd.f32 %v991, %v1019
      %1021 = vdwg.mxu0
      %1022 = vmatpush.bf16.msra.mxu0 %v775
      %1023 = vmatpush.bf16.msra.mxu0 %v774
      %1024 = vmatpush.bf16.msra.mxu0 %v773
      %1025 = vmatpush.bf16.msra.mxu0 %v772
      %1026 = vmatpush.bf16.msra.mxu0 %v771
      %1027 = vmatpush.bf16.msra.mxu0 %v770
      %1028 = vmatpush.bf16.msra.mxu0 %v769
      %1029 = vmatpush.bf16.msra.mxu0 %v768
      %1030 = vmatmul.bf16.gmra.mxu0 %v406
      %v1031 = vpop.f32.mrf.mxu0
      %v1032 = vadd.f32 %v1003, %v1031
      %v1033 = vpop.f32.mrf.mxu0
      %v1034 = vadd.f32 %v1005, %v1033
      %1035 = vmatmul.bf16.gmra.mxu0 %v414
      %v1036 = vpop.f32.mrf.mxu0
      %v1037 = vadd.f32 %v1008, %v1036
      %v1038 = vpop.f32.mrf.mxu0
      %v1039 = vadd.f32 %v1010, %v1038
      %1040 = vmatmul.bf16.gmra.mxu0 %v422
      %v1041 = vpop.f32.mrf.mxu0
      %v1042 = vadd.f32 %v1013, %v1041
      %v1043 = vpop.f32.mrf.mxu0
      %v1044 = vadd.f32 %v1015, %v1043
      %1045 = vmatmul.bf16.gmra.mxu0 %v430
      %v1046 = vpop.f32.mrf.mxu0
      %v1047 = vadd.f32 %v1018, %v1046
      %v1048 = vpop.f32.mrf.mxu0
      %v1049 = vadd.f32 %v1020, %v1048
      %1050 = vdwg.mxu0
      %1051 = vmatpush.bf16.msra.mxu0 %v783
      %1052 = vmatpush.bf16.msra.mxu0 %v782
      %1053 = vmatpush.bf16.msra.mxu0 %v781
      %1054 = vmatpush.bf16.msra.mxu0 %v780
      %1055 = vmatpush.bf16.msra.mxu0 %v779
      %1056 = vmatpush.bf16.msra.mxu0 %v778
      %1057 = vmatpush.bf16.msra.mxu0 %v777
      %1058 = vmatpush.bf16.msra.mxu0 %v776
      %1059 = vmatmul.bf16.gmra.mxu0 %v407
      %v1060 = vpop.f32.mrf.mxu0
      %v1061 = vadd.f32 %v1032, %v1060
      %v1062 = vpop.f32.mrf.mxu0
      %v1063 = vadd.f32 %v1034, %v1062
      %1064 = vmatmul.bf16.gmra.mxu0 %v415
      %v1065 = vpop.f32.mrf.mxu0
      %v1066 = vadd.f32 %v1037, %v1065
      %v1067 = vpop.f32.mrf.mxu0
      %v1068 = vadd.f32 %v1039, %v1067
      %1069 = vmatmul.bf16.gmra.mxu0 %v423
      %v1070 = vpop.f32.mrf.mxu0
      %v1071 = vadd.f32 %v1042, %v1070
      %v1072 = vpop.f32.mrf.mxu0
      %v1073 = vadd.f32 %v1044, %v1072
      %1074 = vmatmul.bf16.gmra.mxu0 %v431
      %v1075 = vpop.f32.mrf.mxu0
      %v1076 = vadd.f32 %v1047, %v1075
      %v1077 = vpop.f32.mrf.mxu0
      %v1078 = vadd.f32 %v1049, %v1077
      %1079 = vdwg.mxu0
      %vm1080 = vcmask 31744
      %v1081 = vsel %vm1080, %v1061, 0.0
      %1082 = vadd.xlane.f32.xlu0 %v1081
      %v1083 = vpop.xlane.xlu0 %1082
      %v1084 = vsel %vm1080, %v1063, 0.0
      %1085 = vadd.xlane.f32.xlu0 %v1084
      %v1086 = vpop.xlane.xlu0 %1085
      %v1087 = vsel %vm1080, %v1066, 0.0
      %1088 = vadd.xlane.f32.xlu0 %v1087
      %v1089 = vpop.xlane.xlu0 %1088
      %v1090 = vsel %vm1080, %v1068, 0.0
      %1091 = vadd.xlane.f32.xlu0 %v1090
      %v1092 = vpop.xlane.xlu0 %1091
      %v1093 = vsel %vm1080, %v1071, 0.0
      %1094 = vadd.xlane.f32.xlu0 %v1093
      %v1095 = vpop.xlane.xlu0 %1094
      %v1096 = vsel %vm1080, %v1073, 0.0
      %1097 = vadd.xlane.f32.xlu0 %v1096
      %v1098 = vpop.xlane.xlu0 %1097
      %v1099 = vsel %vm1080, %v1076, 0.0
      %1100 = vadd.xlane.f32.xlu0 %v1099
      %v1101 = vpop.xlane.xlu0 %1100
      %v1102 = vsel %vm1080, %v1078, 0.0
      %1103 = vadd.xlane.f32.xlu0 %v1102
      %v1104 = vpop.xlane.xlu0 %1103
      %v1105 = vrcp.pop 4.0
      %v1106 = vmul.f32 4.0, %v1105
      %v1107 = vsub.f32 1.0, %v1106
      %v1108 = vmul.f32 %v1105, %v1107
      %v1109 = vadd.f32 %v1105, %v1108
      %vm1110 = vweird.f32 %v1105
      %v1111 = vsel %vm1110, %v1105, %v1109
      %v1112 = vmul.f32 %v1083, %v1111
      %v1113 = vmul.f32 %v1086, %v1111
      %v1114 = vmul.f32 %v1089, %v1111
      %v1115 = vmul.f32 %v1092, %v1111
      %v1116 = vmul.f32 %v1095, %v1111
      %v1117 = vmul.f32 %v1098, %v1111
      %v1118 = vmul.f32 %v1101, %v1111
      %v1119 = vmul.f32 %v1104, %v1111
      %v1120 = vsub.f32 %v1061, %v1112
      %v1121 = vsub.f32 %v1063, %v1113
      %v1122 = vsub.f32 %v1066, %v1114
      %v1123 = vsub.f32 %v1068, %v1115
      %v1124 = vsub.f32 %v1071, %v1116
      %v1125 = vsub.f32 %v1073, %v1117
      %v1126 = vsub.f32 %v1076, %v1118
      %v1127 = vsub.f32 %v1078, %v1119
      %v1128 = vmul.f32 %v1120, %v1120
      %v1129 = vmul.f32 %v1121, %v1121
      %v1130 = vmul.f32 %v1122, %v1122
      %v1131 = vmul.f32 %v1123, %v1123
      %v1132 = vmul.f32 %v1124, %v1124
      %v1133 = vmul.f32 %v1125, %v1125
      %v1134 = vmul.f32 %v1126, %v1126
      %v1135 = vmul.f32 %v1127, %v1127
      %v1136 = vsel %vm1080, %v1128, 0.0
      %1137 = vadd.xlane.f32.xlu0 %v1136
      %v1138 = vpop.xlane.xlu0 %1137
      %v1139 = vsel %vm1080, %v1129, 0.0
      %1140 = vadd.xlane.f32.xlu0 %v1139
      %v1141 = vpop.xlane.xlu0 %1140
      %v1142 = vsel %vm1080, %v1130, 0.0
      %1143 = vadd.xlane.f32.xlu0 %v1142
      %v1144 = vpop.xlane.xlu0 %1143
      %v1145 = vsel %vm1080, %v1131, 0.0
      %1146 = vadd.xlane.f32.xlu0 %v1145
      %v1147 = vpop.xlane.xlu0 %1146
      %v1148 = vsel %vm1080, %v1132, 0.0
      %1149 = vadd.xlane.f32.xlu0 %v1148
      %v1150 = vpop.xlane.xlu0 %1149
      %v1151 = vsel %vm1080, %v1133, 0.0
      %1152 = vadd.xlane.f32.xlu0 %v1151
      %v1153 = vpop.xlane.xlu0 %1152
      %v1154 = vsel %vm1080, %v1134, 0.0
      %1155 = vadd.xlane.f32.xlu0 %v1154
      %v1156 = vpop.xlane.xlu0 %1155
      %v1157 = vsel %vm1080, %v1135, 0.0
      %1158 = vadd.xlane.f32.xlu0 %v1157
      %v1159 = vpop.xlane.xlu0 %1158
      %v1160 = vmul.f32 %v1138, %v1111
      %v1161 = vmul.f32 %v1141, %v1111
      %v1162 = vmul.f32 %v1144, %v1111
      %v1163 = vmul.f32 %v1147, %v1111
      %v1164 = vmul.f32 %v1150, %v1111
      %v1165 = vmul.f32 %v1153, %v1111
      %v1166 = vmul.f32 %v1156, %v1111
      %v1167 = vmul.f32 %v1159, %v1111
      %v1168 = vadd.f32 %v1160, 1e-05
      %v1169 = vadd.f32 %v1161, 1e-05
      %v1170 = vadd.f32 %v1162, 1e-05
      %v1171 = vadd.f32 %v1163, 1e-05
      %v1172 = vadd.f32 %v1164, 1e-05
      %v1173 = vadd.f32 %v1165, 1e-05
      %v1174 = vadd.f32 %v1166, 1e-05
      %v1175 = vadd.f32 %v1167, 1e-05
      %v1176 = vrsqrt.pop %v1168
      %v1177 = vmul.f32 %v1176, %v1168
      %v1178 = vmul.f32 %v1177, %v1176
      %v1179 = vmul.f32 0.5, %v1178
      %v1180 = vsub.f32 1.5, %v1179
      %v1181 = vmul.f32 %v1176, %v1180
      %vm1182 = vweird.f32 %v1168
      %vm1183 = vweird.f32 %v1176
      %vm1184 = vmor %vm1182, %vm1183
      %v1185 = vsel %vm1184, %v1176, %v1181
      %v1186 = vrsqrt.pop %v1169
      %v1187 = vmul.f32 %v1186, %v1169
      %v1188 = vmul.f32 %v1187, %v1186
      %v1189 = vmul.f32 0.5, %v1188
      %v1190 = vsub.f32 1.5, %v1189
      %v1191 = vmul.f32 %v1186, %v1190
      %vm1192 = vweird.f32 %v1169
      %vm1193 = vweird.f32 %v1186
      %vm1194 = vmor %vm1192, %vm1193
      %v1195 = vsel %vm1194, %v1186, %v1191
      %v1196 = vrsqrt.pop %v1170
      %v1197 = vmul.f32 %v1196, %v1170
      %v1198 = vmul.f32 %v1197, %v1196
      %v1199 = vmul.f32 0.5, %v1198
      %v1200 = vsub.f32 1.5, %v1199
      %v1201 = vmul.f32 %v1196, %v1200
      %vm1202 = vweird.f32 %v1170
      %vm1203 = vweird.f32 %v1196
      %vm1204 = vmor %vm1202, %vm1203
      %v1205 = vsel %vm1204, %v1196, %v1201
      %v1206 = vrsqrt.pop %v1171
      %v1207 = vmul.f32 %v1206, %v1171
      %v1208 = vmul.f32 %v1207, %v1206
      %v1209 = vmul.f32 0.5, %v1208
      %v1210 = vsub.f32 1.5, %v1209
      %v1211 = vmul.f32 %v1206, %v1210
      %vm1212 = vweird.f32 %v1171
      %vm1213 = vweird.f32 %v1206
      %vm1214 = vmor %vm1212, %vm1213
      %v1215 = vsel %vm1214, %v1206, %v1211
      %v1216 = vrsqrt.pop %v1172
      %v1217 = vmul.f32 %v1216, %v1172
      %v1218 = vmul.f32 %v1217, %v1216
      %v1219 = vmul.f32 0.5, %v1218
      %v1220 = vsub.f32 1.5, %v1219
      %v1221 = vmul.f32 %v1216, %v1220
      %vm1222 = vweird.f32 %v1172
      %vm1223 = vweird.f32 %v1216
      %vm1224 = vmor %vm1222, %vm1223
      %v1225 = vsel %vm1224, %v1216, %v1221
      %v1226 = vrsqrt.pop %v1173
      %v1227 = vmul.f32 %v1226, %v1173
      %v1228 = vmul.f32 %v1227, %v1226
      %v1229 = vmul.f32 0.5, %v1228
      %v1230 = vsub.f32 1.5, %v1229
      %v1231 = vmul.f32 %v1226, %v1230
      %vm1232 = vweird.f32 %v1173
      %vm1233 = vweird.f32 %v1226
      %vm1234 = vmor %vm1232, %vm1233
      %v1235 = vsel %vm1234, %v1226, %v1231
      %v1236 = vrsqrt.pop %v1174
      %v1237 = vmul.f32 %v1236, %v1174
      %v1238 = vmul.f32 %v1237, %v1236
      %v1239 = vmul.f32 0.5, %v1238
      %v1240 = vsub.f32 1.5, %v1239
      %v1241 = vmul.f32 %v1236, %v1240
      %vm1242 = vweird.f32 %v1174
      %vm1243 = vweird.f32 %v1236
      %vm1244 = vmor %vm1242, %vm1243
      %v1245 = vsel %vm1244, %v1236, %v1241
      %v1246 = vrsqrt.pop %v1175
      %v1247 = vmul.f32 %v1246, %v1175
      %v1248 = vmul.f32 %v1247, %v1246
      %v1249 = vmul.f32 0.5, %v1248
      %v1250 = vsub.f32 1.5, %v1249
      %v1251 = vmul.f32 %v1246, %v1250
      %vm1252 = vweird.f32 %v1175
      %vm1253 = vweird.f32 %v1246
      %vm1254 = vmor %vm1252, %vm1253
      %v1255 = vsel %vm1254, %v1246, %v1251
      %v1256 = vmul.f32 %v1120, %v1185
      %v1257 = vmul.f32 %v1121, %v1195
      %v1258 = vmul.f32 %v1122, %v1205
      %v1259 = vmul.f32 %v1123, %v1215
      %v1260 = vmul.f32 %v1124, %v1225
      %v1261 = vmul.f32 %v1125, %v1235
      %v1262 = vmul.f32 %v1126, %v1245
      %v1263 = vmul.f32 %v1127, %v1255
      %vm1264 = vcmp.ge.f32.partialorder %v1256, 0.0
      %vm1265 = vcmp.ge.f32.partialorder %v1257, 0.0
      %vm1266 = vcmp.ge.f32.partialorder %v1258, 0.0
      %vm1267 = vcmp.ge.f32.partialorder %v1259, 0.0
      %vm1268 = vcmp.ge.f32.partialorder %v1260, 0.0
      %vm1269 = vcmp.ge.f32.partialorder %v1261, 0.0
      %vm1270 = vcmp.ge.f32.partialorder %v1262, 0.0
      %vm1271 = vcmp.ge.f32.partialorder %v1263, 0.0
      %v1272 = vmul.f32 %v1256, 0.01
      %v1273 = vmul.f32 %v1257, 0.01
      %v1274 = vmul.f32 %v1258, 0.01
      %v1275 = vmul.f32 %v1259, 0.01
      %v1276 = vmul.f32 %v1260, 0.01
      %v1277 = vmul.f32 %v1261, 0.01
      %v1278 = vmul.f32 %v1262, 0.01
      %v1279 = vmul.f32 %v1263, 0.01
      %v1280 = vsel %vm1264, %v1256, %v1272
      %v1281 = vsel %vm1265, %v1257, %v1273
      %v1282 = vsel %vm1266, %v1258, %v1274
      %v1283 = vsel %vm1267, %v1259, %v1275
      %v1284 = vsel %vm1268, %v1260, %v1276
      %v1285 = vsel %vm1269, %v1261, %v1277
      %v1286 = vsel %vm1270, %v1262, %v1278
      %v1287 = vsel %vm1271, %v1263, %v1279
      %1288 = vst.msk [vmem:[%s143] sm:$0xff] %vm1080, %v1280
      %1289 = vst.msk [vmem:[%s143 + $0x8] sm:$0xff] %vm1080, %v1281
      %1290 = vst.msk [vmem:[%s143 + $0x10] sm:$0xff] %vm1080, %v1282
      %1291 = vst.msk [vmem:[%s143 + $0x18] sm:$0xff] %vm1080, %v1283
      %1292 = vst.msk [vmem:[%s143 + $0x20] sm:$0xff] %vm1080, %v1284
      %1293 = vst.msk [vmem:[%s143 + $0x28] sm:$0xff] %vm1080, %v1285
      %1294 = vst.msk [vmem:[%s143 + $0x30] sm:$0xff] %vm1080, %v1286
      %1295 = vst.msk [vmem:[%s143 + $0x38] sm:$0xff] %vm1080, %v1287
      %p1296 = scmp.lt.s32.totalorder %s13, 1
      %s1297 = scalar_select %p1296, %s13, 1
      %s1298 = smul.addr %s1297, 8
      %s1299 = smul.addr %s1298, 8
      %s1300 = scalar_lea.vmem %s2, %s1299
      // Predicated region
      $region29: #{discriminator_forward.10} parent=27 // pred_check
        %p1301 = pneg %p78
      $region30: #{discriminator_forward.10} parent=27 // pred_check_branch
        %1303 = sbr.rel (%p1301) target = $region32
      $region31: #{discriminator_forward.10} parent=27 // pred_region
        _
      $region32: #{discriminator_forward.10} parent=27 // pred_fallthru
        _
    $region28: #{discriminator_forward.10} parent=5 // pred_fallthru
      _
    %p1304 = scmp.le.s32.totalorder 2, %s8
    // Predicated region
    $region33: #{discriminator_forward.10} parent=5 // pred_check
      %p1305 = pneg %p1304
    $region34: #{discriminator_forward.10} parent=5 // pred_check_branch
      %1307 = sbr.rel (%p1305) target = $region36
    $region35: #{discriminator_forward.10} parent=5 // pred_region
      %s1308 = ssub.s32 %s8, 2
      // Predicated region
      $region37: #{discriminator_forward.10} parent=35 // pred_check
        %p1309 = pneg %p84
      $region38: #{discriminator_forward.10} parent=35 // pred_check_branch
        %1311 = sbr.rel (%p1309) target = $region40
      $region39: #{discriminator_forward.10} parent=35 // pred_region
        %p1312 = scmp.lt.s32.totalorder %s14, 1
        %s1313 = scalar_select %p1312, %s14, 1
        %s1314 = smul.addr %s1313, 8
        %s1315 = smul.addr %s1314, 8
        %s1316 = scalar_lea.vmem %s2, %s1315
      $region40: #{discriminator_forward.10} parent=35 // pred_fallthru
        _
    $region36: #{discriminator_forward.10} parent=5 // pred_fallthru
      _
  $region6: #{discriminator_forward.10} parent=0 // loop_footer
    %s12 = sadd.s32 1, %s8
  $region7: #{discriminator_forward.10} parent=0 // loop_footer_branch
    %7 = sbr.rel target = $region3
  $region8: #{discriminator_forward.10} parent=0 // loop_exit
    _

// kernel: discriminator_forward.11
$region0: #{discriminator_forward.11}
  #allocation0 [shape = 'u32[]', space=smem, size = 0x4, offset = 0x4, fixed_abs, tag = 'smem constant byte address 0x4 - core index']
  #allocation1 [shape = 'u32[72,128]{1,0:T(1,128)}', space=vmem, size = 0x9000, scoped, tag = 'internal scratch']
  #allocation2 [shape = 'f32[1,1]{1,0:T(1,128)S(1)}', space=vmem, size = 0x200, scoped, tag = 'scoped memory for discriminator_forward.11']
  %s0 = inlined_call_operand.vmem [shape: bf16[1,1024], index: 0, kind: input, shape index: {}]
  %s1 = inlined_call_operand.vmem [shape: bf16[2,1024,1], index: 1, kind: input, shape index: {}]
  %s2 = inlined_call_operand.<no memory space> [shape: f32[1,1], index: 2, kind: input, shape index: {}]
  %s3 = inlined_call_operand.vmem [shape: f32[2,1,1], index: 3, kind: output, shape index: {}]
  %s4 = sld [smem:[#allocation0]]
  $region45: #{discriminator_forward.11} parent=0
    _
  %s6 = ssub.s32 1, %s4
  %s7 = scalar_select 0, %s6, %s4
  %v8 = vstv %s2
  %9 = vst [vmem:[#allocation2] sm:$0x1] %v8
  loop: start=0, step=1, limit=4
  $region2: #{discriminator_forward.11} parent=0 // loop_pre_header
    _
  $region3: #{discriminator_forward.11} parent=0 // loop_header
    %s11 = sphi 0, %s15
    %p12 = scmp.ge.s32.totalorder %s11, 4
    %s19 = sphi 0, %s19
    %s21 = sphi 0, %s19
    %s22 = sphi 0, %s21
    %s36 = sphi 0, %s22
    %s42 = sphi 0, %s44
    %s45 = sphi 0, %s42
    %s46 = sphi 0, %s45
    %s62 = sphi 0, %s46
    %s66 = sphi 0, %s66
    %s68 = sphi 0, %s66
    %s69 = sphi 0, %s68
    %s83 = sphi 0, %s69
    %s89 = sphi 0, %s91
    %s92 = sphi 0, %s89
    %s93 = sphi 0, %s92
    %s109 = sphi 0, %s93
  $region4: #{discriminator_forward.11} parent=0 // loop_header_branch
    %14 = sbr.rel (%p12) target = $region8
  $region5: #{discriminator_forward.11} parent=0 // loop_body
    %s16 = ssub.s32 %s11, 1
    %s17 = ssub.s32 %s11, 2
    %s18 = sadd.s32 %s11, 1
    %s20 = sadd.s32 %s19, 1
    %p23 = scmp.eq.s32.totalorder %s11, 1
    %p24 = scmp.ne.s32.totalorder %s19, %s21
    %p25 = scmp.eq.s32.totalorder %s11, 0
    %p26 = por %p24, %p25
    %p27 = scmp.ne.s32.totalorder %s19, %s21
    %p28 = scmp.eq.s32.totalorder %s16, 1
    %p29 = por %p27, %p28
    %p30 = scmp.ne.s32.totalorder %s21, %s22
    %p31 = scmp.eq.s32.totalorder %s16, 0
    %p32 = por %p30, %p31
    %p33 = scmp.ne.s32.totalorder %s21, %s22
    %p34 = scmp.eq.s32.totalorder %s17, 1
    %p35 = por %p33, %p34
    %p37 = scmp.ne.s32.totalorder %s22, %s36
    %p38 = scmp.eq.s32.totalorder %s17, 0
    %p39 = por %p37, %p38
    %s40 = ssub.s32 %s11, %s18
    %p41 = scmp.eq.s32.totalorder %s40, 0
    %s43 = sadd.s32 %s42, 1
    %s44 = scalar_select %p41, %s42, %s43
    %p47 = pneg %p41
    %p48 = scmp.eq.s32.totalorder %s11, 1
    %p49 = por %p47, %p48
    %p50 = scmp.ne.s32.totalorder %s42, %s45
    %p51 = scmp.eq.s32.totalorder %s11, 0
    %p52 = por %p50, %p51
    %p53 = scmp.ne.s32.totalorder %s42, %s45
    %p54 = scmp.eq.s32.totalorder %s16, 1
    %p55 = por %p53, %p54
    %p56 = scmp.ne.s32.totalorder %s45, %s46
    %p57 = scmp.eq.s32.totalorder %s16, 0
    %p58 = por %p56, %p57
    %p59 = scmp.ne.s32.totalorder %s45, %s46
    %p60 = scmp.eq.s32.totalorder %s17, 1
    %p61 = por %p59, %p60
    %p63 = scmp.ne.s32.totalorder %s46, %s62
    %p64 = scmp.eq.s32.totalorder %s17, 0
    %p65 = por %p63, %p64
    %s67 = sadd.s32 %s66, 1
    %p70 = scmp.eq.s32.totalorder %s11, 1
    %p71 = scmp.ne.s32.totalorder %s66, %s68
    %p72 = scmp.eq.s32.totalorder %s11, 0
    %p73 = por %p71, %p72
    %p74 = scmp.ne.s32.totalorder %s66, %s68
    %p75 = scmp.eq.s32.totalorder %s16, 1
    %p76 = por %p74, %p75
    %p77 = scmp.ne.s32.totalorder %s68, %s69
    %p78 = scmp.eq.s32.totalorder %s16, 0
    %p79 = por %p77, %p78
    %p80 = scmp.ne.s32.totalorder %s68, %s69
    %p81 = scmp.eq.s32.totalorder %s17, 1
    %p82 = por %p80, %p81
    %p84 = scmp.ne.s32.totalorder %s69, %s83
    %p85 = scmp.eq.s32.totalorder %s17, 0
    %p86 = por %p84, %p85
    %s87 = ssub.s32 %s11, %s18
    %p88 = scmp.eq.s32.totalorder %s87, 0
    %s90 = sadd.s32 %s89, 1
    %s91 = scalar_select %p88, %s89, %s90
    %p94 = pneg %p88
    %p95 = scmp.eq.s32.totalorder %s11, 1
    %p96 = por %p94, %p95
    %p97 = scmp.ne.s32.totalorder %s89, %s92
    %p98 = scmp.eq.s32.totalorder %s11, 0
    %p99 = por %p97, %p98
    %p100 = scmp.ne.s32.totalorder %s89, %s92
    %p101 = scmp.eq.s32.totalorder %s16, 1
    %p102 = por %p100, %p101
    %p103 = scmp.ne.s32.totalorder %s92, %s93
    %p104 = scmp.eq.s32.totalorder %s16, 0
    %p105 = por %p103, %p104
    %p106 = scmp.ne.s32.totalorder %s92, %s93
    %p107 = scmp.eq.s32.totalorder %s17, 1
    %p108 = por %p106, %p107
    %p110 = scmp.ne.s32.totalorder %s93, %s109
    %p111 = scmp.eq.s32.totalorder %s17, 0
    %p112 = por %p110, %p111
    %p113 = scmp.le.s32.totalorder 1, %s11
    %p114 = scmp.lt.s32.totalorder %s11, 3
    %p115 = pnand %p113, %p114
    %p116 = pneg %p115
    // Predicated region
    $region9: #{discriminator_forward.11} parent=5 // pred_check
      _
    $region10: #{discriminator_forward.11} parent=5 // pred_check_branch
      %118 = sbr.rel (%p115) target = $region12
    $region11: #{discriminator_forward.11} parent=5 // pred_region
      %s119 = ssub.s32 %s11, 1
      // Predicated region
      $region13: #{discriminator_forward.11} parent=11 // pred_check
        %p120 = pneg %p32
      $region14: #{discriminator_forward.11} parent=11 // pred_check_branch
        %122 = sbr.rel (%p120) target = $region16
      $region15: #{discriminator_forward.11} parent=11 // pred_region
        _
      $region16: #{discriminator_forward.11} parent=11 // pred_fallthru
        _
      // Predicated region
      $region17: #{discriminator_forward.11} parent=11 // pred_check
        %p123 = pneg %p79
      $region18: #{discriminator_forward.11} parent=11 // pred_check_branch
        %125 = sbr.rel (%p123) target = $region20
      $region19: #{discriminator_forward.11} parent=11 // pred_region
        _
      $region20: #{discriminator_forward.11} parent=11 // pred_fallthru
        _
    $region12: #{discriminator_forward.11} parent=5 // pred_fallthru
      _
    %p126 = scmp.lt.s32.totalorder %s11, 2
    // Predicated region
    $region21: #{discriminator_forward.11} parent=5 // pred_check
      %p127 = pneg %p126
    $region22: #{discriminator_forward.11} parent=5 // pred_check_branch
      %129 = sbr.rel (%p127) target = $region24
    $region23: #{discriminator_forward.11} parent=5 // pred_region
      // Predicated region
      $region25: #{discriminator_forward.11} parent=23 // pred_check
        %p130 = pneg %p52
      $region26: #{discriminator_forward.11} parent=23 // pred_check_branch
        %132 = sbr.rel (%p130) target = $region28
      $region27: #{discriminator_forward.11} parent=23 // pred_region
        %p133 = scmp.lt.s32.totalorder %s11, 1
        %s134 = scalar_select %p133, %s11, 1
        %s135 = smul.addr %s134, 128
        %s136 = smul.addr %s135, 4
        %s137 = scalar_lea.vmem %s1, %s136
      $region28: #{discriminator_forward.11} parent=23 // pred_fallthru
        _
    $region24: #{discriminator_forward.11} parent=5 // pred_fallthru
      _
    %p138 = scmp.le.s32.totalorder 1, %s11
    %p139 = scmp.lt.s32.totalorder %s11, 3
    %p140 = pnand %p138, %p139
    %p141 = pneg %p140
    // Predicated region
    $region29: #{discriminator_forward.11} parent=5 // pred_check
      _
    $region30: #{discriminator_forward.11} parent=5 // pred_check_branch
      %143 = sbr.rel (%p140) target = $region32
    $region31: #{discriminator_forward.11} parent=5 // pred_region
      %s144 = ssub.s32 %s11, 1
      %p145 = pneg %p32
      %p146 = pneg %p29
      %p147 = scmp.lt.s32.totalorder %s16, 1
      %s148 = scalar_select %p147, %s16, 1
      %s149 = smul.addr %s148, 128
      %s150 = smul.addr %s149, 4
      %s151 = scalar_lea.vmem %s1, %s150
      %p152 = pneg %p58
      %p153 = pneg %p55
      %p154 = pneg %p79
      %p155 = pneg %p76
      %p156 = pneg %p105
      %p157 = pneg %p102
      %p158 = scmp.lt.s32.totalorder %s16, 1
      %s159 = scalar_select %p158, %s16, 1
      %s160 = scalar_lea.vmem %s3, %s159
      %p161 = scmp.lt.s32.totalorder %s16, 1
      %s162 = scalar_select %p161, %s16, 1
      %s163 = smul.addr %s162, 128
      %s164 = smul.addr %s163, 4
      %s165 = scalar_lea.vmem %s1, %s164
      %p166 = scmp.lt.s32.totalorder %s16, 1
      %s167 = scalar_select %p166, %s16, 1
      %s168 = scalar_lea.vmem %s3, %s167
      %v169 = vld [vmem:[%s0] sm:$0xff]
      %v170 = vld [vmem:[%s165] sm:$0xf]
      %v171 = vld [vmem:[%s165 + $0x4] sm:$0xf]
      %v172 = vld [vmem:[%s165 + $0x8] sm:$0xf]
      %v173 = vld [vmem:[%s165 + $0xc] sm:$0xf]
      %v174 = vld [vmem:[%s165 + $0x10] sm:$0xf]
      %v175 = vld [vmem:[%s165 + $0x14] sm:$0xf]
      %v176 = vld [vmem:[%s165 + $0x18] sm:$0xf]
      %v177 = vld [vmem:[%s165 + $0x1c] sm:$0xf]
      %v178 = vld [vmem:[%s165 + $0x20] sm:$0xf]
      %v179 = vld [vmem:[%s165 + $0x24] sm:$0xf]
      %v180 = vld [vmem:[%s165 + $0x28] sm:$0xf]
      %v181 = vld [vmem:[%s165 + $0x2c] sm:$0xf]
      %v182 = vld [vmem:[%s165 + $0x30] sm:$0xf]
      %v183 = vld [vmem:[%s165 + $0x34] sm:$0xf]
      %v184 = vld [vmem:[%s165 + $0x38] sm:$0xf]
      %v185 = vld [vmem:[%s165 + $0x3c] sm:$0xf]
      %v186 = vld [vmem:[%s165 + $0x40] sm:$0xf]
      %v187 = vld [vmem:[%s165 + $0x44] sm:$0xf]
      %v188 = vld [vmem:[%s165 + $0x48] sm:$0xf]
      %v189 = vld [vmem:[%s165 + $0x4c] sm:$0xf]
      %v190 = vld [vmem:[%s165 + $0x50] sm:$0xf]
      %v191 = vld [vmem:[%s165 + $0x54] sm:$0xf]
      %v192 = vld [vmem:[%s165 + $0x58] sm:$0xf]
      %v193 = vld [vmem:[%s165 + $0x5c] sm:$0xf]
      %v194 = vld [vmem:[%s165 + $0x60] sm:$0xf]
      %v195 = vld [vmem:[%s165 + $0x64] sm:$0xf]
      %v196 = vld [vmem:[%s165 + $0x68] sm:$0xf]
      %v197 = vld [vmem:[%s165 + $0x6c] sm:$0xf]
      %v198 = vld [vmem:[%s165 + $0x70] sm:$0xf]
      %v199 = vld [vmem:[%s165 + $0x74] sm:$0xf]
      %v200 = vld [vmem:[%s165 + $0x78] sm:$0xf]
      %v201 = vld [vmem:[%s165 + $0x7c] sm:$0xf]
      %v202 = vld [vmem:[%s165 + $0x80] sm:$0xf]
      %v203 = vld [vmem:[%s165 + $0x84] sm:$0xf]
      %v204 = vld [vmem:[%s165 + $0x88] sm:$0xf]
      %v205 = vld [vmem:[%s165 + $0x8c] sm:$0xf]
      %v206 = vld [vmem:[%s165 + $0x90] sm:$0xf]
      %v207 = vld [vmem:[%s165 + $0x94] sm:$0xf]
      %v208 = vld [vmem:[%s165 + $0x98] sm:$0xf]
      %v209 = vld [vmem:[%s165 + $0x9c] sm:$0xf]
      %v210 = vld [vmem:[%s165 + $0xa0] sm:$0xf]
      %v211 = vld [vmem:[%s165 + $0xa4] sm:$0xf]
      %v212 = vld [vmem:[%s165 + $0xa8] sm:$0xf]
      %v213 = vld [vmem:[%s165 + $0xac] sm:$0xf]
      %v214 = vld [vmem:[%s165 + $0xb0] sm:$0xf]
      %v215 = vld [vmem:[%s165 + $0xb4] sm:$0xf]
      %v216 = vld [vmem:[%s165 + $0xb8] sm:$0xf]
      %v217 = vld [vmem:[%s165 + $0xbc] sm:$0xf]
      %v218 = vld [vmem:[%s165 + $0xc0] sm:$0xf]
      %v219 = vld [vmem:[%s165 + $0xc4] sm:$0xf]
      %v220 = vld [vmem:[%s165 + $0xc8] sm:$0xf]
      %v221 = vld [vmem:[%s165 + $0xcc] sm:$0xf]
      %v222 = vld [vmem:[%s165 + $0xd0] sm:$0xf]
      %v223 = vld [vmem:[%s165 + $0xd4] sm:$0xf]
      %v224 = vld [vmem:[%s165 + $0xd8] sm:$0xf]
      %v225 = vld [vmem:[%s165 + $0xdc] sm:$0xf]
      %v226 = vld [vmem:[%s165 + $0xe0] sm:$0xf]
      %v227 = vld [vmem:[%s165 + $0xe4] sm:$0xf]
      %v228 = vld [vmem:[%s165 + $0xe8] sm:$0xf]
      %v229 = vld [vmem:[%s165 + $0xec] sm:$0xf]
      %v230 = vld [vmem:[%s165 + $0xf0] sm:$0xf]
      %v231 = vld [vmem:[%s165 + $0xf4] sm:$0xf]
      %v232 = vld [vmem:[%s165 + $0xf8] sm:$0xf]
      %v233 = vld [vmem:[%s165 + $0xfc] sm:$0xf]
      %v234 = vld [vmem:[%s165 + $0x100] sm:$0xf]
      %v235 = vld [vmem:[%s165 + $0x104] sm:$0xf]
      %v236 = vld [vmem:[%s165 + $0x108] sm:$0xf]
      %v237 = vld [vmem:[%s165 + $0x10c] sm:$0xf]
      %v238 = vld [vmem:[%s165 + $0x110] sm:$0xf]
      %v239 = vld [vmem:[%s165 + $0x114] sm:$0xf]
      %v240 = vld [vmem:[%s165 + $0x118] sm:$0xf]
      %v241 = vld [vmem:[%s165 + $0x11c] sm:$0xf]
      %v242 = vld [vmem:[%s165 + $0x120] sm:$0xf]
      %v243 = vld [vmem:[%s165 + $0x124] sm:$0xf]
      %v244 = vld [vmem:[%s165 + $0x128] sm:$0xf]
      %v245 = vld [vmem:[%s165 + $0x12c] sm:$0xf]
      %v246 = vld [vmem:[%s165 + $0x130] sm:$0xf]
      %v247 = vld [vmem:[%s165 + $0x134] sm:$0xf]
      %v248 = vld [vmem:[%s165 + $0x138] sm:$0xf]
      %v249 = vld [vmem:[%s165 + $0x13c] sm:$0xf]
      %v250 = vld [vmem:[%s165 + $0x140] sm:$0xf]
      %v251 = vld [vmem:[%s165 + $0x144] sm:$0xf]
      %v252 = vld [vmem:[%s165 + $0x148] sm:$0xf]
      %v253 = vld [vmem:[%s165 + $0x14c] sm:$0xf]
      %v254 = vld [vmem:[%s165 + $0x150] sm:$0xf]
      %v255 = vld [vmem:[%s165 + $0x154] sm:$0xf]
      %v256 = vld [vmem:[%s165 + $0x158] sm:$0xf]
      %v257 = vld [vmem:[%s165 + $0x15c] sm:$0xf]
      %v258 = vld [vmem:[%s165 + $0x160] sm:$0xf]
      %v259 = vld [vmem:[%s165 + $0x164] sm:$0xf]
      %v260 = vld [vmem:[%s165 + $0x168] sm:$0xf]
      %v261 = vld [vmem:[%s165 + $0x16c] sm:$0xf]
      %v262 = vld [vmem:[%s165 + $0x170] sm:$0xf]
      %v263 = vld [vmem:[%s165 + $0x174] sm:$0xf]
      %v264 = vld [vmem:[%s165 + $0x178] sm:$0xf]
      %v265 = vld [vmem:[%s165 + $0x17c] sm:$0xf]
      %v266 = vld [vmem:[%s165 + $0x180] sm:$0xf]
      %v267 = vld [vmem:[%s165 + $0x184] sm:$0xf]
      %v268 = vld [vmem:[%s165 + $0x188] sm:$0xf]
      %v269 = vld [vmem:[%s165 + $0x18c] sm:$0xf]
      %v270 = vld [vmem:[%s165 + $0x190] sm:$0xf]
      %v271 = vld [vmem:[%s165 + $0x194] sm:$0xf]
      %v272 = vld [vmem:[%s165 + $0x198] sm:$0xf]
      %v273 = vld [vmem:[%s165 + $0x19c] sm:$0xf]
      %v274 = vld [vmem:[%s165 + $0x1a0] sm:$0xf]
      %v275 = vld [vmem:[%s165 + $0x1a4] sm:$0xf]
      %v276 = vld [vmem:[%s165 + $0x1a8] sm:$0xf]
      %v277 = vld [vmem:[%s165 + $0x1ac] sm:$0xf]
      %v278 = vld [vmem:[%s165 + $0x1b0] sm:$0xf]
      %v279 = vld [vmem:[%s165 + $0x1b4] sm:$0xf]
      %v280 = vld [vmem:[%s165 + $0x1b8] sm:$0xf]
      %v281 = vld [vmem:[%s165 + $0x1bc] sm:$0xf]
      %v282 = vld [vmem:[%s165 + $0x1c0] sm:$0xf]
      %v283 = vld [vmem:[%s165 + $0x1c4] sm:$0xf]
      %v284 = vld [vmem:[%s165 + $0x1c8] sm:$0xf]
      %v285 = vld [vmem:[%s165 + $0x1cc] sm:$0xf]
      %v286 = vld [vmem:[%s165 + $0x1d0] sm:$0xf]
      %v287 = vld [vmem:[%s165 + $0x1d4] sm:$0xf]
      %v288 = vld [vmem:[%s165 + $0x1d8] sm:$0xf]
      %v289 = vld [vmem:[%s165 + $0x1dc] sm:$0xf]
      %v290 = vld [vmem:[%s165 + $0x1e0] sm:$0xf]
      %v291 = vld [vmem:[%s165 + $0x1e4] sm:$0xf]
      %v292 = vld [vmem:[%s165 + $0x1e8] sm:$0xf]
      %v293 = vld [vmem:[%s165 + $0x1ec] sm:$0xf]
      %v294 = vld [vmem:[%s165 + $0x1f0] sm:$0xf]
      %v295 = vld [vmem:[%s165 + $0x1f4] sm:$0xf]
      %v296 = vld [vmem:[%s165 + $0x1f8] sm:$0xf]
      %v297 = vld [vmem:[%s165 + $0x1fc] sm:$0xf]
      %v298 = vld [vmem:[#allocation2] sm:$0x1]
      %300 = vst [vmem:[#allocation1] ss:$9 sm:$0xff] %v169
      %v301 = vld [vmem:[#allocation1] sm:$0xff]
      %v302 = vld [vmem:[#allocation1 + $0x9] sm:$0xff]
      %v303 = vld [vmem:[#allocation1 + $0x12] sm:$0xff]
      %v304 = vld [vmem:[#allocation1 + $0x1b] sm:$0xff]
      %v305 = vld [vmem:[#allocation1 + $0x24] sm:$0xff]
      %v306 = vld [vmem:[#allocation1 + $0x2d] sm:$0xff]
      %v307 = vld [vmem:[#allocation1 + $0x36] sm:$0xff]
      %v308 = vld [vmem:[#allocation1 + $0x3f] sm:$0xff]
      %v445 = vunpack.c.l.b16 %v170
      %v446 = vunpack.c.l.b16 %v171
      %v447 = vunpack.c.l.b16 %v172
      %v448 = vunpack.c.l.b16 %v173
      %v449 = vunpack.c.l.b16 %v174
      %v450 = vunpack.c.l.b16 %v175
      %v451 = vunpack.c.l.b16 %v176
      %v452 = vunpack.c.l.b16 %v177
      %v453 = vunpack.c.l.b16 %v178
      %v454 = vunpack.c.l.b16 %v179
      %v455 = vunpack.c.l.b16 %v180
      %v456 = vunpack.c.l.b16 %v181
      %v457 = vunpack.c.l.b16 %v182
      %v458 = vunpack.c.l.b16 %v183
      %v459 = vunpack.c.l.b16 %v184
      %v460 = vunpack.c.l.b16 %v185
      %v461 = vunpack.c.l.b16 %v186
      %v462 = vunpack.c.l.b16 %v187
      %v463 = vunpack.c.l.b16 %v188
      %v464 = vunpack.c.l.b16 %v189
      %v465 = vunpack.c.l.b16 %v190
      %v466 = vunpack.c.l.b16 %v191
      %v467 = vunpack.c.l.b16 %v192
      %v468 = vunpack.c.l.b16 %v193
      %v469 = vunpack.c.l.b16 %v194
      %v470 = vunpack.c.l.b16 %v195
      %v471 = vunpack.c.l.b16 %v196
      %v472 = vunpack.c.l.b16 %v197
      %v473 = vunpack.c.l.b16 %v198
      %v474 = vunpack.c.l.b16 %v199
      %v475 = vunpack.c.l.b16 %v200
      %v476 = vunpack.c.l.b16 %v201
      %v477 = vunpack.c.l.b16 %v202
      %v478 = vunpack.c.l.b16 %v203
      %v479 = vunpack.c.l.b16 %v204
      %v480 = vunpack.c.l.b16 %v205
      %v481 = vunpack.c.l.b16 %v206
      %v482 = vunpack.c.l.b16 %v207
      %v483 = vunpack.c.l.b16 %v208
      %v484 = vunpack.c.l.b16 %v209
      %v485 = vunpack.c.l.b16 %v210
      %v486 = vunpack.c.l.b16 %v211
      %v487 = vunpack.c.l.b16 %v212
      %v488 = vunpack.c.l.b16 %v213
      %v489 = vunpack.c.l.b16 %v214
      %v490 = vunpack.c.l.b16 %v215
      %v491 = vunpack.c.l.b16 %v216
      %v492 = vunpack.c.l.b16 %v217
      %v493 = vunpack.c.l.b16 %v218
      %v494 = vunpack.c.l.b16 %v219
      %v495 = vunpack.c.l.b16 %v220
      %v496 = vunpack.c.l.b16 %v221
      %v497 = vunpack.c.l.b16 %v222
      %v498 = vunpack.c.l.b16 %v223
      %v499 = vunpack.c.l.b16 %v224
      %v500 = vunpack.c.l.b16 %v225
      %v501 = vunpack.c.l.b16 %v226
      %v502 = vunpack.c.l.b16 %v227
      %v503 = vunpack.c.l.b16 %v228
      %v504 = vunpack.c.l.b16 %v229
      %v505 = vunpack.c.l.b16 %v230
      %v506 = vunpack.c.l.b16 %v231
      %v507 = vunpack.c.l.b16 %v232
      %v508 = vunpack.c.l.b16 %v233
      %v509 = vunpack.c.l.b16 %v234
      %v510 = vunpack.c.l.b16 %v235
      %v511 = vunpack.c.l.b16 %v236
      %v512 = vunpack.c.l.b16 %v237
      %v513 = vunpack.c.l.b16 %v238
      %v514 = vunpack.c.l.b16 %v239
      %v515 = vunpack.c.l.b16 %v240
      %v516 = vunpack.c.l.b16 %v241
      %v517 = vunpack.c.l.b16 %v242
      %v518 = vunpack.c.l.b16 %v243
      %v519 = vunpack.c.l.b16 %v244
      %v520 = vunpack.c.l.b16 %v245
      %v521 = vunpack.c.l.b16 %v246
      %v522 = vunpack.c.l.b16 %v247
      %v523 = vunpack.c.l.b16 %v248
      %v524 = vunpack.c.l.b16 %v249
      %v525 = vunpack.c.l.b16 %v250
      %v526 = vunpack.c.l.b16 %v251
      %v527 = vunpack.c.l.b16 %v252
      %v528 = vunpack.c.l.b16 %v253
      %v529 = vunpack.c.l.b16 %v254
      %v530 = vunpack.c.l.b16 %v255
      %v531 = vunpack.c.l.b16 %v256
      %v532 = vunpack.c.l.b16 %v257
      %v533 = vunpack.c.l.b16 %v258
      %v534 = vunpack.c.l.b16 %v259
      %v535 = vunpack.c.l.b16 %v260
      %v536 = vunpack.c.l.b16 %v261
      %v537 = vunpack.c.l.b16 %v262
      %v538 = vunpack.c.l.b16 %v263
      %v539 = vunpack.c.l.b16 %v264
      %v540 = vunpack.c.l.b16 %v265
      %v541 = vunpack.c.l.b16 %v266
      %v542 = vunpack.c.l.b16 %v267
      %v543 = vunpack.c.l.b16 %v268
      %v544 = vunpack.c.l.b16 %v269
      %v545 = vunpack.c.l.b16 %v270
      %v546 = vunpack.c.l.b16 %v271
      %v547 = vunpack.c.l.b16 %v272
      %v548 = vunpack.c.l.b16 %v273
      %v549 = vunpack.c.l.b16 %v274
      %v550 = vunpack.c.l.b16 %v275
      %v551 = vunpack.c.l.b16 %v276
      %v552 = vunpack.c.l.b16 %v277
      %v553 = vunpack.c.l.b16 %v278
      %v554 = vunpack.c.l.b16 %v279
      %v555 = vunpack.c.l.b16 %v280
      %v556 = vunpack.c.l.b16 %v281
      %v557 = vunpack.c.l.b16 %v282
      %v558 = vunpack.c.l.b16 %v283
      %v559 = vunpack.c.l.b16 %v284
      %v560 = vunpack.c.l.b16 %v285
      %v561 = vunpack.c.l.b16 %v286
      %v562 = vunpack.c.l.b16 %v287
      %v563 = vunpack.c.l.b16 %v288
      %v564 = vunpack.c.l.b16 %v289
      %v565 = vunpack.c.l.b16 %v290
      %v566 = vunpack.c.l.b16 %v291
      %v567 = vunpack.c.l.b16 %v292
      %v568 = vunpack.c.l.b16 %v293
      %v569 = vunpack.c.l.b16 %v294
      %v570 = vunpack.c.l.b16 %v295
      %v571 = vunpack.c.l.b16 %v296
      %v572 = vunpack.c.l.b16 %v297
      %v573 = vpack.c.b16 %v446, %v445
      %v574 = vpack.c.b16 %v448, %v447
      %v575 = vpack.c.b16 %v450, %v449
      %v576 = vpack.c.b16 %v452, %v451
      %v577 = vpack.c.b16 %v454, %v453
      %v578 = vpack.c.b16 %v456, %v455
      %v579 = vpack.c.b16 %v458, %v457
      %v580 = vpack.c.b16 %v460, %v459
      %v581 = vpack.c.b16 %v462, %v461
      %v582 = vpack.c.b16 %v464, %v463
      %v583 = vpack.c.b16 %v466, %v465
      %v584 = vpack.c.b16 %v468, %v467
      %v585 = vpack.c.b16 %v470, %v469
      %v586 = vpack.c.b16 %v472, %v471
      %v587 = vpack.c.b16 %v474, %v473
      %v588 = vpack.c.b16 %v476, %v475
      %v589 = vpack.c.b16 %v478, %v477
      %v590 = vpack.c.b16 %v480, %v479
      %v591 = vpack.c.b16 %v482, %v481
      %v592 = vpack.c.b16 %v484, %v483
      %v593 = vpack.c.b16 %v486, %v485
      %v594 = vpack.c.b16 %v488, %v487
      %v595 = vpack.c.b16 %v490, %v489
      %v596 = vpack.c.b16 %v492, %v491
      %v597 = vpack.c.b16 %v494, %v493
      %v598 = vpack.c.b16 %v496, %v495
      %v599 = vpack.c.b16 %v498, %v497
      %v600 = vpack.c.b16 %v500, %v499
      %v601 = vpack.c.b16 %v502, %v501
      %v602 = vpack.c.b16 %v504, %v503
      %v603 = vpack.c.b16 %v506, %v505
      %v604 = vpack.c.b16 %v508, %v507
      %v605 = vpack.c.b16 %v510, %v509
      %v606 = vpack.c.b16 %v512, %v511
      %v607 = vpack.c.b16 %v514, %v513
      %v608 = vpack.c.b16 %v516, %v515
      %v609 = vpack.c.b16 %v518, %v517
      %v610 = vpack.c.b16 %v520, %v519
      %v611 = vpack.c.b16 %v522, %v521
      %v612 = vpack.c.b16 %v524, %v523
      %v613 = vpack.c.b16 %v526, %v525
      %v614 = vpack.c.b16 %v528, %v527
      %v615 = vpack.c.b16 %v530, %v529
      %v616 = vpack.c.b16 %v532, %v531
      %v617 = vpack.c.b16 %v534, %v533
      %v618 = vpack.c.b16 %v536, %v535
      %v619 = vpack.c.b16 %v538, %v537
      %v620 = vpack.c.b16 %v540, %v539
      %v621 = vpack.c.b16 %v542, %v541
      %v622 = vpack.c.b16 %v544, %v543
      %v623 = vpack.c.b16 %v546, %v545
      %v624 = vpack.c.b16 %v548, %v547
      %v625 = vpack.c.b16 %v550, %v549
      %v626 = vpack.c.b16 %v552, %v551
      %v627 = vpack.c.b16 %v554, %v553
      %v628 = vpack.c.b16 %v556, %v555
      %v629 = vpack.c.b16 %v558, %v557
      %v630 = vpack.c.b16 %v560, %v559
      %v631 = vpack.c.b16 %v562, %v561
      %v632 = vpack.c.b16 %v564, %v563
      %v633 = vpack.c.b16 %v566, %v565
      %v634 = vpack.c.b16 %v568, %v567
      %v635 = vpack.c.b16 %v570, %v569
      %v636 = vpack.c.b16 %v572, %v571
      %701 = vmatpush.bf16.msra.mxu0 %v580
      %702 = vmatpush.bf16.msra.mxu0 %v579
      %703 = vmatpush.bf16.msra.mxu0 %v578
      %704 = vmatpush.bf16.msra.mxu0 %v577
      %705 = vmatpush.bf16.msra.mxu0 %v576
      %706 = vmatpush.bf16.msra.mxu0 %v575
      %707 = vmatpush.bf16.msra.mxu0 %v574
      %708 = vmatpush.bf16.msra.mxu0 %v573
      %709 = vmatmul.bf16.gmra.mxu0 %v301
      %v710 = vpop.f32.mrf.mxu0
      %v711 = vadd.f32 %v298, %v710
      %v712 = vpop.f32.mrf.mxu0
      %713 = vdwg.mxu0
      %714 = vmatpush.bf16.msra.mxu0 %v588
      %715 = vmatpush.bf16.msra.mxu0 %v587
      %716 = vmatpush.bf16.msra.mxu0 %v586
      %717 = vmatpush.bf16.msra.mxu0 %v585
      %718 = vmatpush.bf16.msra.mxu0 %v584
      %719 = vmatpush.bf16.msra.mxu0 %v583
      %720 = vmatpush.bf16.msra.mxu0 %v582
      %721 = vmatpush.bf16.msra.mxu0 %v581
      %722 = vmatmul.bf16.gmra.mxu0 %v302
      %v723 = vpop.f32.mrf.mxu0
      %v724 = vadd.f32 %v711, %v723
      %v725 = vpop.f32.mrf.mxu0
      %726 = vdwg.mxu0
      %727 = vmatpush.bf16.msra.mxu0 %v596
      %728 = vmatpush.bf16.msra.mxu0 %v595
      %729 = vmatpush.bf16.msra.mxu0 %v594
      %730 = vmatpush.bf16.msra.mxu0 %v593
      %731 = vmatpush.bf16.msra.mxu0 %v592
      %732 = vmatpush.bf16.msra.mxu0 %v591
      %733 = vmatpush.bf16.msra.mxu0 %v590
      %734 = vmatpush.bf16.msra.mxu0 %v589
      %735 = vmatmul.bf16.gmra.mxu0 %v303
      %v736 = vpop.f32.mrf.mxu0
      %v737 = vadd.f32 %v724, %v736
      %v738 = vpop.f32.mrf.mxu0
      %739 = vdwg.mxu0
      %740 = vmatpush.bf16.msra.mxu0 %v604
      %741 = vmatpush.bf16.msra.mxu0 %v603
      %742 = vmatpush.bf16.msra.mxu0 %v602
      %743 = vmatpush.bf16.msra.mxu0 %v601
      %744 = vmatpush.bf16.msra.mxu0 %v600
      %745 = vmatpush.bf16.msra.mxu0 %v599
      %746 = vmatpush.bf16.msra.mxu0 %v598
      %747 = vmatpush.bf16.msra.mxu0 %v597
      %748 = vmatmul.bf16.gmra.mxu0 %v304
      %v749 = vpop.f32.mrf.mxu0
      %v750 = vadd.f32 %v737, %v749
      %v751 = vpop.f32.mrf.mxu0
      %752 = vdwg.mxu0
      %753 = vmatpush.bf16.msra.mxu0 %v612
      %754 = vmatpush.bf16.msra.mxu0 %v611
      %755 = vmatpush.bf16.msra.mxu0 %v610
      %756 = vmatpush.bf16.msra.mxu0 %v609
      %757 = vmatpush.bf16.msra.mxu0 %v608
      %758 = vmatpush.bf16.msra.mxu0 %v607
      %759 = vmatpush.bf16.msra.mxu0 %v606
      %760 = vmatpush.bf16.msra.mxu0 %v605
      %761 = vmatmul.bf16.gmra.mxu0 %v305
      %v762 = vpop.f32.mrf.mxu0
      %v763 = vadd.f32 %v750, %v762
      %v764 = vpop.f32.mrf.mxu0
      %765 = vdwg.mxu0
      %766 = vmatpush.bf16.msra.mxu0 %v620
      %767 = vmatpush.bf16.msra.mxu0 %v619
      %768 = vmatpush.bf16.msra.mxu0 %v618
      %769 = vmatpush.bf16.msra.mxu0 %v617
      %770 = vmatpush.bf16.msra.mxu0 %v616
      %771 = vmatpush.bf16.msra.mxu0 %v615
      %772 = vmatpush.bf16.msra.mxu0 %v614
      %773 = vmatpush.bf16.msra.mxu0 %v613
      %774 = vmatmul.bf16.gmra.mxu0 %v306
      %v775 = vpop.f32.mrf.mxu0
      %v776 = vadd.f32 %v763, %v775
      %v777 = vpop.f32.mrf.mxu0
      %778 = vdwg.mxu0
      %779 = vmatpush.bf16.msra.mxu0 %v628
      %780 = vmatpush.bf16.msra.mxu0 %v627
      %781 = vmatpush.bf16.msra.mxu0 %v626
      %782 = vmatpush.bf16.msra.mxu0 %v625
      %783 = vmatpush.bf16.msra.mxu0 %v624
      %784 = vmatpush.bf16.msra.mxu0 %v623
      %785 = vmatpush.bf16.msra.mxu0 %v622
      %786 = vmatpush.bf16.msra.mxu0 %v621
      %787 = vmatmul.bf16.gmra.mxu0 %v307
      %v788 = vpop.f32.mrf.mxu0
      %v789 = vadd.f32 %v776, %v788
      %v790 = vpop.f32.mrf.mxu0
      %791 = vdwg.mxu0
      %792 = vmatpush.bf16.msra.mxu0 %v636
      %793 = vmatpush.bf16.msra.mxu0 %v635
      %794 = vmatpush.bf16.msra.mxu0 %v634
      %795 = vmatpush.bf16.msra.mxu0 %v633
      %796 = vmatpush.bf16.msra.mxu0 %v632
      %797 = vmatpush.bf16.msra.mxu0 %v631
      %798 = vmatpush.bf16.msra.mxu0 %v630
      %799 = vmatpush.bf16.msra.mxu0 %v629
      %800 = vmatmul.bf16.gmra.mxu0 %v308
      %v801 = vpop.f32.mrf.mxu0
      %v802 = vadd.f32 %v789, %v801
      %v803 = vpop.f32.mrf.mxu0
      %804 = vdwg.mxu0
      %vm805 = vcmask 0
      %806 = vst.msk [vmem:[%s168] sm:$0x1] %vm805, %v802
      %p807 = scmp.lt.s32.totalorder %s16, 1
      %s808 = scalar_select %p807, %s16, 1
      %s809 = scalar_lea.vmem %s3, %s808
      // Predicated region
      $region33: #{discriminator_forward.11} parent=31 // pred_check
        %p810 = pneg %p102
      $region34: #{discriminator_forward.11} parent=31 // pred_check_branch
        %812 = sbr.rel (%p810) target = $region36
      $region35: #{discriminator_forward.11} parent=31 // pred_region
        _
      $region36: #{discriminator_forward.11} parent=31 // pred_fallthru
        _
    $region32: #{discriminator_forward.11} parent=5 // pred_fallthru
      _
    %p813 = scmp.le.s32.totalorder 2, %s11
    // Predicated region
    $region37: #{discriminator_forward.11} parent=5 // pred_check
      %p814 = pneg %p813
    $region38: #{discriminator_forward.11} parent=5 // pred_check_branch
      %816 = sbr.rel (%p814) target = $region40
    $region39: #{discriminator_forward.11} parent=5 // pred_region
      %s817 = ssub.s32 %s11, 2
      // Predicated region
      $region41: #{discriminator_forward.11} parent=39 // pred_check
        %p818 = pneg %p108
      $region42: #{discriminator_forward.11} parent=39 // pred_check_branch
        %820 = sbr.rel (%p818) target = $region44
      $region43: #{discriminator_forward.11} parent=39 // pred_region
        %p821 = scmp.lt.s32.totalorder %s17, 1
        %s822 = scalar_select %p821, %s17, 1
        %s823 = scalar_lea.vmem %s3, %s822
      $region44: #{discriminator_forward.11} parent=39 // pred_fallthru
        _
    $region40: #{discriminator_forward.11} parent=5 // pred_fallthru
      _
  $region6: #{discriminator_forward.11} parent=0 // loop_footer
    %s15 = sadd.s32 1, %s11
  $region7: #{discriminator_forward.11} parent=0 // loop_footer_branch
    %10 = sbr.rel target = $region3
  $region8: #{discriminator_forward.11} parent=0 // loop_exit
    _

</llo_original>
